<compile_context>
chip_gen: v5e
topology: v5e:2x2
jax: 0.10.0
libtpu: 0.0.40
codegen_flags: <defaults>
</compile_context>

<pallas_src>
import math

import jax
import jax.numpy as jnp
from jax import lax
from jax.experimental import pallas as pl
from jax.experimental.pallas import tpu as pltpu

SIZE = 64                    # model feature size (GRU input / bidirectional output)
HID = 32                     # GRU hidden size per direction (size // 2)
NUM_LAYERS = 3
GATES = 3 * SIZE             # 192 = 3 gate slots x 64 lanes ([fwd 32 | bwd 32] each)
HEAD_OUT = 9 + 9 + 9 + 5     # FC_CIPI | FC_PS | FC_PL | FC_FS concatenated


def _summariser_kernel(
    x_ref,        # (T, BB, 64)   time-major input block
    len_ref,      # (BB, 1)       int32 sequence lengths
    w_ih_ref,     # (3, 64, 192)  dense input weights (fwd/bwd interleaved gate slots)
    b_ih_ref,     # (3, 1, 192)   input bias (+ hidden bias folded in for r/z)
    w_hh_ref,     # (3, 64, 192)  per-gate block-diagonal hidden weights
    b_hn_ref,     # (3, 1, 64)    hidden bias of the n gate ([fwd | bwd])
    w_att_ref,    # (64, 64)      attention_net weight (pre-transposed)
    b_att_ref,    # (1, 64)
    ctx_ref,      # (64, 1)       context vector
    w_head_ref,   # (64, 32)      4 FC heads fused (pre-transposed)
    b_head_ref,   # (1, 32)
    out_ref,      # (BB, 32)
    gall_ref,     # (T, BB, 192)  scratch: dense input-gate projections (time order)
    mfull_ref,    # (T, BB, 64)   scratch: combined fwd/bwd validity mask (loop order)
    enc_a_ref,    # (T, BB, 64)   scratch: layer output ping
    enc_b_ref,    # (T, BB, 64)   scratch: layer output pong
):
    T, BB, _ = x_ref.shape

    # Combined validity mask in loop order: lanes [0:32) (forward direction) are
    # valid iff i < len, lanes [32:64) (backward direction, read by the fused
    # loop at time T-1-i) are valid iff (T-1-i) < len.
    t_iota = lax.broadcasted_iota(jnp.int32, (T, BB, SIZE), 0)
    lane = lax.broadcasted_iota(jnp.int32, (T, BB, SIZE), 2)
    t_eff = jnp.where(lane < HID, t_iota, (T - 1) - t_iota)
    lens = len_ref[...]                                         # (BB, 1) int32
    mfull_ref[...] = (t_eff < lens[None, :, :]).astype(jnp.float32)

    # within each 64-lane gate slot, lanes [0,32) belong to the forward direction
    gate_fwd = (lax.broadcasted_iota(jnp.int32, (1, GATES), 1) % SIZE) < HID

    if T <= 16:
        unroll = True
    else:
        unroll = 8 if T % 8 == 0 else (4 if T % 4 == 0 else (2 if T % 2 == 0 else 1))

    layer_io = [(x_ref, enc_a_ref), (enc_a_ref, enc_b_ref), (enc_b_ref, enc_a_ref)]

    for layer in range(NUM_LAYERS):
        in_ref, enc_out_ref = layer_io[layer]

        # ---- bulk: ONE dense input projection for the whole sequence (both dirs) ----
        inp2 = in_ref[...].reshape(T * BB, SIZE)
        g_all = jnp.dot(inp2, w_ih_ref[layer],
                        preferred_element_type=jnp.float32) + b_ih_ref[layer]
        gall_ref[...] = g_all.reshape(T, BB, GATES)

        w_hh = w_hh_ref[layer]                                   # (64, 192)
        bhn = b_hn_ref[layer]                                    # (1, 64)

        def step(i, h):
            # forward half works on time i, backward half on time T-1-i
            t_b = (T - 1) - i
            g = jnp.where(gate_fwd, gall_ref[i], gall_ref[t_b])  # (BB, 192)
            m = mfull_ref[i]                                     # (BB, 64)
            gh = jnp.dot(h, w_hh, preferred_element_type=jnp.float32)   # one MXU push
            r = jax.nn.sigmoid(g[:, 0:SIZE] + gh[:, 0:SIZE])
            z = jax.nn.sigmoid(g[:, SIZE:2 * SIZE] + gh[:, SIZE:2 * SIZE])
            n = jnp.tanh(g[:, 2 * SIZE:3 * SIZE] + r * (gh[:, 2 * SIZE:3 * SIZE] + bhn))
            h_new = n + z * (h - n)                              # == (1-z)*n + z*h
            out = m * h_new                                      # masked GRU outputs
            # freeze fwd hidden past the end; bwd hidden stays 0 before its start
            h_next = out + (1.0 - m) * h
            enc_out_ref[i, :, 0:HID] = out[:, 0:HID]             # fwd output at time i
            enc_out_ref[t_b, :, HID:SIZE] = out[:, HID:SIZE]     # bwd output at time T-1-i
            return h_next

        h0 = jnp.zeros((BB, SIZE), jnp.float32)
        lax.fori_loop(0, T, step, h0, unroll=unroll)

    # ---- ContextAttention (num_head=1, head_size=64) ----
    enc = enc_a_ref[...]                                         # (T, BB, 64)
    enc2 = enc.reshape(T * BB, SIZE)
    a = jnp.tanh(jnp.dot(enc2, w_att_ref[...],
                         preferred_element_type=jnp.float32) + b_att_ref[...])
    sim = jnp.dot(a, ctx_ref[...], preferred_element_type=jnp.float32)   # (T*BB, 1)
    row_sum = jnp.sum(enc2, axis=-1, keepdims=True)
    sim = jnp.where(row_sum == 0.0, -10000000000.0, sim)
    sim = sim.reshape(T, BB, 1)

    mx = jnp.max(sim, axis=0, keepdims=True)                     # softmax over time
    e = jnp.exp(sim - mx)
    wgt = e / jnp.sum(e, axis=0, keepdims=True)                  # (T, BB, 1)
    summary = jnp.sum(wgt * enc, axis=0)                         # (BB, 64)

    # ReLU + 4 fused FC heads
    summary = jnp.maximum(summary, 0.0)
    out_ref[...] = jnp.dot(summary, w_head_ref[...],
                           preferred_element_type=jnp.float32) + b_head_ref[...]


def init_params(key):
    """Deterministic random parameters in the PyTorch layout of the module."""
    ks = iter(jax.random.split(key, 64))

    def u(shape, scale):
        return jax.random.uniform(next(ks), shape, jnp.float32, -scale, scale)

    kg = 1.0 / math.sqrt(HID)
    ka = 1.0 / math.sqrt(SIZE)
    p = {"gru": []}
    for _layer in range(NUM_LAYERS):
        dirs = []
        for _d in range(2):                       # forward, reverse
            dirs.append({
                "w_ih": u((3 * HID, SIZE), kg),   # [W_ir; W_iz; W_in]
                "w_hh": u((3 * HID, HID), kg),    # [W_hr; W_hz; W_hn]
                "b_ih": u((3 * HID,), kg),
                "b_hh": u((3 * HID,), kg),
            })
        p["gru"].append(dirs)
    p["att_w"] = u((SIZE, SIZE), ka)              # attention_net.weight
    p["att_b"] = u((SIZE,), ka)
    p["ctx"] = jax.random.uniform(next(ks), (SIZE, 1), jnp.float32, -1.0, 1.0)
    p["head_w"] = {"CIPI": u((9, SIZE), ka), "PS": u((9, SIZE), ka),
                   "PL": u((9, SIZE), ka), "FS": u((5, SIZE), ka)}
    p["head_b"] = {"CIPI": u((9,), ka), "PS": u((9,), ka),
                   "PL": u((9,), ka), "FS": u((5,), ka)}
    return p


def pack_params(p):
    """Repack PyTorch-layout parameters into the kernel's fused layout."""
    z_hh = jnp.zeros((HID, HID), jnp.float32)

    def gates_t(w):                       # (3H, K) -> per-gate (K, H), transposed
        return [w[g * HID:(g + 1) * HID].T for g in range(3)]

    def bias_g(b, g):
        return b[g * HID:(g + 1) * HID]

    def blockdiag(wf, wb):                # -> (64, 64)
        top = jnp.concatenate([wf, z_hh], axis=1)
        bot = jnp.concatenate([z_hh, wb], axis=1)
        return jnp.concatenate([top, bot], axis=0)

    w_ih, b_ih, w_hh, b_hn = [], [], [], []
    for layer in range(NUM_LAYERS):
        f, b = p["gru"][layer]
        wir_f, wiz_f, win_f = gates_t(f["w_ih"])
        wir_b, wiz_b, win_b = gates_t(b["w_ih"])
        whr_f, whz_f, whn_f = gates_t(f["w_hh"])
        whr_b, whz_b, whn_b = gates_t(b["w_hh"])

        # dense: gate slot g occupies lanes [64g, 64g+64): fwd in the low 32, bwd high 32
        w_ih.append(jnp.concatenate(
            [wir_f, wir_b, wiz_f, wiz_b, win_f, win_b], axis=1))          # (64, 192)

        # input bias for every gate; the hidden bias of r/z is purely additive so it
        # is folded in here (the n-gate hidden bias stays separate: it sits inside r*(.))
        b_ih.append(jnp.concatenate([
            bias_g(f["b_ih"], 0) + bias_g(f["b_hh"], 0),
            bias_g(b["b_ih"], 0) + bias_g(b["b_hh"], 0),
            bias_g(f["b_ih"], 1) + bias_g(f["b_hh"], 1),
            bias_g(b["b_ih"], 1) + bias_g(b["b_hh"], 1),
            bias_g(f["b_ih"], 2),
            bias_g(b["b_ih"], 2)])[None, :])

        w_hh.append(jnp.concatenate([blockdiag(whr_f, whr_b),
                                     blockdiag(whz_f, whz_b),
                                     blockdiag(whn_f, whn_b)], axis=1))   # (64, 192)
        b_hn.append(jnp.concatenate([bias_g(f["b_hh"], 2),
                                     bias_g(b["b_hh"], 2)])[None, :])

    w_head = jnp.concatenate([p["head_w"][k].T for k in ("CIPI", "PS", "PL", "FS")], axis=1)
    b_head = jnp.concatenate([p["head_b"][k] for k in ("CIPI", "PS", "PL", "FS")])[None, :]
    return {
        "w_ih": jnp.stack(w_ih), "b_ih": jnp.stack(b_ih),
        "w_hh": jnp.stack(w_hh), "b_hn": jnp.stack(b_hn),
        "w_att": p["att_w"].T, "b_att": p["att_b"][None, :], "ctx": p["ctx"],
        "w_head": w_head, "b_head": b_head,
    }


def _vmem_capacity_bytes():
    try:
        info = pltpu.get_tpu_info()
        v = getattr(info, "vmem_capacity_bytes", None)
        if isinstance(v, int) and v > 0:
            return v
    except Exception:
        pass
    return 64 * 1024 * 1024          # conservative fallback (v7x per-TC size)


def _tensorcores_per_chip():
    try:
        info = pltpu.get_tpu_info()
        for attr in ("num_tensorcores", "tensorcores_per_chip", "num_cores"):
            v = getattr(info, attr, None)
            if isinstance(v, int) and v > 0:
                return v
    except Exception:
        pass
    try:
        kind = jax.devices()[0].device_kind.lower()
        if "v4" in kind or "v7" in kind:
            return 2
    except Exception:
        pass
    return 1


def _choose_batch_block(T, vmem_budget_bytes):
    # per batch row per timestep (f32 bytes):
    #   gall(768) + mask(256) + 2*enc(512) + x double-buffered(512) + bulk temps(~1024)
    per_row = T * 3072 + 1024
    fixed = 1_200_000                 # double-buffered weights + misc headroom
    bb = (vmem_budget_bytes - fixed) // per_row
    bb = int(bb // 8 * 8)
    cap = 256 if vmem_budget_bytes >= 56 * 1024 * 1024 else 128
    return max(8, min(cap, bb))


def performance_summariser_forward(packed, bscore, length):
    """bscore: (B, T, 64) float, length: (B,) int. Returns (c_CIPI, c_PS, c_PL, c_FS)."""
    B, T, F = bscore.shape
    assert F == SIZE
    x = jnp.transpose(bscore.astype(jnp.float32), (1, 0, 2))        # (T, B, 64) time-major

    vmem_cap = _vmem_capacity_bytes()
    vmem_budget = int(vmem_cap * 0.6)

    # pick the largest batch block that fits the VMEM budget, then make sure the
    # parallel grid has at least one block per TensorCore when the batch allows it
    bb = _choose_batch_block(T, vmem_budget)
    bb = min(bb, ((B + 7) // 8) * 8)
    n_cores = _tensorcores_per_chip()
    if n_cores > 1 and B >= 8 * n_cores:
        per_core = -(-B // n_cores)
        per_core = -(-per_core // 8) * 8
        bb = max(8, min(bb, per_core))
    bp = ((B + bb - 1) // bb) * bb
    n_blocks = bp // bb

    x = jnp.pad(x, ((0, 0), (0, bp - B), (0, 0)))
    lens = jnp.pad(length.astype(jnp.int32), (0, bp - B)).reshape(bp, 1)

    weights = (packed["w_ih"], packed["b_ih"], packed["w_hh"], packed["b_hn"],
               packed["w_att"], packed["b_att"], packed["ctx"],
               packed["w_head"], packed["b_head"])

    def full_spec(arr):
        return pl.BlockSpec(arr.shape, lambda i, nd=arr.ndim: (0,) * nd)

    # advisory cost estimate: 3 x (bulk + recurrent) matmuls + attention + heads
    flops = int(3 * 4 * T * bp * SIZE * GATES
                + 2 * T * bp * SIZE * SIZE + 2 * T * bp * SIZE
                + 2 * bp * SIZE * HEAD_OUT)
    transcendentals = int(3 * T * bp * GATES + T * bp * (SIZE + 1))
    bytes_accessed = int(x.size * 4 + lens.size * 4 + bp * HEAD_OUT * 4
                         + sum(int(w.size) for w in weights) * 4 * n_blocks)

    out = pl.pallas_call(
        _summariser_kernel,
        out_shape=jax.ShapeDtypeStruct((bp, HEAD_OUT), jnp.float32),
        grid=(n_blocks,),
        in_specs=[
            pl.BlockSpec((T, bb, SIZE), lambda i: (0, i, 0)),       # x
            pl.BlockSpec((bb, 1), lambda i: (i, 0)),                # lengths
        ] + [full_spec(w) for w in weights],
        out_specs=pl.BlockSpec((bb, HEAD_OUT), lambda i: (i, 0)),
        scratch_shapes=[
            pltpu.VMEM((T, bb, GATES), jnp.float32),   # dense input-gate projections
            pltpu.VMEM((T, bb, SIZE), jnp.float32),    # fwd/bwd validity mask
            pltpu.VMEM((T, bb, SIZE), jnp.float32),    # layer output ping
            pltpu.VMEM((T, bb, SIZE), jnp.float32),    # layer output pong
        ],
        compiler_params=pltpu.CompilerParams(
            dimension_semantics=("parallel",),
            vmem_limit_bytes=int(vmem_cap * 7 // 8),
        ),
        cost_estimate=pl.CostEstimate(
            flops=flops,
            transcendentals=transcendentals,
            bytes_accessed=bytes_accessed),
    )(x, lens, *weights)

    out = out[:B]
    return out[:, 0:9], out[:, 9:18], out[:, 18:27], out[:, 27:32]


if __name__ == "__main__":
    key = jax.random.PRNGKey(0)
    pkey, dkey = jax.random.split(key)
    packed = pack_params(init_params(pkey))

    B, T = 2, 8
    bscore = jax.random.normal(dkey, (B, T, SIZE), jnp.float32)
    length = jnp.array([8, 5], dtype=jnp.int32)

    outs = performance_summariser_forward(packed, bscore, length)
    outs = jax.block_until_ready(outs)
    assert outs[0].shape == (B, 9)
    assert outs[1].shape == (B, 9)
    assert outs[2].shape == (B, 9)
    assert outs[3].shape == (B, 5)
    print("KERNEL_OK")
</pallas_src>

<mosaic_0001>
module attributes {stable_mosaic.version = 11 : i64} {
  func.func @_summariser_kernel(%arg0: i32, %arg1: memref<8x8x64xf32, #tpu.memory_space<vmem>>, %arg2: memref<8x1xi32, #tpu.memory_space<vmem>>, %arg3: memref<3x64x192xf32, #tpu.memory_space<vmem>>, %arg4: memref<3x1x192xf32, #tpu.memory_space<vmem>>, %arg5: memref<3x64x192xf32, #tpu.memory_space<vmem>>, %arg6: memref<3x1x64xf32, #tpu.memory_space<vmem>>, %arg7: memref<64x64xf32, #tpu.memory_space<vmem>>, %arg8: memref<1x64xf32, #tpu.memory_space<vmem>>, %arg9: memref<64x1xf32, #tpu.memory_space<vmem>>, %arg10: memref<64x32xf32, #tpu.memory_space<vmem>>, %arg11: memref<1x32xf32, #tpu.memory_space<vmem>>, %arg12: memref<8x32xf32, #tpu.memory_space<vmem>>, %arg13: memref<8x8x192xf32, #tpu.memory_space<vmem>>, %arg14: memref<8x8x64xf32, #tpu.memory_space<vmem>>, %arg15: memref<8x8x64xf32, #tpu.memory_space<vmem>>, %arg16: memref<8x8x64xf32, #tpu.memory_space<vmem>>) attributes {dimension_semantics = [#tpu.dimension_semantics<parallel>], iteration_bounds = array<i64: 1>, scalar_prefetch = 0 : i64, scratch_operands = 4 : i64, tpu.core_type = #tpu.core_type<tc>, window_params = [{transform_indices = @transform_0, window_bounds = array<i64: 8, 8, 64>}, {transform_indices = @transform_1, window_bounds = array<i64: 8, 1>}, {pipeline_mode = #tpu.pipeline_mode<synchronous>, transform_indices = @transform_2, window_bounds = array<i64: 3, 64, 192>}, {pipeline_mode = #tpu.pipeline_mode<synchronous>, transform_indices = @transform_3, window_bounds = array<i64: 3, 1, 192>}, {pipeline_mode = #tpu.pipeline_mode<synchronous>, transform_indices = @transform_4, window_bounds = array<i64: 3, 64, 192>}, {pipeline_mode = #tpu.pipeline_mode<synchronous>, transform_indices = @transform_5, window_bounds = array<i64: 3, 1, 64>}, {pipeline_mode = #tpu.pipeline_mode<synchronous>, transform_indices = @transform_6, window_bounds = array<i64: 64, 64>}, {pipeline_mode = #tpu.pipeline_mode<synchronous>, transform_indices = @transform_7, window_bounds = array<i64: 1, 64>}, {pipeline_mode = #tpu.pipeline_mode<synchronous>, transform_indices = @transform_8, window_bounds = array<i64: 64, 1>}, {pipeline_mode = #tpu.pipeline_mode<synchronous>, transform_indices = @transform_9, window_bounds = array<i64: 64, 32>}, {pipeline_mode = #tpu.pipeline_mode<synchronous>, transform_indices = @transform_10, window_bounds = array<i64: 1, 32>}, {transform_indices = @transform_11, window_bounds = array<i64: 8, 32>}]} {
    %0 = tpu.iota {dimensions = array<i32: 0>} : vector<8x8x64xi32>
    %1 = tpu.iota {dimensions = array<i32: 2>} : vector<8x8x64xi32>
    %c32_i32 = arith.constant 32 : i32
    %2 = vector.broadcast %c32_i32 : i32 to vector<8x8x64xi32>
    %3 = arith.cmpi slt, %1, %2 : vector<8x8x64xi32>
    %c7_i32 = arith.constant 7 : i32
    %4 = vector.broadcast %c7_i32 : i32 to vector<8x8x64xi32>
    %5 = arith.subi %4, %0 : vector<8x8x64xi32>
    %6 = arith.select %3, %0, %5 : vector<8x8x64xi1>, vector<8x8x64xi32>
    %c0 = arith.constant 0 : index
    %c0_0 = arith.constant 0 : index
    %7 = vector.load %arg2[%c0, %c0_0] : memref<8x1xi32, #tpu.memory_space<vmem>>, vector<8x1xi32>
    %8 = vector.shape_cast %7 : vector<8x1xi32> to vector<1x8x1xi32>
    %9 = vector.broadcast %8 : vector<1x8x1xi32> to vector<8x8x64xi32>
    %10 = arith.cmpi slt, %6, %9 : vector<8x8x64xi32>
    %11 = arith.extui %10 : vector<8x8x64xi1> to vector<8x8x64xi32>
    %12 = arith.sitofp %11 : vector<8x8x64xi32> to vector<8x8x64xf32>
    %c0_1 = arith.constant 0 : index
    %c0_2 = arith.constant 0 : index
    %c0_3 = arith.constant 0 : index
    %13 = vector.load %arg14[%c0_1, %c0_2, %c0_3] : memref<8x8x64xf32, #tpu.memory_space<vmem>>, vector<8x8x64xf32>
    tpu.vector_store %arg14[%c0_1, %c0_2, %c0_3], %12 {strides = array<i32>} : memref<8x8x64xf32, #tpu.memory_space<vmem>>, vector<8x8x64xf32>,
    %14 = tpu.iota {dimensions = array<i32: 1>} : vector<1x192xi32>
    %c64_i32 = arith.constant 64 : i32
    %c0_i32 = arith.constant 0 : i32
    %15 = arith.cmpi eq, %c64_i32, %c0_i32 : i32
    %c1_i32 = arith.constant 1 : i32
    %16 = arith.select %15, %c1_i32, %c64_i32 : i32
    %17 = vector.broadcast %16 : i32 to vector<1x192xi32>
    %18 = arith.remsi %14, %17 : vector<1x192xi32>
    %c0_i32_4 = arith.constant 0 : i32
    %19 = vector.broadcast %c0_i32_4 : i32 to vector<1x192xi32>
    %20 = arith.cmpi ne, %18, %19 : vector<1x192xi32>
    %c0_i32_5 = arith.constant 0 : i32
    %21 = vector.broadcast %c0_i32_5 : i32 to vector<1x192xi32>
    %22 = arith.cmpi slt, %18, %21 : vector<1x192xi32>
    %c0_i32_6 = arith.constant 0 : i32
    %23 = arith.cmpi slt, %16, %c0_i32_6 : i32
    %24 = vector.broadcast %23 : i1 to vector<1x192xi1>
    %25 = vector.broadcast %24 : vector<1x192xi1> to vector<1x192xi1>
    %26 = arith.xori %22, %25 : vector<1x192xi1>
    %27 = arith.andi %26, %20 : vector<1x192xi1>
    %28 = vector.broadcast %16 : i32 to vector<1x192xi32>
    %29 = arith.addi %18, %28 : vector<1x192xi32>
    %30 = arith.select %27, %29, %18 : vector<1x192xi1>, vector<1x192xi32>
    %c32_i32_7 = arith.constant 32 : i32
    %31 = vector.broadcast %c32_i32_7 : i32 to vector<1x192xi32>
    %32 = arith.cmpi slt, %30, %31 : vector<1x192xi32>
    %c0_8 = arith.constant 0 : index
    %c0_9 = arith.constant 0 : index
    %c0_10 = arith.constant 0 : index
    %33 = vector.load %arg1[%c0_8, %c0_9, %c0_10] : memref<8x8x64xf32, #tpu.memory_space<vmem>>, vector<8x8x64xf32>
    %34 = vector.shape_cast %33 : vector<8x8x64xf32> to vector<64x64xf32>
    %c0_11 = arith.constant 0 : index
    %c0_12 = arith.constant 0 : index
    %c0_13 = arith.constant 0 : index
    %35 = vector.load %arg3[%c0_11, %c0_12, %c0_13] : memref<3x64x192xf32, #tpu.memory_space<vmem>>, vector<1x64x192xf32>
    %36 = vector.shape_cast %35 : vector<1x64x192xf32> to vector<64x192xf32>
    %cst = arith.constant dense<0.000000e+00> : vector<64x192xf32>
    %37 = tpu.matmul %34, %36, %cst {dimension_numbers = #tpu.dot_dimension_numbers<[1], [0], [0], [1], [0, 0, 1, 1], [], []>} : vector<64x64xf32>, vector<64x192xf32>, vector<64x192xf32> -> vector<64x192xf32>
    %c0_14 = arith.constant 0 : index
    %c0_15 = arith.constant 0 : index
    %c0_16 = arith.constant 0 : index
    %38 = vector.load %arg4[%c0_14, %c0_15, %c0_16] : memref<3x1x192xf32, #tpu.memory_space<vmem>>, vector<1x1x192xf32>
    %39 = vector.shape_cast %38 : vector<1x1x192xf32> to vector<1x192xf32>
    %40 = vector.broadcast %39 : vector<1x192xf32> to vector<64x192xf32>
    %41 = arith.addf %37, %40 : vector<64x192xf32>
    %42 = vector.shape_cast %41 : vector<64x192xf32> to vector<8x8x192xf32>
    %c0_17 = arith.constant 0 : index
    %c0_18 = arith.constant 0 : index
    %c0_19 = arith.constant 0 : index
    %43 = vector.load %arg13[%c0_17, %c0_18, %c0_19] : memref<8x8x192xf32, #tpu.memory_space<vmem>>, vector<8x8x192xf32>
    tpu.vector_store %arg13[%c0_17, %c0_18, %c0_19], %42 {strides = array<i32>} : memref<8x8x192xf32, #tpu.memory_space<vmem>>, vector<8x8x192xf32>,
    %c0_20 = arith.constant 0 : index
    %c0_21 = arith.constant 0 : index
    %c0_22 = arith.constant 0 : index
    %44 = vector.load %arg5[%c0_20, %c0_21, %c0_22] : memref<3x64x192xf32, #tpu.memory_space<vmem>>, vector<1x64x192xf32>
    %45 = vector.shape_cast %44 : vector<1x64x192xf32> to vector<64x192xf32>
    %c0_23 = arith.constant 0 : index
    %c0_24 = arith.constant 0 : index
    %c0_25 = arith.constant 0 : index
    %46 = vector.load %arg6[%c0_23, %c0_24, %c0_25] : memref<3x1x64xf32, #tpu.memory_space<vmem>>, vector<1x1x64xf32>
    %47 = vector.shape_cast %46 : vector<1x1x64xf32> to vector<1x64xf32>
    %cst_26 = arith.constant 0.000000e+00 : f32
    %48 = vector.broadcast %cst_26 : f32 to vector<8x64xf32>
    %c0_i32_27 = arith.constant 0 : i32
    %c7_i32_28 = arith.constant 7 : i32
    %49 = arith.subi %c7_i32_28, %c0_i32_27 : i32
    %50 = arith.index_cast %c0_i32_27 : i32 to index
    %c0_29 = arith.constant 0 : index
    %c0_30 = arith.constant 0 : index
    %51 = vector.load %arg13[%50, %c0_29, %c0_30] : memref<8x8x192xf32, #tpu.memory_space<vmem>>, vector<1x8x192xf32>
    %52 = vector.shape_cast %51 : vector<1x8x192xf32> to vector<8x192xf32>
    %53 = arith.index_cast %49 : i32 to index
    %c0_31 = arith.constant 0 : index
    %c0_32 = arith.constant 0 : index
    %54 = vector.load %arg13[%53, %c0_31, %c0_32] : memref<8x8x192xf32, #tpu.memory_space<vmem>>, vector<1x8x192xf32>
    %55 = vector.shape_cast %54 : vector<1x8x192xf32> to vector<8x192xf32>
    %56 = vector.shape_cast %32 : vector<1x192xi1> to vector<1x192xi1>
    %57 = vector.broadcast %56 : vector<1x192xi1> to vector<8x192xi1>
    %58 = arith.select %57, %52, %55 : vector<8x192xi1>, vector<8x192xf32>
    %59 = arith.index_cast %c0_i32_27 : i32 to index
    %c0_33 = arith.constant 0 : index
    %c0_34 = arith.constant 0 : index
    %60 = vector.load %arg14[%59, %c0_33, %c0_34] : memref<8x8x64xf32, #tpu.memory_space<vmem>>, vector<1x8x64xf32>
    %61 = vector.shape_cast %60 : vector<1x8x64xf32> to vector<8x64xf32>
    %cst_35 = arith.constant dense<0.000000e+00> : vector<8x192xf32>
    %62 = tpu.matmul %48, %45, %cst_35 {dimension_numbers = #tpu.dot_dimension_numbers<[1], [0], [0], [1], [0, 0, 1, 1], [], []>} : vector<8x64xf32>, vector<64x192xf32>, vector<8x192xf32> -> vector<8x192xf32>
    %63 = vector.extract_strided_slice %58 {offsets = [0, 0], sizes = [8, 64], strides = [1, 1]} : vector<8x192xf32> to vector<8x64xf32>
    %64 = vector.extract_strided_slice %62 {offsets = [0, 0], sizes = [8, 64], strides = [1, 1]} : vector<8x192xf32> to vector<8x64xf32>
    %65 = arith.addf %63, %64 : vector<8x64xf32>
    %66 = arith.negf %65 : vector<8x64xf32>
    %67 = math.exp %66 : vector<8x64xf32>
    %cst_36 = arith.constant 1.000000e+00 : f32
    %68 = vector.broadcast %cst_36 : f32 to vector<8x64xf32>
    %69 = arith.addf %68, %67 : vector<8x64xf32>
    %70 = arith.divf %68, %69 : vector<8x64xf32>
    %71 = vector.extract_strided_slice %58 {offsets = [0, 64], sizes = [8, 64], strides = [1, 1]} : vector<8x192xf32> to vector<8x64xf32>
    %72 = vector.extract_strided_slice %62 {offsets = [0, 64], sizes = [8, 64], strides = [1, 1]} : vector<8x192xf32> to vector<8x64xf32>
    %73 = arith.addf %71, %72 : vector<8x64xf32>
    %74 = arith.negf %73 : vector<8x64xf32>
    %75 = math.exp %74 : vector<8x64xf32>
    %cst_37 = arith.constant 1.000000e+00 : f32
    %76 = vector.broadcast %cst_37 : f32 to vector<8x64xf32>
    %77 = arith.addf %76, %75 : vector<8x64xf32>
    %78 = arith.divf %76, %77 : vector<8x64xf32>
    %79 = vector.extract_strided_slice %58 {offsets = [0, 128], sizes = [8, 64], strides = [1, 1]} : vector<8x192xf32> to vector<8x64xf32>
    %80 = vector.extract_strided_slice %62 {offsets = [0, 128], sizes = [8, 64], strides = [1, 1]} : vector<8x192xf32> to vector<8x64xf32>
    %81 = vector.broadcast %47 : vector<1x64xf32> to vector<8x64xf32>
    %82 = arith.addf %80, %81 : vector<8x64xf32>
    %83 = arith.mulf %70, %82 : vector<8x64xf32>
    %84 = arith.addf %79, %83 : vector<8x64xf32>
    %85 = math.tanh %84 : vector<8x64xf32>
    %86 = arith.subf %48, %85 : vector<8x64xf32>
    %87 = arith.mulf %78, %86 : vector<8x64xf32>
    %88 = arith.addf %85, %87 : vector<8x64xf32>
    %89 = arith.mulf %61, %88 : vector<8x64xf32>
    %cst_38 = arith.constant 1.000000e+00 : f32
    %90 = vector.broadcast %cst_38 : f32 to vector<8x64xf32>
    %91 = arith.subf %90, %61 : vector<8x64xf32>
    %92 = arith.mulf %91, %48 : vector<8x64xf32>
    %93 = arith.addf %89, %92 : vector<8x64xf32>
    %94 = vector.extract_strided_slice %89 {offsets = [0, 0], sizes = [8, 32], strides = [1, 1]} : vector<8x64xf32> to vector<8x32xf32>
    %95 = arith.index_cast %c0_i32_27 : i32 to index
    %c0_39 = arith.constant 0 : index
    %c0_40 = arith.constant 0 : index
    %96 = vector.load %arg15[%95, %c0_39, %c0_40] : memref<8x8x64xf32, #tpu.memory_space<vmem>>, vector<1x8x32xf32>
    %97 = vector.shape_cast %96 : vector<1x8x32xf32> to vector<8x32xf32>
    %98 = vector.shape_cast %94 : vector<8x32xf32> to vector<1x8x32xf32>
    tpu.vector_store %arg15[%95, %c0_39, %c0_40], %98 {strides = array<i32>} : memref<8x8x64xf32, #tpu.memory_space<vmem>>, vector<1x8x32xf32>,
    %99 = vector.extract_strided_slice %89 {offsets = [0, 32], sizes = [8, 32], strides = [1, 1]} : vector<8x64xf32> to vector<8x32xf32>
    %100 = arith.index_cast %49 : i32 to index
    %c0_41 = arith.constant 0 : index
    %c32 = arith.constant 32 : index
    %101 = vector.load %arg15[%100, %c0_41, %c32] : memref<8x8x64xf32, #tpu.memory_space<vmem>>, vector<1x8x32xf32>
    %102 = vector.shape_cast %101 : vector<1x8x32xf32> to vector<8x32xf32>
    %103 = vector.shape_cast %99 : vector<8x32xf32> to vector<1x8x32xf32>
    tpu.vector_store %arg15[%100, %c0_41, %c32], %103 {strides = array<i32>} : memref<8x8x64xf32, #tpu.memory_space<vmem>>, vector<1x8x32xf32>,
    %c1_i32_42 = arith.constant 1 : i32
    %c7_i32_43 = arith.constant 7 : i32
    %104 = arith.subi %c7_i32_43, %c1_i32_42 : i32
    %105 = arith.index_cast %c1_i32_42 : i32 to index
    %c0_44 = arith.constant 0 : index
    %c0_45 = arith.constant 0 : index
    %106 = vector.load %arg13[%105, %c0_44, %c0_45] : memref<8x8x192xf32, #tpu.memory_space<vmem>>, vector<1x8x192xf32>
    %107 = vector.shape_cast %106 : vector<1x8x192xf32> to vector<8x192xf32>
    %108 = arith.index_cast %104 : i32 to index
    %c0_46 = arith.constant 0 : index
    %c0_47 = arith.constant 0 : index
    %109 = vector.load %arg13[%108, %c0_46, %c0_47] : memref<8x8x192xf32, #tpu.memory_space<vmem>>, vector<1x8x192xf32>
    %110 = vector.shape_cast %109 : vector<1x8x192xf32> to vector<8x192xf32>
    %111 = vector.shape_cast %32 : vector<1x192xi1> to vector<1x192xi1>
    %112 = vector.broadcast %111 : vector<1x192xi1> to vector<8x192xi1>
    %113 = arith.select %112, %107, %110 : vector<8x192xi1>, vector<8x192xf32>
    %114 = arith.index_cast %c1_i32_42 : i32 to index
    %c0_48 = arith.constant 0 : index
    %c0_49 = arith.constant 0 : index
    %115 = vector.load %arg14[%114, %c0_48, %c0_49] : memref<8x8x64xf32, #tpu.memory_space<vmem>>, vector<1x8x64xf32>
    %116 = vector.shape_cast %115 : vector<1x8x64xf32> to vector<8x64xf32>
    %cst_50 = arith.constant dense<0.000000e+00> : vector<8x192xf32>
    %117 = tpu.matmul %93, %45, %cst_50 {dimension_numbers = #tpu.dot_dimension_numbers<[1], [0], [0], [1], [0, 0, 1, 1], [], []>} : vector<8x64xf32>, vector<64x192xf32>, vector<8x192xf32> -> vector<8x192xf32>
    %118 = vector.extract_strided_slice %113 {offsets = [0, 0], sizes = [8, 64], strides = [1, 1]} : vector<8x192xf32> to vector<8x64xf32>
    %119 = vector.extract_strided_slice %117 {offsets = [0, 0], sizes = [8, 64], strides = [1, 1]} : vector<8x192xf32> to vector<8x64xf32>
    %120 = arith.addf %118, %119 : vector<8x64xf32>
    %121 = arith.negf %120 : vector<8x64xf32>
    %122 = math.exp %121 : vector<8x64xf32>
    %cst_51 = arith.constant 1.000000e+00 : f32
    %123 = vector.broadcast %cst_51 : f32 to vector<8x64xf32>
    %124 = arith.addf %123, %122 : vector<8x64xf32>
    %125 = arith.divf %123, %124 : vector<8x64xf32>
    %126 = vector.extract_strided_slice %113 {offsets = [0, 64], sizes = [8, 64], strides = [1, 1]} : vector<8x192xf32> to vector<8x64xf32>
    %127 = vector.extract_strided_slice %117 {offsets = [0, 64], sizes = [8, 64], strides = [1, 1]} : vector<8x192xf32> to vector<8x64xf32>
    %128 = arith.addf %126, %127 : vector<8x64xf32>
    %129 = arith.negf %128 : vector<8x64xf32>
    %130 = math.exp %129 : vector<8x64xf32>
    %cst_52 = arith.constant 1.000000e+00 : f32
    %131 = vector.broadcast %cst_52 : f32 to vector<8x64xf32>
    %132 = arith.addf %131, %130 : vector<8x64xf32>
    %133 = arith.divf %131, %132 : vector<8x64xf32>
    %134 = vector.extract_strided_slice %113 {offsets = [0, 128], sizes = [8, 64], strides = [1, 1]} : vector<8x192xf32> to vector<8x64xf32>
    %135 = vector.extract_strided_slice %117 {offsets = [0, 128], sizes = [8, 64], strides = [1, 1]} : vector<8x192xf32> to vector<8x64xf32>
    %136 = vector.broadcast %47 : vector<1x64xf32> to vector<8x64xf32>
    %137 = arith.addf %135, %136 : vector<8x64xf32>
    %138 = arith.mulf %125, %137 : vector<8x64xf32>
    %139 = arith.addf %134, %138 : vector<8x64xf32>
    %140 = math.tanh %139 : vector<8x64xf32>
    %141 = arith.subf %93, %140 : vector<8x64xf32>
    %142 = arith.mulf %133, %141 : vector<8x64xf32>
    %143 = arith.addf %140, %142 : vector<8x64xf32>
    %144 = arith.mulf %116, %143 : vector<8x64xf32>
    %cst_53 = arith.constant 1.000000e+00 : f32
    %145 = vector.broadcast %cst_53 : f32 to vector<8x64xf32>
    %146 = arith.subf %145, %116 : vector<8x64xf32>
    %147 = arith.mulf %146, %93 : vector<8x64xf32>
    %148 = arith.addf %144, %147 : vector<8x64xf32>
    %149 = vector.extract_strided_slice %144 {offsets = [0, 0], sizes = [8, 32], strides = [1, 1]} : vector<8x64xf32> to vector<8x32xf32>
    %150 = arith.index_cast %c1_i32_42 : i32 to index
    %c0_54 = arith.constant 0 : index
    %c0_55 = arith.constant 0 : index
    %151 = vector.load %arg15[%150, %c0_54, %c0_55] : memref<8x8x64xf32, #tpu.memory_space<vmem>>, vector<1x8x32xf32>
    %152 = vector.shape_cast %151 : vector<1x8x32xf32> to vector<8x32xf32>
    %153 = vector.shape_cast %149 : vector<8x32xf32> to vector<1x8x32xf32>
    tpu.vector_store %arg15[%150, %c0_54, %c0_55], %153 {strides = array<i32>} : memref<8x8x64xf32, #tpu.memory_space<vmem>>, vector<1x8x32xf32>,
    %154 = vector.extract_strided_slice %144 {offsets = [0, 32], sizes = [8, 32], strides = [1, 1]} : vector<8x64xf32> to vector<8x32xf32>
    %155 = arith.index_cast %104 : i32 to index
    %c0_56 = arith.constant 0 : index
    %c32_57 = arith.constant 32 : index
    %156 = vector.load %arg15[%155, %c0_56, %c32_57] : memref<8x8x64xf32, #tpu.memory_space<vmem>>, vector<1x8x32xf32>
    %157 = vector.shape_cast %156 : vector<1x8x32xf32> to vector<8x32xf32>
    %158 = vector.shape_cast %154 : vector<8x32xf32> to vector<1x8x32xf32>
    tpu.vector_store %arg15[%155, %c0_56, %c32_57], %158 {strides = array<i32>} : memref<8x8x64xf32, #tpu.memory_space<vmem>>, vector<1x8x32xf32>,
    %c2_i32 = arith.constant 2 : i32
    %c7_i32_58 = arith.constant 7 : i32
    %159 = arith.subi %c7_i32_58, %c2_i32 : i32
    %160 = arith.index_cast %c2_i32 : i32 to index
    %c0_59 = arith.constant 0 : index
    %c0_60 = arith.constant 0 : index
    %161 = vector.load %arg13[%160, %c0_59, %c0_60] : memref<8x8x192xf32, #tpu.memory_space<vmem>>, vector<1x8x192xf32>
    %162 = vector.shape_cast %161 : vector<1x8x192xf32> to vector<8x192xf32>
    %163 = arith.index_cast %159 : i32 to index
    %c0_61 = arith.constant 0 : index
    %c0_62 = arith.constant 0 : index
    %164 = vector.load %arg13[%163, %c0_61, %c0_62] : memref<8x8x192xf32, #tpu.memory_space<vmem>>, vector<1x8x192xf32>
    %165 = vector.shape_cast %164 : vector<1x8x192xf32> to vector<8x192xf32>
    %166 = vector.shape_cast %32 : vector<1x192xi1> to vector<1x192xi1>
    %167 = vector.broadcast %166 : vector<1x192xi1> to vector<8x192xi1>
    %168 = arith.select %167, %162, %165 : vector<8x192xi1>, vector<8x192xf32>
    %169 = arith.index_cast %c2_i32 : i32 to index
    %c0_63 = arith.constant 0 : index
    %c0_64 = arith.constant 0 : index
    %170 = vector.load %arg14[%169, %c0_63, %c0_64] : memref<8x8x64xf32, #tpu.memory_space<vmem>>, vector<1x8x64xf32>
    %171 = vector.shape_cast %170 : vector<1x8x64xf32> to vector<8x64xf32>
    %cst_65 = arith.constant dense<0.000000e+00> : vector<8x192xf32>
    %172 = tpu.matmul %148, %45, %cst_65 {dimension_numbers = #tpu.dot_dimension_numbers<[1], [0], [0], [1], [0, 0, 1, 1], [], []>} : vector<8x64xf32>, vector<64x192xf32>, vector<8x192xf32> -> vector<8x192xf32>
    %173 = vector.extract_strided_slice %168 {offsets = [0, 0], sizes = [8, 64], strides = [1, 1]} : vector<8x192xf32> to vector<8x64xf32>
    %174 = vector.extract_strided_slice %172 {offsets = [0, 0], sizes = [8, 64], strides = [1, 1]} : vector<8x192xf32> to vector<8x64xf32>
    %175 = arith.addf %173, %174 : vector<8x64xf32>
    %176 = arith.negf %175 : vector<8x64xf32>
    %177 = math.exp %176 : vector<8x64xf32>
    %cst_66 = arith.constant 1.000000e+00 : f32
    %178 = vector.broadcast %cst_66 : f32 to vector<8x64xf32>
    %179 = arith.addf %178, %177 : vector<8x64xf32>
    %180 = arith.divf %178, %179 : vector<8x64xf32>
    %181 = vector.extract_strided_slice %168 {offsets = [0, 64], sizes = [8, 64], strides = [1, 1]} : vector<8x192xf32> to vector<8x64xf32>
    %182 = vector.extract_strided_slice %172 {offsets = [0, 64], sizes = [8, 64], strides = [1, 1]} : vector<8x192xf32> to vector<8x64xf32>
    %183 = arith.addf %181, %182 : vector<8x64xf32>
    %184 = arith.negf %183 : vector<8x64xf32>
    %185 = math.exp %184 : vector<8x64xf32>
    %cst_67 = arith.constant 1.000000e+00 : f32
    %186 = vector.broadcast %cst_67 : f32 to vector<8x64xf32>
    %187 = arith.addf %186, %185 : vector<8x64xf32>
    %188 = arith.divf %186, %187 : vector<8x64xf32>
    %189 = vector.extract_strided_slice %168 {offsets = [0, 128], sizes = [8, 64], strides = [1, 1]} : vector<8x192xf32> to vector<8x64xf32>
    %190 = vector.extract_strided_slice %172 {offsets = [0, 128], sizes = [8, 64], strides = [1, 1]} : vector<8x192xf32> to vector<8x64xf32>
    %191 = vector.broadcast %47 : vector<1x64xf32> to vector<8x64xf32>
    %192 = arith.addf %190, %191 : vector<8x64xf32>
    %193 = arith.mulf %180, %192 : vector<8x64xf32>
    %194 = arith.addf %189, %193 : vector<8x64xf32>
    %195 = math.tanh %194 : vector<8x64xf32>
    %196 = arith.subf %148, %195 : vector<8x64xf32>
    %197 = arith.mulf %188, %196 : vector<8x64xf32>
    %198 = arith.addf %195, %197 : vector<8x64xf32>
    %199 = arith.mulf %171, %198 : vector<8x64xf32>
    %cst_68 = arith.constant 1.000000e+00 : f32
    %200 = vector.broadcast %cst_68 : f32 to vector<8x64xf32>
    %201 = arith.subf %200, %171 : vector<8x64xf32>
    %202 = arith.mulf %201, %148 : vector<8x64xf32>
    %203 = arith.addf %199, %202 : vector<8x64xf32>
    %204 = vector.extract_strided_slice %199 {offsets = [0, 0], sizes = [8, 32], strides = [1, 1]} : vector<8x64xf32> to vector<8x32xf32>
    %205 = arith.index_cast %c2_i32 : i32 to index
    %c0_69 = arith.constant 0 : index
    %c0_70 = arith.constant 0 : index
    %206 = vector.load %arg15[%205, %c0_69, %c0_70] : memref<8x8x64xf32, #tpu.memory_space<vmem>>, vector<1x8x32xf32>
    %207 = vector.shape_cast %206 : vector<1x8x32xf32> to vector<8x32xf32>
    %208 = vector.shape_cast %204 : vector<8x32xf32> to vector<1x8x32xf32>
    tpu.vector_store %arg15[%205, %c0_69, %c0_70], %208 {strides = array<i32>} : memref<8x8x64xf32, #tpu.memory_space<vmem>>, vector<1x8x32xf32>,
    %209 = vector.extract_strided_slice %199 {offsets = [0, 32], sizes = [8, 32], strides = [1, 1]} : vector<8x64xf32> to vector<8x32xf32>
    %210 = arith.index_cast %159 : i32 to index
    %c0_71 = arith.constant 0 : index
    %c32_72 = arith.constant 32 : index
    %211 = vector.load %arg15[%210, %c0_71, %c32_72] : memref<8x8x64xf32, #tpu.memory_space<vmem>>, vector<1x8x32xf32>
    %212 = vector.shape_cast %211 : vector<1x8x32xf32> to vector<8x32xf32>
    %213 = vector.shape_cast %209 : vector<8x32xf32> to vector<1x8x32xf32>
    tpu.vector_store %arg15[%210, %c0_71, %c32_72], %213 {strides = array<i32>} : memref<8x8x64xf32, #tpu.memory_space<vmem>>, vector<1x8x32xf32>,
    %c3_i32 = arith.constant 3 : i32
    %c7_i32_73 = arith.constant 7 : i32
    %214 = arith.subi %c7_i32_73, %c3_i32 : i32
    %215 = arith.index_cast %c3_i32 : i32 to index
    %c0_74 = arith.constant 0 : index
    %c0_75 = arith.constant 0 : index
    %216 = vector.load %arg13[%215, %c0_74, %c0_75] : memref<8x8x192xf32, #tpu.memory_space<vmem>>, vector<1x8x192xf32>
    %217 = vector.shape_cast %216 : vector<1x8x192xf32> to vector<8x192xf32>
    %218 = arith.index_cast %214 : i32 to index
    %c0_76 = arith.constant 0 : index
    %c0_77 = arith.constant 0 : index
    %219 = vector.load %arg13[%218, %c0_76, %c0_77] : memref<8x8x192xf32, #tpu.memory_space<vmem>>, vector<1x8x192xf32>
    %220 = vector.shape_cast %219 : vector<1x8x192xf32> to vector<8x192xf32>
    %221 = vector.shape_cast %32 : vector<1x192xi1> to vector<1x192xi1>
    %222 = vector.broadcast %221 : vector<1x192xi1> to vector<8x192xi1>
    %223 = arith.select %222, %217, %220 : vector<8x192xi1>, vector<8x192xf32>
    %224 = arith.index_cast %c3_i32 : i32 to index
    %c0_78 = arith.constant 0 : index
    %c0_79 = arith.constant 0 : index
    %225 = vector.load %arg14[%224, %c0_78, %c0_79] : memref<8x8x64xf32, #tpu.memory_space<vmem>>, vector<1x8x64xf32>
    %226 = vector.shape_cast %225 : vector<1x8x64xf32> to vector<8x64xf32>
    %cst_80 = arith.constant dense<0.000000e+00> : vector<8x192xf32>
    %227 = tpu.matmul %203, %45, %cst_80 {dimension_numbers = #tpu.dot_dimension_numbers<[1], [0], [0], [1], [0, 0, 1, 1], [], []>} : vector<8x64xf32>, vector<64x192xf32>, vector<8x192xf32> -> vector<8x192xf32>
    %228 = vector.extract_strided_slice %223 {offsets = [0, 0], sizes = [8, 64], strides = [1, 1]} : vector<8x192xf32> to vector<8x64xf32>
    %229 = vector.extract_strided_slice %227 {offsets = [0, 0], sizes = [8, 64], strides = [1, 1]} : vector<8x192xf32> to vector<8x64xf32>
    %230 = arith.addf %228, %229 : vector<8x64xf32>
    %231 = arith.negf %230 : vector<8x64xf32>
    %232 = math.exp %231 : vector<8x64xf32>
    %cst_81 = arith.constant 1.000000e+00 : f32
    %233 = vector.broadcast %cst_81 : f32 to vector<8x64xf32>
    %234 = arith.addf %233, %232 : vector<8x64xf32>
    %235 = arith.divf %233, %234 : vector<8x64xf32>
    %236 = vector.extract_strided_slice %223 {offsets = [0, 64], sizes = [8, 64], strides = [1, 1]} : vector<8x192xf32> to vector<8x64xf32>
    %237 = vector.extract_strided_slice %227 {offsets = [0, 64], sizes = [8, 64], strides = [1, 1]} : vector<8x192xf32> to vector<8x64xf32>
    %238 = arith.addf %236, %237 : vector<8x64xf32>
    %239 = arith.negf %238 : vector<8x64xf32>
    %240 = math.exp %239 : vector<8x64xf32>
    %cst_82 = arith.constant 1.000000e+00 : f32
    %241 = vector.broadcast %cst_82 : f32 to vector<8x64xf32>
    %242 = arith.addf %241, %240 : vector<8x64xf32>
    %243 = arith.divf %241, %242 : vector<8x64xf32>
    %244 = vector.extract_strided_slice %223 {offsets = [0, 128], sizes = [8, 64], strides = [1, 1]} : vector<8x192xf32> to vector<8x64xf32>
    %245 = vector.extract_strided_slice %227 {offsets = [0, 128], sizes = [8, 64], strides = [1, 1]} : vector<8x192xf32> to vector<8x64xf32>
    %246 = vector.broadcast %47 : vector<1x64xf32> to vector<8x64xf32>
    %247 = arith.addf %245, %246 : vector<8x64xf32>
    %248 = arith.mulf %235, %247 : vector<8x64xf32>
    %249 = arith.addf %244, %248 : vector<8x64xf32>
    %250 = math.tanh %249 : vector<8x64xf32>
    %251 = arith.subf %203, %250 : vector<8x64xf32>
    %252 = arith.mulf %243, %251 : vector<8x64xf32>
    %253 = arith.addf %250, %252 : vector<8x64xf32>
    %254 = arith.mulf %226, %253 : vector<8x64xf32>
    %cst_83 = arith.constant 1.000000e+00 : f32
    %255 = vector.broadcast %cst_83 : f32 to vector<8x64xf32>
    %256 = arith.subf %255, %226 : vector<8x64xf32>
    %257 = arith.mulf %256, %203 : vector<8x64xf32>
    %258 = arith.addf %254, %257 : vector<8x64xf32>
    %259 = vector.extract_strided_slice %254 {offsets = [0, 0], sizes = [8, 32], strides = [1, 1]} : vector<8x64xf32> to vector<8x32xf32>
    %260 = arith.index_cast %c3_i32 : i32 to index
    %c0_84 = arith.constant 0 : index
    %c0_85 = arith.constant 0 : index
    %261 = vector.load %arg15[%260, %c0_84, %c0_85] : memref<8x8x64xf32, #tpu.memory_space<vmem>>, vector<1x8x32xf32>
    %262 = vector.shape_cast %261 : vector<1x8x32xf32> to vector<8x32xf32>
    %263 = vector.shape_cast %259 : vector<8x32xf32> to vector<1x8x32xf32>
    tpu.vector_store %arg15[%260, %c0_84, %c0_85], %263 {strides = array<i32>} : memref<8x8x64xf32, #tpu.memory_space<vmem>>, vector<1x8x32xf32>,
    %264 = vector.extract_strided_slice %254 {offsets = [0, 32], sizes = [8, 32], strides = [1, 1]} : vector<8x64xf32> to vector<8x32xf32>
    %265 = arith.index_cast %214 : i32 to index
    %c0_86 = arith.constant 0 : index
    %c32_87 = arith.constant 32 : index
    %266 = vector.load %arg15[%265, %c0_86, %c32_87] : memref<8x8x64xf32, #tpu.memory_space<vmem>>, vector<1x8x32xf32>
    %267 = vector.shape_cast %266 : vector<1x8x32xf32> to vector<8x32xf32>
    %268 = vector.shape_cast %264 : vector<8x32xf32> to vector<1x8x32xf32>
    tpu.vector_store %arg15[%265, %c0_86, %c32_87], %268 {strides = array<i32>} : memref<8x8x64xf32, #tpu.memory_space<vmem>>, vector<1x8x32xf32>,
    %c4_i32 = arith.constant 4 : i32
    %c7_i32_88 = arith.constant 7 : i32
    %269 = arith.subi %c7_i32_88, %c4_i32 : i32
    %270 = arith.index_cast %c4_i32 : i32 to index
    %c0_89 = arith.constant 0 : index
    %c0_90 = arith.constant 0 : index
    %271 = vector.load %arg13[%270, %c0_89, %c0_90] : memref<8x8x192xf32, #tpu.memory_space<vmem>>, vector<1x8x192xf32>
    %272 = vector.shape_cast %271 : vector<1x8x192xf32> to vector<8x192xf32>
    %273 = arith.index_cast %269 : i32 to index
    %c0_91 = arith.constant 0 : index
    %c0_92 = arith.constant 0 : index
    %274 = vector.load %arg13[%273, %c0_91, %c0_92] : memref<8x8x192xf32, #tpu.memory_space<vmem>>, vector<1x8x192xf32>
    %275 = vector.shape_cast %274 : vector<1x8x192xf32> to vector<8x192xf32>
    %276 = vector.shape_cast %32 : vector<1x192xi1> to vector<1x192xi1>
    %277 = vector.broadcast %276 : vector<1x192xi1> to vector<8x192xi1>
    %278 = arith.select %277, %272, %275 : vector<8x192xi1>, vector<8x192xf32>
    %279 = arith.index_cast %c4_i32 : i32 to index
    %c0_93 = arith.constant 0 : index
    %c0_94 = arith.constant 0 : index
    %280 = vector.load %arg14[%279, %c0_93, %c0_94] : memref<8x8x64xf32, #tpu.memory_space<vmem>>, vector<1x8x64xf32>
    %281 = vector.shape_cast %280 : vector<1x8x64xf32> to vector<8x64xf32>
    %cst_95 = arith.constant dense<0.000000e+00> : vector<8x192xf32>
    %282 = tpu.matmul %258, %45, %cst_95 {dimension_numbers = #tpu.dot_dimension_numbers<[1], [0], [0], [1], [0, 0, 1, 1], [], []>} : vector<8x64xf32>, vector<64x192xf32>, vector<8x192xf32> -> vector<8x192xf32>
    %283 = vector.extract_strided_slice %278 {offsets = [0, 0], sizes = [8, 64], strides = [1, 1]} : vector<8x192xf32> to vector<8x64xf32>
    %284 = vector.extract_strided_slice %282 {offsets = [0, 0], sizes = [8, 64], strides = [1, 1]} : vector<8x192xf32> to vector<8x64xf32>
    %285 = arith.addf %283, %284 : vector<8x64xf32>
    %286 = arith.negf %285 : vector<8x64xf32>
    %287 = math.exp %286 : vector<8x64xf32>
    %cst_96 = arith.constant 1.000000e+00 : f32
    %288 = vector.broadcast %cst_96 : f32 to vector<8x64xf32>
    %289 = arith.addf %288, %287 : vector<8x64xf32>
    %290 = arith.divf %288, %289 : vector<8x64xf32>
    %291 = vector.extract_strided_slice %278 {offsets = [0, 64], sizes = [8, 64], strides = [1, 1]} : vector<8x192xf32> to vector<8x64xf32>
    %292 = vector.extract_strided_slice %282 {offsets = [0, 64], sizes = [8, 64], strides = [1, 1]} : vector<8x192xf32> to vector<8x64xf32>
    %293 = arith.addf %291, %292 : vector<8x64xf32>
    %294 = arith.negf %293 : vector<8x64xf32>
    %295 = math.exp %294 : vector<8x64xf32>
    %cst_97 = arith.constant 1.000000e+00 : f32
    %296 = vector.broadcast %cst_97 : f32 to vector<8x64xf32>
    %297 = arith.addf %296, %295 : vector<8x64xf32>
    %298 = arith.divf %296, %297 : vector<8x64xf32>
    %299 = vector.extract_strided_slice %278 {offsets = [0, 128], sizes = [8, 64], strides = [1, 1]} : vector<8x192xf32> to vector<8x64xf32>
    %300 = vector.extract_strided_slice %282 {offsets = [0, 128], sizes = [8, 64], strides = [1, 1]} : vector<8x192xf32> to vector<8x64xf32>
    %301 = vector.broadcast %47 : vector<1x64xf32> to vector<8x64xf32>
    %302 = arith.addf %300, %301 : vector<8x64xf32>
    %303 = arith.mulf %290, %302 : vector<8x64xf32>
    %304 = arith.addf %299, %303 : vector<8x64xf32>
    %305 = math.tanh %304 : vector<8x64xf32>
    %306 = arith.subf %258, %305 : vector<8x64xf32>
    %307 = arith.mulf %298, %306 : vector<8x64xf32>
    %308 = arith.addf %305, %307 : vector<8x64xf32>
    %309 = arith.mulf %281, %308 : vector<8x64xf32>
    %cst_98 = arith.constant 1.000000e+00 : f32
    %310 = vector.broadcast %cst_98 : f32 to vector<8x64xf32>
    %311 = arith.subf %310, %281 : vector<8x64xf32>
    %312 = arith.mulf %311, %258 : vector<8x64xf32>
    %313 = arith.addf %309, %312 : vector<8x64xf32>
    %314 = vector.extract_strided_slice %309 {offsets = [0, 0], sizes = [8, 32], strides = [1, 1]} : vector<8x64xf32> to vector<8x32xf32>
    %315 = arith.index_cast %c4_i32 : i32 to index
    %c0_99 = arith.constant 0 : index
    %c0_100 = arith.constant 0 : index
    %316 = vector.load %arg15[%315, %c0_99, %c0_100] : memref<8x8x64xf32, #tpu.memory_space<vmem>>, vector<1x8x32xf32>
    %317 = vector.shape_cast %316 : vector<1x8x32xf32> to vector<8x32xf32>
    %318 = vector.shape_cast %314 : vector<8x32xf32> to vector<1x8x32xf32>
    tpu.vector_store %arg15[%315, %c0_99, %c0_100], %318 {strides = array<i32>} : memref<8x8x64xf32, #tpu.memory_space<vmem>>, vector<1x8x32xf32>,
    %319 = vector.extract_strided_slice %309 {offsets = [0, 32], sizes = [8, 32], strides = [1, 1]} : vector<8x64xf32> to vector<8x32xf32>
    %320 = arith.index_cast %269 : i32 to index
    %c0_101 = arith.constant 0 : index
    %c32_102 = arith.constant 32 : index
    %321 = vector.load %arg15[%320, %c0_101, %c32_102] : memref<8x8x64xf32, #tpu.memory_space<vmem>>, vector<1x8x32xf32>
    %322 = vector.shape_cast %321 : vector<1x8x32xf32> to vector<8x32xf32>
    %323 = vector.shape_cast %319 : vector<8x32xf32> to vector<1x8x32xf32>
    tpu.vector_store %arg15[%320, %c0_101, %c32_102], %323 {strides = array<i32>} : memref<8x8x64xf32, #tpu.memory_space<vmem>>, vector<1x8x32xf32>,
    %c5_i32 = arith.constant 5 : i32
    %c7_i32_103 = arith.constant 7 : i32
    %324 = arith.subi %c7_i32_103, %c5_i32 : i32
    %325 = arith.index_cast %c5_i32 : i32 to index
    %c0_104 = arith.constant 0 : index
    %c0_105 = arith.constant 0 : index
    %326 = vector.load %arg13[%325, %c0_104, %c0_105] : memref<8x8x192xf32, #tpu.memory_space<vmem>>, vector<1x8x192xf32>
    %327 = vector.shape_cast %326 : vector<1x8x192xf32> to vector<8x192xf32>
    %328 = arith.index_cast %324 : i32 to index
    %c0_106 = arith.constant 0 : index
    %c0_107 = arith.constant 0 : index
    %329 = vector.load %arg13[%328, %c0_106, %c0_107] : memref<8x8x192xf32, #tpu.memory_space<vmem>>, vector<1x8x192xf32>
    %330 = vector.shape_cast %329 : vector<1x8x192xf32> to vector<8x192xf32>
    %331 = vector.shape_cast %32 : vector<1x192xi1> to vector<1x192xi1>
    %332 = vector.broadcast %331 : vector<1x192xi1> to vector<8x192xi1>
    %333 = arith.select %332, %327, %330 : vector<8x192xi1>, vector<8x192xf32>
    %334 = arith.index_cast %c5_i32 : i32 to index
    %c0_108 = arith.constant 0 : index
    %c0_109 = arith.constant 0 : index
    %335 = vector.load %arg14[%334, %c0_108, %c0_109] : memref<8x8x64xf32, #tpu.memory_space<vmem>>, vector<1x8x64xf32>
    %336 = vector.shape_cast %335 : vector<1x8x64xf32> to vector<8x64xf32>
    %cst_110 = arith.constant dense<0.000000e+00> : vector<8x192xf32>
    %337 = tpu.matmul %313, %45, %cst_110 {dimension_numbers = #tpu.dot_dimension_numbers<[1], [0], [0], [1], [0, 0, 1, 1], [], []>} : vector<8x64xf32>, vector<64x192xf32>, vector<8x192xf32> -> vector<8x192xf32>
    %338 = vector.extract_strided_slice %333 {offsets = [0, 0], sizes = [8, 64], strides = [1, 1]} : vector<8x192xf32> to vector<8x64xf32>
    %339 = vector.extract_strided_slice %337 {offsets = [0, 0], sizes = [8, 64], strides = [1, 1]} : vector<8x192xf32> to vector<8x64xf32>
    %340 = arith.addf %338, %339 : vector<8x64xf32>
    %341 = arith.negf %340 : vector<8x64xf32>
    %342 = math.exp %341 : vector<8x64xf32>
    %cst_111 = arith.constant 1.000000e+00 : f32
    %343 = vector.broadcast %cst_111 : f32 to vector<8x64xf32>
    %344 = arith.addf %343, %342 : vector<8x64xf32>
    %345 = arith.divf %343, %344 : vector<8x64xf32>
    %346 = vector.extract_strided_slice %333 {offsets = [0, 64], sizes = [8, 64], strides = [1, 1]} : vector<8x192xf32> to vector<8x64xf32>
    %347 = vector.extract_strided_slice %337 {offsets = [0, 64], sizes = [8, 64], strides = [1, 1]} : vector<8x192xf32> to vector<8x64xf32>
    %348 = arith.addf %346, %347 : vector<8x64xf32>
    %349 = arith.negf %348 : vector<8x64xf32>
    %350 = math.exp %349 : vector<8x64xf32>
    %cst_112 = arith.constant 1.000000e+00 : f32
    %351 = vector.broadcast %cst_112 : f32 to vector<8x64xf32>
    %352 = arith.addf %351, %350 : vector<8x64xf32>
    %353 = arith.divf %351, %352 : vector<8x64xf32>
    %354 = vector.extract_strided_slice %333 {offsets = [0, 128], sizes = [8, 64], strides = [1, 1]} : vector<8x192xf32> to vector<8x64xf32>
    %355 = vector.extract_strided_slice %337 {offsets = [0, 128], sizes = [8, 64], strides = [1, 1]} : vector<8x192xf32> to vector<8x64xf32>
    %356 = vector.broadcast %47 : vector<1x64xf32> to vector<8x64xf32>
    %357 = arith.addf %355, %356 : vector<8x64xf32>
    %358 = arith.mulf %345, %357 : vector<8x64xf32>
    %359 = arith.addf %354, %358 : vector<8x64xf32>
    %360 = math.tanh %359 : vector<8x64xf32>
    %361 = arith.subf %313, %360 : vector<8x64xf32>
    %362 = arith.mulf %353, %361 : vector<8x64xf32>
    %363 = arith.addf %360, %362 : vector<8x64xf32>
    %364 = arith.mulf %336, %363 : vector<8x64xf32>
    %cst_113 = arith.constant 1.000000e+00 : f32
    %365 = vector.broadcast %cst_113 : f32 to vector<8x64xf32>
    %366 = arith.subf %365, %336 : vector<8x64xf32>
    %367 = arith.mulf %366, %313 : vector<8x64xf32>
    %368 = arith.addf %364, %367 : vector<8x64xf32>
    %369 = vector.extract_strided_slice %364 {offsets = [0, 0], sizes = [8, 32], strides = [1, 1]} : vector<8x64xf32> to vector<8x32xf32>
    %370 = arith.index_cast %c5_i32 : i32 to index
    %c0_114 = arith.constant 0 : index
    %c0_115 = arith.constant 0 : index
    %371 = vector.load %arg15[%370, %c0_114, %c0_115] : memref<8x8x64xf32, #tpu.memory_space<vmem>>, vector<1x8x32xf32>
    %372 = vector.shape_cast %371 : vector<1x8x32xf32> to vector<8x32xf32>
    %373 = vector.shape_cast %369 : vector<8x32xf32> to vector<1x8x32xf32>
    tpu.vector_store %arg15[%370, %c0_114, %c0_115], %373 {strides = array<i32>} : memref<8x8x64xf32, #tpu.memory_space<vmem>>, vector<1x8x32xf32>,
    %374 = vector.extract_strided_slice %364 {offsets = [0, 32], sizes = [8, 32], strides = [1, 1]} : vector<8x64xf32> to vector<8x32xf32>
    %375 = arith.index_cast %324 : i32 to index
    %c0_116 = arith.constant 0 : index
    %c32_117 = arith.constant 32 : index
    %376 = vector.load %arg15[%375, %c0_116, %c32_117] : memref<8x8x64xf32, #tpu.memory_space<vmem>>, vector<1x8x32xf32>
    %377 = vector.shape_cast %376 : vector<1x8x32xf32> to vector<8x32xf32>
    %378 = vector.shape_cast %374 : vector<8x32xf32> to vector<1x8x32xf32>
    tpu.vector_store %arg15[%375, %c0_116, %c32_117], %378 {strides = array<i32>} : memref<8x8x64xf32, #tpu.memory_space<vmem>>, vector<1x8x32xf32>,
    %c6_i32 = arith.constant 6 : i32
    %c7_i32_118 = arith.constant 7 : i32
    %379 = arith.subi %c7_i32_118, %c6_i32 : i32
    %380 = arith.index_cast %c6_i32 : i32 to index
    %c0_119 = arith.constant 0 : index
    %c0_120 = arith.constant 0 : index
    %381 = vector.load %arg13[%380, %c0_119, %c0_120] : memref<8x8x192xf32, #tpu.memory_space<vmem>>, vector<1x8x192xf32>
    %382 = vector.shape_cast %381 : vector<1x8x192xf32> to vector<8x192xf32>
    %383 = arith.index_cast %379 : i32 to index
    %c0_121 = arith.constant 0 : index
    %c0_122 = arith.constant 0 : index
    %384 = vector.load %arg13[%383, %c0_121, %c0_122] : memref<8x8x192xf32, #tpu.memory_space<vmem>>, vector<1x8x192xf32>
    %385 = vector.shape_cast %384 : vector<1x8x192xf32> to vector<8x192xf32>
    %386 = vector.shape_cast %32 : vector<1x192xi1> to vector<1x192xi1>
    %387 = vector.broadcast %386 : vector<1x192xi1> to vector<8x192xi1>
    %388 = arith.select %387, %382, %385 : vector<8x192xi1>, vector<8x192xf32>
    %389 = arith.index_cast %c6_i32 : i32 to index
    %c0_123 = arith.constant 0 : index
    %c0_124 = arith.constant 0 : index
    %390 = vector.load %arg14[%389, %c0_123, %c0_124] : memref<8x8x64xf32, #tpu.memory_space<vmem>>, vector<1x8x64xf32>
    %391 = vector.shape_cast %390 : vector<1x8x64xf32> to vector<8x64xf32>
    %cst_125 = arith.constant dense<0.000000e+00> : vector<8x192xf32>
    %392 = tpu.matmul %368, %45, %cst_125 {dimension_numbers = #tpu.dot_dimension_numbers<[1], [0], [0], [1], [0, 0, 1, 1], [], []>} : vector<8x64xf32>, vector<64x192xf32>, vector<8x192xf32> -> vector<8x192xf32>
    %393 = vector.extract_strided_slice %388 {offsets = [0, 0], sizes = [8, 64], strides = [1, 1]} : vector<8x192xf32> to vector<8x64xf32>
    %394 = vector.extract_strided_slice %392 {offsets = [0, 0], sizes = [8, 64], strides = [1, 1]} : vector<8x192xf32> to vector<8x64xf32>
    %395 = arith.addf %393, %394 : vector<8x64xf32>
    %396 = arith.negf %395 : vector<8x64xf32>
    %397 = math.exp %396 : vector<8x64xf32>
    %cst_126 = arith.constant 1.000000e+00 : f32
    %398 = vector.broadcast %cst_126 : f32 to vector<8x64xf32>
    %399 = arith.addf %398, %397 : vector<8x64xf32>
    %400 = arith.divf %398, %399 : vector<8x64xf32>
    %401 = vector.extract_strided_slice %388 {offsets = [0, 64], sizes = [8, 64], strides = [1, 1]} : vector<8x192xf32> to vector<8x64xf32>
    %402 = vector.extract_strided_slice %392 {offsets = [0, 64], sizes = [8, 64], strides = [1, 1]} : vector<8x192xf32> to vector<8x64xf32>
    %403 = arith.addf %401, %402 : vector<8x64xf32>
    %404 = arith.negf %403 : vector<8x64xf32>
    %405 = math.exp %404 : vector<8x64xf32>
    %cst_127 = arith.constant 1.000000e+00 : f32
    %406 = vector.broadcast %cst_127 : f32 to vector<8x64xf32>
    %407 = arith.addf %406, %405 : vector<8x64xf32>
    %408 = arith.divf %406, %407 : vector<8x64xf32>
    %409 = vector.extract_strided_slice %388 {offsets = [0, 128], sizes = [8, 64], strides = [1, 1]} : vector<8x192xf32> to vector<8x64xf32>
    %410 = vector.extract_strided_slice %392 {offsets = [0, 128], sizes = [8, 64], strides = [1, 1]} : vector<8x192xf32> to vector<8x64xf32>
    %411 = vector.broadcast %47 : vector<1x64xf32> to vector<8x64xf32>
    %412 = arith.addf %410, %411 : vector<8x64xf32>
    %413 = arith.mulf %400, %412 : vector<8x64xf32>
    %414 = arith.addf %409, %413 : vector<8x64xf32>
    %415 = math.tanh %414 : vector<8x64xf32>
    %416 = arith.subf %368, %415 : vector<8x64xf32>
    %417 = arith.mulf %408, %416 : vector<8x64xf32>
    %418 = arith.addf %415, %417 : vector<8x64xf32>
    %419 = arith.mulf %391, %418 : vector<8x64xf32>
    %cst_128 = arith.constant 1.000000e+00 : f32
    %420 = vector.broadcast %cst_128 : f32 to vector<8x64xf32>
    %421 = arith.subf %420, %391 : vector<8x64xf32>
    %422 = arith.mulf %421, %368 : vector<8x64xf32>
    %423 = arith.addf %419, %422 : vector<8x64xf32>
    %424 = vector.extract_strided_slice %419 {offsets = [0, 0], sizes = [8, 32], strides = [1, 1]} : vector<8x64xf32> to vector<8x32xf32>
    %425 = arith.index_cast %c6_i32 : i32 to index
    %c0_129 = arith.constant 0 : index
    %c0_130 = arith.constant 0 : index
    %426 = vector.load %arg15[%425, %c0_129, %c0_130] : memref<8x8x64xf32, #tpu.memory_space<vmem>>, vector<1x8x32xf32>
    %427 = vector.shape_cast %426 : vector<1x8x32xf32> to vector<8x32xf32>
    %428 = vector.shape_cast %424 : vector<8x32xf32> to vector<1x8x32xf32>
    tpu.vector_store %arg15[%425, %c0_129, %c0_130], %428 {strides = array<i32>} : memref<8x8x64xf32, #tpu.memory_space<vmem>>, vector<1x8x32xf32>,
    %429 = vector.extract_strided_slice %419 {offsets = [0, 32], sizes = [8, 32], strides = [1, 1]} : vector<8x64xf32> to vector<8x32xf32>
    %430 = arith.index_cast %379 : i32 to index
    %c0_131 = arith.constant 0 : index
    %c32_132 = arith.constant 32 : index
    %431 = vector.load %arg15[%430, %c0_131, %c32_132] : memref<8x8x64xf32, #tpu.memory_space<vmem>>, vector<1x8x32xf32>
    %432 = vector.shape_cast %431 : vector<1x8x32xf32> to vector<8x32xf32>
    %433 = vector.shape_cast %429 : vector<8x32xf32> to vector<1x8x32xf32>
    tpu.vector_store %arg15[%430, %c0_131, %c32_132], %433 {strides = array<i32>} : memref<8x8x64xf32, #tpu.memory_space<vmem>>, vector<1x8x32xf32>,
    %c7_i32_133 = arith.constant 7 : i32
    %c7_i32_134 = arith.constant 7 : i32
    %434 = arith.subi %c7_i32_134, %c7_i32_133 : i32
    %435 = arith.index_cast %c7_i32_133 : i32 to index
    %c0_135 = arith.constant 0 : index
    %c0_136 = arith.constant 0 : index
    %436 = vector.load %arg13[%435, %c0_135, %c0_136] : memref<8x8x192xf32, #tpu.memory_space<vmem>>, vector<1x8x192xf32>
    %437 = vector.shape_cast %436 : vector<1x8x192xf32> to vector<8x192xf32>
    %438 = arith.index_cast %434 : i32 to index
    %c0_137 = arith.constant 0 : index
    %c0_138 = arith.constant 0 : index
    %439 = vector.load %arg13[%438, %c0_137, %c0_138] : memref<8x8x192xf32, #tpu.memory_space<vmem>>, vector<1x8x192xf32>
    %440 = vector.shape_cast %439 : vector<1x8x192xf32> to vector<8x192xf32>
    %441 = vector.shape_cast %32 : vector<1x192xi1> to vector<1x192xi1>
    %442 = vector.broadcast %441 : vector<1x192xi1> to vector<8x192xi1>
    %443 = arith.select %442, %437, %440 : vector<8x192xi1>, vector<8x192xf32>
    %444 = arith.index_cast %c7_i32_133 : i32 to index
    %c0_139 = arith.constant 0 : index
    %c0_140 = arith.constant 0 : index
    %445 = vector.load %arg14[%444, %c0_139, %c0_140] : memref<8x8x64xf32, #tpu.memory_space<vmem>>, vector<1x8x64xf32>
    %446 = vector.shape_cast %445 : vector<1x8x64xf32> to vector<8x64xf32>
    %cst_141 = arith.constant dense<0.000000e+00> : vector<8x192xf32>
    %447 = tpu.matmul %423, %45, %cst_141 {dimension_numbers = #tpu.dot_dimension_numbers<[1], [0], [0], [1], [0, 0, 1, 1], [], []>} : vector<8x64xf32>, vector<64x192xf32>, vector<8x192xf32> -> vector<8x192xf32>
    %448 = vector.extract_strided_slice %443 {offsets = [0, 0], sizes = [8, 64], strides = [1, 1]} : vector<8x192xf32> to vector<8x64xf32>
    %449 = vector.extract_strided_slice %447 {offsets = [0, 0], sizes = [8, 64], strides = [1, 1]} : vector<8x192xf32> to vector<8x64xf32>
    %450 = arith.addf %448, %449 : vector<8x64xf32>
    %451 = arith.negf %450 : vector<8x64xf32>
    %452 = math.exp %451 : vector<8x64xf32>
    %cst_142 = arith.constant 1.000000e+00 : f32
    %453 = vector.broadcast %cst_142 : f32 to vector<8x64xf32>
    %454 = arith.addf %453, %452 : vector<8x64xf32>
    %455 = arith.divf %453, %454 : vector<8x64xf32>
    %456 = vector.extract_strided_slice %443 {offsets = [0, 64], sizes = [8, 64], strides = [1, 1]} : vector<8x192xf32> to vector<8x64xf32>
    %457 = vector.extract_strided_slice %447 {offsets = [0, 64], sizes = [8, 64], strides = [1, 1]} : vector<8x192xf32> to vector<8x64xf32>
    %458 = arith.addf %456, %457 : vector<8x64xf32>
    %459 = arith.negf %458 : vector<8x64xf32>
    %460 = math.exp %459 : vector<8x64xf32>
    %cst_143 = arith.constant 1.000000e+00 : f32
    %461 = vector.broadcast %cst_143 : f32 to vector<8x64xf32>
    %462 = arith.addf %461, %460 : vector<8x64xf32>
    %463 = arith.divf %461, %462 : vector<8x64xf32>
    %464 = vector.extract_strided_slice %443 {offsets = [0, 128], sizes = [8, 64], strides = [1, 1]} : vector<8x192xf32> to vector<8x64xf32>
    %465 = vector.extract_strided_slice %447 {offsets = [0, 128], sizes = [8, 64], strides = [1, 1]} : vector<8x192xf32> to vector<8x64xf32>
    %466 = vector.broadcast %47 : vector<1x64xf32> to vector<8x64xf32>
    %467 = arith.addf %465, %466 : vector<8x64xf32>
    %468 = arith.mulf %455, %467 : vector<8x64xf32>
    %469 = arith.addf %464, %468 : vector<8x64xf32>
    %470 = math.tanh %469 : vector<8x64xf32>
    %471 = arith.subf %423, %470 : vector<8x64xf32>
    %472 = arith.mulf %463, %471 : vector<8x64xf32>
    %473 = arith.addf %470, %472 : vector<8x64xf32>
    %474 = arith.mulf %446, %473 : vector<8x64xf32>
    %cst_144 = arith.constant 1.000000e+00 : f32
    %475 = vector.broadcast %cst_144 : f32 to vector<8x64xf32>
    %476 = arith.subf %475, %446 : vector<8x64xf32>
    %477 = arith.mulf %476, %423 : vector<8x64xf32>
    %478 = arith.addf %474, %477 : vector<8x64xf32>
    %479 = vector.extract_strided_slice %474 {offsets = [0, 0], sizes = [8, 32], strides = [1, 1]} : vector<8x64xf32> to vector<8x32xf32>
    %480 = arith.index_cast %c7_i32_133 : i32 to index
    %c0_145 = arith.constant 0 : index
    %c0_146 = arith.constant 0 : index
    %481 = vector.load %arg15[%480, %c0_145, %c0_146] : memref<8x8x64xf32, #tpu.memory_space<vmem>>, vector<1x8x32xf32>
    %482 = vector.shape_cast %481 : vector<1x8x32xf32> to vector<8x32xf32>
    %483 = vector.shape_cast %479 : vector<8x32xf32> to vector<1x8x32xf32>
    tpu.vector_store %arg15[%480, %c0_145, %c0_146], %483 {strides = array<i32>} : memref<8x8x64xf32, #tpu.memory_space<vmem>>, vector<1x8x32xf32>,
    %484 = vector.extract_strided_slice %474 {offsets = [0, 32], sizes = [8, 32], strides = [1, 1]} : vector<8x64xf32> to vector<8x32xf32>
    %485 = arith.index_cast %434 : i32 to index
    %c0_147 = arith.constant 0 : index
    %c32_148 = arith.constant 32 : index
    %486 = vector.load %arg15[%485, %c0_147, %c32_148] : memref<8x8x64xf32, #tpu.memory_space<vmem>>, vector<1x8x32xf32>
    %487 = vector.shape_cast %486 : vector<1x8x32xf32> to vector<8x32xf32>
    %488 = vector.shape_cast %484 : vector<8x32xf32> to vector<1x8x32xf32>
    tpu.vector_store %arg15[%485, %c0_147, %c32_148], %488 {strides = array<i32>} : memref<8x8x64xf32, #tpu.memory_space<vmem>>, vector<1x8x32xf32>,
    %c8_i32 = arith.constant 8 : i32
    %c0_149 = arith.constant 0 : index
    %c0_150 = arith.constant 0 : index
    %c0_151 = arith.constant 0 : index
    %489 = vector.load %arg15[%c0_149, %c0_150, %c0_151] : memref<8x8x64xf32, #tpu.memory_space<vmem>>, vector<8x8x64xf32>
    %490 = vector.shape_cast %489 : vector<8x8x64xf32> to vector<64x64xf32>
    %c1 = arith.constant 1 : index
    %c0_152 = arith.constant 0 : index
    %c0_153 = arith.constant 0 : index
    %491 = vector.load %arg3[%c1, %c0_152, %c0_153] : memref<3x64x192xf32, #tpu.memory_space<vmem>>, vector<1x64x192xf32>
    %492 = vector.shape_cast %491 : vector<1x64x192xf32> to vector<64x192xf32>
    %cst_154 = arith.constant dense<0.000000e+00> : vector<64x192xf32>
    %493 = tpu.matmul %490, %492, %cst_154 {dimension_numbers = #tpu.dot_dimension_numbers<[1], [0], [0], [1], [0, 0, 1, 1], [], []>} : vector<64x64xf32>, vector<64x192xf32>, vector<64x192xf32> -> vector<64x192xf32>
    %c1_155 = arith.constant 1 : index
    %c0_156 = arith.constant 0 : index
    %c0_157 = arith.constant 0 : index
    %494 = vector.load %arg4[%c1_155, %c0_156, %c0_157] : memref<3x1x192xf32, #tpu.memory_space<vmem>>, vector<1x1x192xf32>
    %495 = vector.shape_cast %494 : vector<1x1x192xf32> to vector<1x192xf32>
    %496 = vector.broadcast %495 : vector<1x192xf32> to vector<64x192xf32>
    %497 = arith.addf %493, %496 : vector<64x192xf32>
    %498 = vector.shape_cast %497 : vector<64x192xf32> to vector<8x8x192xf32>
    %c0_158 = arith.constant 0 : index
    %c0_159 = arith.constant 0 : index
    %c0_160 = arith.constant 0 : index
    %499 = vector.load %arg13[%c0_158, %c0_159, %c0_160] : memref<8x8x192xf32, #tpu.memory_space<vmem>>, vector<8x8x192xf32>
    tpu.vector_store %arg13[%c0_158, %c0_159, %c0_160], %498 {strides = array<i32>} : memref<8x8x192xf32, #tpu.memory_space<vmem>>, vector<8x8x192xf32>,
    %c1_161 = arith.constant 1 : index
    %c0_162 = arith.constant 0 : index
    %c0_163 = arith.constant 0 : index
    %500 = vector.load %arg5[%c1_161, %c0_162, %c0_163] : memref<3x64x192xf32, #tpu.memory_space<vmem>>, vector<1x64x192xf32>
    %501 = vector.shape_cast %500 : vector<1x64x192xf32> to vector<64x192xf32>
    %c1_164 = arith.constant 1 : index
    %c0_165 = arith.constant 0 : index
    %c0_166 = arith.constant 0 : index
    %502 = vector.load %arg6[%c1_164, %c0_165, %c0_166] : memref<3x1x64xf32, #tpu.memory_space<vmem>>, vector<1x1x64xf32>
    %503 = vector.shape_cast %502 : vector<1x1x64xf32> to vector<1x64xf32>
    %cst_167 = arith.constant 0.000000e+00 : f32
    %504 = vector.broadcast %cst_167 : f32 to vector<8x64xf32>
    %c0_i32_168 = arith.constant 0 : i32
    %c7_i32_169 = arith.constant 7 : i32
    %505 = arith.subi %c7_i32_169, %c0_i32_168 : i32
    %506 = arith.index_cast %c0_i32_168 : i32 to index
    %c0_170 = arith.constant 0 : index
    %c0_171 = arith.constant 0 : index
    %507 = vector.load %arg13[%506, %c0_170, %c0_171] : memref<8x8x192xf32, #tpu.memory_space<vmem>>, vector<1x8x192xf32>
    %508 = vector.shape_cast %507 : vector<1x8x192xf32> to vector<8x192xf32>
    %509 = arith.index_cast %505 : i32 to index
    %c0_172 = arith.constant 0 : index
    %c0_173 = arith.constant 0 : index
    %510 = vector.load %arg13[%509, %c0_172, %c0_173] : memref<8x8x192xf32, #tpu.memory_space<vmem>>, vector<1x8x192xf32>
    %511 = vector.shape_cast %510 : vector<1x8x192xf32> to vector<8x192xf32>
    %512 = vector.shape_cast %32 : vector<1x192xi1> to vector<1x192xi1>
    %513 = vector.broadcast %512 : vector<1x192xi1> to vector<8x192xi1>
    %514 = arith.select %513, %508, %511 : vector<8x192xi1>, vector<8x192xf32>
    %515 = arith.index_cast %c0_i32_168 : i32 to index
    %c0_174 = arith.constant 0 : index
    %c0_175 = arith.constant 0 : index
    %516 = vector.load %arg14[%515, %c0_174, %c0_175] : memref<8x8x64xf32, #tpu.memory_space<vmem>>, vector<1x8x64xf32>
    %517 = vector.shape_cast %516 : vector<1x8x64xf32> to vector<8x64xf32>
    %cst_176 = arith.constant dense<0.000000e+00> : vector<8x192xf32>
    %518 = tpu.matmul %504, %501, %cst_176 {dimension_numbers = #tpu.dot_dimension_numbers<[1], [0], [0], [1], [0, 0, 1, 1], [], []>} : vector<8x64xf32>, vector<64x192xf32>, vector<8x192xf32> -> vector<8x192xf32>
    %519 = vector.extract_strided_slice %514 {offsets = [0, 0], sizes = [8, 64], strides = [1, 1]} : vector<8x192xf32> to vector<8x64xf32>
    %520 = vector.extract_strided_slice %518 {offsets = [0, 0], sizes = [8, 64], strides = [1, 1]} : vector<8x192xf32> to vector<8x64xf32>
    %521 = arith.addf %519, %520 : vector<8x64xf32>
    %522 = arith.negf %521 : vector<8x64xf32>
    %523 = math.exp %522 : vector<8x64xf32>
    %cst_177 = arith.constant 1.000000e+00 : f32
    %524 = vector.broadcast %cst_177 : f32 to vector<8x64xf32>
    %525 = arith.addf %524, %523 : vector<8x64xf32>
    %526 = arith.divf %524, %525 : vector<8x64xf32>
    %527 = vector.extract_strided_slice %514 {offsets = [0, 64], sizes = [8, 64], strides = [1, 1]} : vector<8x192xf32> to vector<8x64xf32>
    %528 = vector.extract_strided_slice %518 {offsets = [0, 64], sizes = [8, 64], strides = [1, 1]} : vector<8x192xf32> to vector<8x64xf32>
    %529 = arith.addf %527, %528 : vector<8x64xf32>
    %530 = arith.negf %529 : vector<8x64xf32>
    %531 = math.exp %530 : vector<8x64xf32>
    %cst_178 = arith.constant 1.000000e+00 : f32
    %532 = vector.broadcast %cst_178 : f32 to vector<8x64xf32>
    %533 = arith.addf %532, %531 : vector<8x64xf32>
    %534 = arith.divf %532, %533 : vector<8x64xf32>
    %535 = vector.extract_strided_slice %514 {offsets = [0, 128], sizes = [8, 64], strides = [1, 1]} : vector<8x192xf32> to vector<8x64xf32>
    %536 = vector.extract_strided_slice %518 {offsets = [0, 128], sizes = [8, 64], strides = [1, 1]} : vector<8x192xf32> to vector<8x64xf32>
    %537 = vector.broadcast %503 : vector<1x64xf32> to vector<8x64xf32>
    %538 = arith.addf %536, %537 : vector<8x64xf32>
    %539 = arith.mulf %526, %538 : vector<8x64xf32>
    %540 = arith.addf %535, %539 : vector<8x64xf32>
    %541 = math.tanh %540 : vector<8x64xf32>
    %542 = arith.subf %504, %541 : vector<8x64xf32>
    %543 = arith.mulf %534, %542 : vector<8x64xf32>
    %544 = arith.addf %541, %543 : vector<8x64xf32>
    %545 = arith.mulf %517, %544 : vector<8x64xf32>
    %cst_179 = arith.constant 1.000000e+00 : f32
    %546 = vector.broadcast %cst_179 : f32 to vector<8x64xf32>
    %547 = arith.subf %546, %517 : vector<8x64xf32>
    %548 = arith.mulf %547, %504 : vector<8x64xf32>
    %549 = arith.addf %545, %548 : vector<8x64xf32>
    %550 = vector.extract_strided_slice %545 {offsets = [0, 0], sizes = [8, 32], strides = [1, 1]} : vector<8x64xf32> to vector<8x32xf32>
    %551 = arith.index_cast %c0_i32_168 : i32 to index
    %c0_180 = arith.constant 0 : index
    %c0_181 = arith.constant 0 : index
    %552 = vector.load %arg16[%551, %c0_180, %c0_181] : memref<8x8x64xf32, #tpu.memory_space<vmem>>, vector<1x8x32xf32>
    %553 = vector.shape_cast %552 : vector<1x8x32xf32> to vector<8x32xf32>
    %554 = vector.shape_cast %550 : vector<8x32xf32> to vector<1x8x32xf32>
    tpu.vector_store %arg16[%551, %c0_180, %c0_181], %554 {strides = array<i32>} : memref<8x8x64xf32, #tpu.memory_space<vmem>>, vector<1x8x32xf32>,
    %555 = vector.extract_strided_slice %545 {offsets = [0, 32], sizes = [8, 32], strides = [1, 1]} : vector<8x64xf32> to vector<8x32xf32>
    %556 = arith.index_cast %505 : i32 to index
    %c0_182 = arith.constant 0 : index
    %c32_183 = arith.constant 32 : index
    %557 = vector.load %arg16[%556, %c0_182, %c32_183] : memref<8x8x64xf32, #tpu.memory_space<vmem>>, vector<1x8x32xf32>
    %558 = vector.shape_cast %557 : vector<1x8x32xf32> to vector<8x32xf32>
    %559 = vector.shape_cast %555 : vector<8x32xf32> to vector<1x8x32xf32>
    tpu.vector_store %arg16[%556, %c0_182, %c32_183], %559 {strides = array<i32>} : memref<8x8x64xf32, #tpu.memory_space<vmem>>, vector<1x8x32xf32>,
    %c1_i32_184 = arith.constant 1 : i32
    %c7_i32_185 = arith.constant 7 : i32
    %560 = arith.subi %c7_i32_185, %c1_i32_184 : i32
    %561 = arith.index_cast %c1_i32_184 : i32 to index
    %c0_186 = arith.constant 0 : index
    %c0_187 = arith.constant 0 : index
    %562 = vector.load %arg13[%561, %c0_186, %c0_187] : memref<8x8x192xf32, #tpu.memory_space<vmem>>, vector<1x8x192xf32>
    %563 = vector.shape_cast %562 : vector<1x8x192xf32> to vector<8x192xf32>
    %564 = arith.index_cast %560 : i32 to index
    %c0_188 = arith.constant 0 : index
    %c0_189 = arith.constant 0 : index
    %565 = vector.load %arg13[%564, %c0_188, %c0_189] : memref<8x8x192xf32, #tpu.memory_space<vmem>>, vector<1x8x192xf32>
    %566 = vector.shape_cast %565 : vector<1x8x192xf32> to vector<8x192xf32>
    %567 = vector.shape_cast %32 : vector<1x192xi1> to vector<1x192xi1>
    %568 = vector.broadcast %567 : vector<1x192xi1> to vector<8x192xi1>
    %569 = arith.select %568, %563, %566 : vector<8x192xi1>, vector<8x192xf32>
    %570 = arith.index_cast %c1_i32_184 : i32 to index
    %c0_190 = arith.constant 0 : index
    %c0_191 = arith.constant 0 : index
    %571 = vector.load %arg14[%570, %c0_190, %c0_191] : memref<8x8x64xf32, #tpu.memory_space<vmem>>, vector<1x8x64xf32>
    %572 = vector.shape_cast %571 : vector<1x8x64xf32> to vector<8x64xf32>
    %cst_192 = arith.constant dense<0.000000e+00> : vector<8x192xf32>
    %573 = tpu.matmul %549, %501, %cst_192 {dimension_numbers = #tpu.dot_dimension_numbers<[1], [0], [0], [1], [0, 0, 1, 1], [], []>} : vector<8x64xf32>, vector<64x192xf32>, vector<8x192xf32> -> vector<8x192xf32>
    %574 = vector.extract_strided_slice %569 {offsets = [0, 0], sizes = [8, 64], strides = [1, 1]} : vector<8x192xf32> to vector<8x64xf32>
    %575 = vector.extract_strided_slice %573 {offsets = [0, 0], sizes = [8, 64], strides = [1, 1]} : vector<8x192xf32> to vector<8x64xf32>
    %576 = arith.addf %574, %575 : vector<8x64xf32>
    %577 = arith.negf %576 : vector<8x64xf32>
    %578 = math.exp %577 : vector<8x64xf32>
    %cst_193 = arith.constant 1.000000e+00 : f32
    %579 = vector.broadcast %cst_193 : f32 to vector<8x64xf32>
    %580 = arith.addf %579, %578 : vector<8x64xf32>
    %581 = arith.divf %579, %580 : vector<8x64xf32>
    %582 = vector.extract_strided_slice %569 {offsets = [0, 64], sizes = [8, 64], strides = [1, 1]} : vector<8x192xf32> to vector<8x64xf32>
    %583 = vector.extract_strided_slice %573 {offsets = [0, 64], sizes = [8, 64], strides = [1, 1]} : vector<8x192xf32> to vector<8x64xf32>
    %584 = arith.addf %582, %583 : vector<8x64xf32>
    %585 = arith.negf %584 : vector<8x64xf32>
    %586 = math.exp %585 : vector<8x64xf32>
    %cst_194 = arith.constant 1.000000e+00 : f32
    %587 = vector.broadcast %cst_194 : f32 to vector<8x64xf32>
    %588 = arith.addf %587, %586 : vector<8x64xf32>
    %589 = arith.divf %587, %588 : vector<8x64xf32>
    %590 = vector.extract_strided_slice %569 {offsets = [0, 128], sizes = [8, 64], strides = [1, 1]} : vector<8x192xf32> to vector<8x64xf32>
    %591 = vector.extract_strided_slice %573 {offsets = [0, 128], sizes = [8, 64], strides = [1, 1]} : vector<8x192xf32> to vector<8x64xf32>
    %592 = vector.broadcast %503 : vector<1x64xf32> to vector<8x64xf32>
    %593 = arith.addf %591, %592 : vector<8x64xf32>
    %594 = arith.mulf %581, %593 : vector<8x64xf32>
    %595 = arith.addf %590, %594 : vector<8x64xf32>
    %596 = math.tanh %595 : vector<8x64xf32>
    %597 = arith.subf %549, %596 : vector<8x64xf32>
    %598 = arith.mulf %589, %597 : vector<8x64xf32>
    %599 = arith.addf %596, %598 : vector<8x64xf32>
    %600 = arith.mulf %572, %599 : vector<8x64xf32>
    %cst_195 = arith.constant 1.000000e+00 : f32
    %601 = vector.broadcast %cst_195 : f32 to vector<8x64xf32>
    %602 = arith.subf %601, %572 : vector<8x64xf32>
    %603 = arith.mulf %602, %549 : vector<8x64xf32>
    %604 = arith.addf %600, %603 : vector<8x64xf32>
    %605 = vector.extract_strided_slice %600 {offsets = [0, 0], sizes = [8, 32], strides = [1, 1]} : vector<8x64xf32> to vector<8x32xf32>
    %606 = arith.index_cast %c1_i32_184 : i32 to index
    %c0_196 = arith.constant 0 : index
    %c0_197 = arith.constant 0 : index
    %607 = vector.load %arg16[%606, %c0_196, %c0_197] : memref<8x8x64xf32, #tpu.memory_space<vmem>>, vector<1x8x32xf32>
    %608 = vector.shape_cast %607 : vector<1x8x32xf32> to vector<8x32xf32>
    %609 = vector.shape_cast %605 : vector<8x32xf32> to vector<1x8x32xf32>
    tpu.vector_store %arg16[%606, %c0_196, %c0_197], %609 {strides = array<i32>} : memref<8x8x64xf32, #tpu.memory_space<vmem>>, vector<1x8x32xf32>,
    %610 = vector.extract_strided_slice %600 {offsets = [0, 32], sizes = [8, 32], strides = [1, 1]} : vector<8x64xf32> to vector<8x32xf32>
    %611 = arith.index_cast %560 : i32 to index
    %c0_198 = arith.constant 0 : index
    %c32_199 = arith.constant 32 : index
    %612 = vector.load %arg16[%611, %c0_198, %c32_199] : memref<8x8x64xf32, #tpu.memory_space<vmem>>, vector<1x8x32xf32>
    %613 = vector.shape_cast %612 : vector<1x8x32xf32> to vector<8x32xf32>
    %614 = vector.shape_cast %610 : vector<8x32xf32> to vector<1x8x32xf32>
    tpu.vector_store %arg16[%611, %c0_198, %c32_199], %614 {strides = array<i32>} : memref<8x8x64xf32, #tpu.memory_space<vmem>>, vector<1x8x32xf32>,
    %c2_i32_200 = arith.constant 2 : i32
    %c7_i32_201 = arith.constant 7 : i32
    %615 = arith.subi %c7_i32_201, %c2_i32_200 : i32
    %616 = arith.index_cast %c2_i32_200 : i32 to index
    %c0_202 = arith.constant 0 : index
    %c0_203 = arith.constant 0 : index
    %617 = vector.load %arg13[%616, %c0_202, %c0_203] : memref<8x8x192xf32, #tpu.memory_space<vmem>>, vector<1x8x192xf32>
    %618 = vector.shape_cast %617 : vector<1x8x192xf32> to vector<8x192xf32>
    %619 = arith.index_cast %615 : i32 to index
    %c0_204 = arith.constant 0 : index
    %c0_205 = arith.constant 0 : index
    %620 = vector.load %arg13[%619, %c0_204, %c0_205] : memref<8x8x192xf32, #tpu.memory_space<vmem>>, vector<1x8x192xf32>
    %621 = vector.shape_cast %620 : vector<1x8x192xf32> to vector<8x192xf32>
    %622 = vector.shape_cast %32 : vector<1x192xi1> to vector<1x192xi1>
    %623 = vector.broadcast %622 : vector<1x192xi1> to vector<8x192xi1>
    %624 = arith.select %623, %618, %621 : vector<8x192xi1>, vector<8x192xf32>
    %625 = arith.index_cast %c2_i32_200 : i32 to index
    %c0_206 = arith.constant 0 : index
    %c0_207 = arith.constant 0 : index
    %626 = vector.load %arg14[%625, %c0_206, %c0_207] : memref<8x8x64xf32, #tpu.memory_space<vmem>>, vector<1x8x64xf32>
    %627 = vector.shape_cast %626 : vector<1x8x64xf32> to vector<8x64xf32>
    %cst_208 = arith.constant dense<0.000000e+00> : vector<8x192xf32>
    %628 = tpu.matmul %604, %501, %cst_208 {dimension_numbers = #tpu.dot_dimension_numbers<[1], [0], [0], [1], [0, 0, 1, 1], [], []>} : vector<8x64xf32>, vector<64x192xf32>, vector<8x192xf32> -> vector<8x192xf32>
    %629 = vector.extract_strided_slice %624 {offsets = [0, 0], sizes = [8, 64], strides = [1, 1]} : vector<8x192xf32> to vector<8x64xf32>
    %630 = vector.extract_strided_slice %628 {offsets = [0, 0], sizes = [8, 64], strides = [1, 1]} : vector<8x192xf32> to vector<8x64xf32>
    %631 = arith.addf %629, %630 : vector<8x64xf32>
    %632 = arith.negf %631 : vector<8x64xf32>
    %633 = math.exp %632 : vector<8x64xf32>
    %cst_209 = arith.constant 1.000000e+00 : f32
    %634 = vector.broadcast %cst_209 : f32 to vector<8x64xf32>
    %635 = arith.addf %634, %633 : vector<8x64xf32>
    %636 = arith.divf %634, %635 : vector<8x64xf32>
    %637 = vector.extract_strided_slice %624 {offsets = [0, 64], sizes = [8, 64], strides = [1, 1]} : vector<8x192xf32> to vector<8x64xf32>
    %638 = vector.extract_strided_slice %628 {offsets = [0, 64], sizes = [8, 64], strides = [1, 1]} : vector<8x192xf32> to vector<8x64xf32>
    %639 = arith.addf %637, %638 : vector<8x64xf32>
    %640 = arith.negf %639 : vector<8x64xf32>
    %641 = math.exp %640 : vector<8x64xf32>
    %cst_210 = arith.constant 1.000000e+00 : f32
    %642 = vector.broadcast %cst_210 : f32 to vector<8x64xf32>
    %643 = arith.addf %642, %641 : vector<8x64xf32>
    %644 = arith.divf %642, %643 : vector<8x64xf32>
    %645 = vector.extract_strided_slice %624 {offsets = [0, 128], sizes = [8, 64], strides = [1, 1]} : vector<8x192xf32> to vector<8x64xf32>
    %646 = vector.extract_strided_slice %628 {offsets = [0, 128], sizes = [8, 64], strides = [1, 1]} : vector<8x192xf32> to vector<8x64xf32>
    %647 = vector.broadcast %503 : vector<1x64xf32> to vector<8x64xf32>
    %648 = arith.addf %646, %647 : vector<8x64xf32>
    %649 = arith.mulf %636, %648 : vector<8x64xf32>
    %650 = arith.addf %645, %649 : vector<8x64xf32>
    %651 = math.tanh %650 : vector<8x64xf32>
    %652 = arith.subf %604, %651 : vector<8x64xf32>
    %653 = arith.mulf %644, %652 : vector<8x64xf32>
    %654 = arith.addf %651, %653 : vector<8x64xf32>
    %655 = arith.mulf %627, %654 : vector<8x64xf32>
    %cst_211 = arith.constant 1.000000e+00 : f32
    %656 = vector.broadcast %cst_211 : f32 to vector<8x64xf32>
    %657 = arith.subf %656, %627 : vector<8x64xf32>
    %658 = arith.mulf %657, %604 : vector<8x64xf32>
    %659 = arith.addf %655, %658 : vector<8x64xf32>
    %660 = vector.extract_strided_slice %655 {offsets = [0, 0], sizes = [8, 32], strides = [1, 1]} : vector<8x64xf32> to vector<8x32xf32>
    %661 = arith.index_cast %c2_i32_200 : i32 to index
    %c0_212 = arith.constant 0 : index
    %c0_213 = arith.constant 0 : index
    %662 = vector.load %arg16[%661, %c0_212, %c0_213] : memref<8x8x64xf32, #tpu.memory_space<vmem>>, vector<1x8x32xf32>
    %663 = vector.shape_cast %662 : vector<1x8x32xf32> to vector<8x32xf32>
    %664 = vector.shape_cast %660 : vector<8x32xf32> to vector<1x8x32xf32>
    tpu.vector_store %arg16[%661, %c0_212, %c0_213], %664 {strides = array<i32>} : memref<8x8x64xf32, #tpu.memory_space<vmem>>, vector<1x8x32xf32>,
    %665 = vector.extract_strided_slice %655 {offsets = [0, 32], sizes = [8, 32], strides = [1, 1]} : vector<8x64xf32> to vector<8x32xf32>
    %666 = arith.index_cast %615 : i32 to index
    %c0_214 = arith.constant 0 : index
    %c32_215 = arith.constant 32 : index
    %667 = vector.load %arg16[%666, %c0_214, %c32_215] : memref<8x8x64xf32, #tpu.memory_space<vmem>>, vector<1x8x32xf32>
    %668 = vector.shape_cast %667 : vector<1x8x32xf32> to vector<8x32xf32>
    %669 = vector.shape_cast %665 : vector<8x32xf32> to vector<1x8x32xf32>
    tpu.vector_store %arg16[%666, %c0_214, %c32_215], %669 {strides = array<i32>} : memref<8x8x64xf32, #tpu.memory_space<vmem>>, vector<1x8x32xf32>,
    %c3_i32_216 = arith.constant 3 : i32
    %c7_i32_217 = arith.constant 7 : i32
    %670 = arith.subi %c7_i32_217, %c3_i32_216 : i32
    %671 = arith.index_cast %c3_i32_216 : i32 to index
    %c0_218 = arith.constant 0 : index
    %c0_219 = arith.constant 0 : index
    %672 = vector.load %arg13[%671, %c0_218, %c0_219] : memref<8x8x192xf32, #tpu.memory_space<vmem>>, vector<1x8x192xf32>
    %673 = vector.shape_cast %672 : vector<1x8x192xf32> to vector<8x192xf32>
    %674 = arith.index_cast %670 : i32 to index
    %c0_220 = arith.constant 0 : index
    %c0_221 = arith.constant 0 : index
    %675 = vector.load %arg13[%674, %c0_220, %c0_221] : memref<8x8x192xf32, #tpu.memory_space<vmem>>, vector<1x8x192xf32>
    %676 = vector.shape_cast %675 : vector<1x8x192xf32> to vector<8x192xf32>
    %677 = vector.shape_cast %32 : vector<1x192xi1> to vector<1x192xi1>
    %678 = vector.broadcast %677 : vector<1x192xi1> to vector<8x192xi1>
    %679 = arith.select %678, %673, %676 : vector<8x192xi1>, vector<8x192xf32>
    %680 = arith.index_cast %c3_i32_216 : i32 to index
    %c0_222 = arith.constant 0 : index
    %c0_223 = arith.constant 0 : index
    %681 = vector.load %arg14[%680, %c0_222, %c0_223] : memref<8x8x64xf32, #tpu.memory_space<vmem>>, vector<1x8x64xf32>
    %682 = vector.shape_cast %681 : vector<1x8x64xf32> to vector<8x64xf32>
    %cst_224 = arith.constant dense<0.000000e+00> : vector<8x192xf32>
    %683 = tpu.matmul %659, %501, %cst_224 {dimension_numbers = #tpu.dot_dimension_numbers<[1], [0], [0], [1], [0, 0, 1, 1], [], []>} : vector<8x64xf32>, vector<64x192xf32>, vector<8x192xf32> -> vector<8x192xf32>
    %684 = vector.extract_strided_slice %679 {offsets = [0, 0], sizes = [8, 64], strides = [1, 1]} : vector<8x192xf32> to vector<8x64xf32>
    %685 = vector.extract_strided_slice %683 {offsets = [0, 0], sizes = [8, 64], strides = [1, 1]} : vector<8x192xf32> to vector<8x64xf32>
    %686 = arith.addf %684, %685 : vector<8x64xf32>
    %687 = arith.negf %686 : vector<8x64xf32>
    %688 = math.exp %687 : vector<8x64xf32>
    %cst_225 = arith.constant 1.000000e+00 : f32
    %689 = vector.broadcast %cst_225 : f32 to vector<8x64xf32>
    %690 = arith.addf %689, %688 : vector<8x64xf32>
    %691 = arith.divf %689, %690 : vector<8x64xf32>
    %692 = vector.extract_strided_slice %679 {offsets = [0, 64], sizes = [8, 64], strides = [1, 1]} : vector<8x192xf32> to vector<8x64xf32>
    %693 = vector.extract_strided_slice %683 {offsets = [0, 64], sizes = [8, 64], strides = [1, 1]} : vector<8x192xf32> to vector<8x64xf32>
    %694 = arith.addf %692, %693 : vector<8x64xf32>
    %695 = arith.negf %694 : vector<8x64xf32>
    %696 = math.exp %695 : vector<8x64xf32>
    %cst_226 = arith.constant 1.000000e+00 : f32
    %697 = vector.broadcast %cst_226 : f32 to vector<8x64xf32>
    %698 = arith.addf %697, %696 : vector<8x64xf32>
    %699 = arith.divf %697, %698 : vector<8x64xf32>
    %700 = vector.extract_strided_slice %679 {offsets = [0, 128], sizes = [8, 64], strides = [1, 1]} : vector<8x192xf32> to vector<8x64xf32>
    %701 = vector.extract_strided_slice %683 {offsets = [0, 128], sizes = [8, 64], strides = [1, 1]} : vector<8x192xf32> to vector<8x64xf32>
    %702 = vector.broadcast %503 : vector<1x64xf32> to vector<8x64xf32>
    %703 = arith.addf %701, %702 : vector<8x64xf32>
    %704 = arith.mulf %691, %703 : vector<8x64xf32>
    %705 = arith.addf %700, %704 : vector<8x64xf32>
    %706 = math.tanh %705 : vector<8x64xf32>
    %707 = arith.subf %659, %706 : vector<8x64xf32>
    %708 = arith.mulf %699, %707 : vector<8x64xf32>
    %709 = arith.addf %706, %708 : vector<8x64xf32>
    %710 = arith.mulf %682, %709 : vector<8x64xf32>
    %cst_227 = arith.constant 1.000000e+00 : f32
    %711 = vector.broadcast %cst_227 : f32 to vector<8x64xf32>
    %712 = arith.subf %711, %682 : vector<8x64xf32>
    %713 = arith.mulf %712, %659 : vector<8x64xf32>
    %714 = arith.addf %710, %713 : vector<8x64xf32>
    %715 = vector.extract_strided_slice %710 {offsets = [0, 0], sizes = [8, 32], strides = [1, 1]} : vector<8x64xf32> to vector<8x32xf32>
    %716 = arith.index_cast %c3_i32_216 : i32 to index
    %c0_228 = arith.constant 0 : index
    %c0_229 = arith.constant 0 : index
    %717 = vector.load %arg16[%716, %c0_228, %c0_229] : memref<8x8x64xf32, #tpu.memory_space<vmem>>, vector<1x8x32xf32>
    %718 = vector.shape_cast %717 : vector<1x8x32xf32> to vector<8x32xf32>
    %719 = vector.shape_cast %715 : vector<8x32xf32> to vector<1x8x32xf32>
    tpu.vector_store %arg16[%716, %c0_228, %c0_229], %719 {strides = array<i32>} : memref<8x8x64xf32, #tpu.memory_space<vmem>>, vector<1x8x32xf32>,
    %720 = vector.extract_strided_slice %710 {offsets = [0, 32], sizes = [8, 32], strides = [1, 1]} : vector<8x64xf32> to vector<8x32xf32>
    %721 = arith.index_cast %670 : i32 to index
    %c0_230 = arith.constant 0 : index
    %c32_231 = arith.constant 32 : index
    %722 = vector.load %arg16[%721, %c0_230, %c32_231] : memref<8x8x64xf32, #tpu.memory_space<vmem>>, vector<1x8x32xf32>
    %723 = vector.shape_cast %722 : vector<1x8x32xf32> to vector<8x32xf32>
    %724 = vector.shape_cast %720 : vector<8x32xf32> to vector<1x8x32xf32>
    tpu.vector_store %arg16[%721, %c0_230, %c32_231], %724 {strides = array<i32>} : memref<8x8x64xf32, #tpu.memory_space<vmem>>, vector<1x8x32xf32>,
    %c4_i32_232 = arith.constant 4 : i32
    %c7_i32_233 = arith.constant 7 : i32
    %725 = arith.subi %c7_i32_233, %c4_i32_232 : i32
    %726 = arith.index_cast %c4_i32_232 : i32 to index
    %c0_234 = arith.constant 0 : index
    %c0_235 = arith.constant 0 : index
    %727 = vector.load %arg13[%726, %c0_234, %c0_235] : memref<8x8x192xf32, #tpu.memory_space<vmem>>, vector<1x8x192xf32>
    %728 = vector.shape_cast %727 : vector<1x8x192xf32> to vector<8x192xf32>
    %729 = arith.index_cast %725 : i32 to index
    %c0_236 = arith.constant 0 : index
    %c0_237 = arith.constant 0 : index
    %730 = vector.load %arg13[%729, %c0_236, %c0_237] : memref<8x8x192xf32, #tpu.memory_space<vmem>>, vector<1x8x192xf32>
    %731 = vector.shape_cast %730 : vector<1x8x192xf32> to vector<8x192xf32>
    %732 = vector.shape_cast %32 : vector<1x192xi1> to vector<1x192xi1>
    %733 = vector.broadcast %732 : vector<1x192xi1> to vector<8x192xi1>
    %734 = arith.select %733, %728, %731 : vector<8x192xi1>, vector<8x192xf32>
    %735 = arith.index_cast %c4_i32_232 : i32 to index
    %c0_238 = arith.constant 0 : index
    %c0_239 = arith.constant 0 : index
    %736 = vector.load %arg14[%735, %c0_238, %c0_239] : memref<8x8x64xf32, #tpu.memory_space<vmem>>, vector<1x8x64xf32>
    %737 = vector.shape_cast %736 : vector<1x8x64xf32> to vector<8x64xf32>
    %cst_240 = arith.constant dense<0.000000e+00> : vector<8x192xf32>
    %738 = tpu.matmul %714, %501, %cst_240 {dimension_numbers = #tpu.dot_dimension_numbers<[1], [0], [0], [1], [0, 0, 1, 1], [], []>} : vector<8x64xf32>, vector<64x192xf32>, vector<8x192xf32> -> vector<8x192xf32>
    %739 = vector.extract_strided_slice %734 {offsets = [0, 0], sizes = [8, 64], strides = [1, 1]} : vector<8x192xf32> to vector<8x64xf32>
    %740 = vector.extract_strided_slice %738 {offsets = [0, 0], sizes = [8, 64], strides = [1, 1]} : vector<8x192xf32> to vector<8x64xf32>
    %741 = arith.addf %739, %740 : vector<8x64xf32>
    %742 = arith.negf %741 : vector<8x64xf32>
    %743 = math.exp %742 : vector<8x64xf32>
    %cst_241 = arith.constant 1.000000e+00 : f32
    %744 = vector.broadcast %cst_241 : f32 to vector<8x64xf32>
    %745 = arith.addf %744, %743 : vector<8x64xf32>
    %746 = arith.divf %744, %745 : vector<8x64xf32>
    %747 = vector.extract_strided_slice %734 {offsets = [0, 64], sizes = [8, 64], strides = [1, 1]} : vector<8x192xf32> to vector<8x64xf32>
    %748 = vector.extract_strided_slice %738 {offsets = [0, 64], sizes = [8, 64], strides = [1, 1]} : vector<8x192xf32> to vector<8x64xf32>
    %749 = arith.addf %747, %748 : vector<8x64xf32>
    %750 = arith.negf %749 : vector<8x64xf32>
    %751 = math.exp %750 : vector<8x64xf32>
    %cst_242 = arith.constant 1.000000e+00 : f32
    %752 = vector.broadcast %cst_242 : f32 to vector<8x64xf32>
    %753 = arith.addf %752, %751 : vector<8x64xf32>
    %754 = arith.divf %752, %753 : vector<8x64xf32>
    %755 = vector.extract_strided_slice %734 {offsets = [0, 128], sizes = [8, 64], strides = [1, 1]} : vector<8x192xf32> to vector<8x64xf32>
    %756 = vector.extract_strided_slice %738 {offsets = [0, 128], sizes = [8, 64], strides = [1, 1]} : vector<8x192xf32> to vector<8x64xf32>
    %757 = vector.broadcast %503 : vector<1x64xf32> to vector<8x64xf32>
    %758 = arith.addf %756, %757 : vector<8x64xf32>
    %759 = arith.mulf %746, %758 : vector<8x64xf32>
    %760 = arith.addf %755, %759 : vector<8x64xf32>
    %761 = math.tanh %760 : vector<8x64xf32>
    %762 = arith.subf %714, %761 : vector<8x64xf32>
    %763 = arith.mulf %754, %762 : vector<8x64xf32>
    %764 = arith.addf %761, %763 : vector<8x64xf32>
    %765 = arith.mulf %737, %764 : vector<8x64xf32>
    %cst_243 = arith.constant 1.000000e+00 : f32
    %766 = vector.broadcast %cst_243 : f32 to vector<8x64xf32>
    %767 = arith.subf %766, %737 : vector<8x64xf32>
    %768 = arith.mulf %767, %714 : vector<8x64xf32>
    %769 = arith.addf %765, %768 : vector<8x64xf32>
    %770 = vector.extract_strided_slice %765 {offsets = [0, 0], sizes = [8, 32], strides = [1, 1]} : vector<8x64xf32> to vector<8x32xf32>
    %771 = arith.index_cast %c4_i32_232 : i32 to index
    %c0_244 = arith.constant 0 : index
    %c0_245 = arith.constant 0 : index
    %772 = vector.load %arg16[%771, %c0_244, %c0_245] : memref<8x8x64xf32, #tpu.memory_space<vmem>>, vector<1x8x32xf32>
    %773 = vector.shape_cast %772 : vector<1x8x32xf32> to vector<8x32xf32>
    %774 = vector.shape_cast %770 : vector<8x32xf32> to vector<1x8x32xf32>
    tpu.vector_store %arg16[%771, %c0_244, %c0_245], %774 {strides = array<i32>} : memref<8x8x64xf32, #tpu.memory_space<vmem>>, vector<1x8x32xf32>,
    %775 = vector.extract_strided_slice %765 {offsets = [0, 32], sizes = [8, 32], strides = [1, 1]} : vector<8x64xf32> to vector<8x32xf32>
    %776 = arith.index_cast %725 : i32 to index
    %c0_246 = arith.constant 0 : index
    %c32_247 = arith.constant 32 : index
    %777 = vector.load %arg16[%776, %c0_246, %c32_247] : memref<8x8x64xf32, #tpu.memory_space<vmem>>, vector<1x8x32xf32>
    %778 = vector.shape_cast %777 : vector<1x8x32xf32> to vector<8x32xf32>
    %779 = vector.shape_cast %775 : vector<8x32xf32> to vector<1x8x32xf32>
    tpu.vector_store %arg16[%776, %c0_246, %c32_247], %779 {strides = array<i32>} : memref<8x8x64xf32, #tpu.memory_space<vmem>>, vector<1x8x32xf32>,
    %c5_i32_248 = arith.constant 5 : i32
    %c7_i32_249 = arith.constant 7 : i32
    %780 = arith.subi %c7_i32_249, %c5_i32_248 : i32
    %781 = arith.index_cast %c5_i32_248 : i32 to index
    %c0_250 = arith.constant 0 : index
    %c0_251 = arith.constant 0 : index
    %782 = vector.load %arg13[%781, %c0_250, %c0_251] : memref<8x8x192xf32, #tpu.memory_space<vmem>>, vector<1x8x192xf32>
    %783 = vector.shape_cast %782 : vector<1x8x192xf32> to vector<8x192xf32>
    %784 = arith.index_cast %780 : i32 to index
    %c0_252 = arith.constant 0 : index
    %c0_253 = arith.constant 0 : index
    %785 = vector.load %arg13[%784, %c0_252, %c0_253] : memref<8x8x192xf32, #tpu.memory_space<vmem>>, vector<1x8x192xf32>
    %786 = vector.shape_cast %785 : vector<1x8x192xf32> to vector<8x192xf32>
    %787 = vector.shape_cast %32 : vector<1x192xi1> to vector<1x192xi1>
    %788 = vector.broadcast %787 : vector<1x192xi1> to vector<8x192xi1>
    %789 = arith.select %788, %783, %786 : vector<8x192xi1>, vector<8x192xf32>
    %790 = arith.index_cast %c5_i32_248 : i32 to index
    %c0_254 = arith.constant 0 : index
    %c0_255 = arith.constant 0 : index
    %791 = vector.load %arg14[%790, %c0_254, %c0_255] : memref<8x8x64xf32, #tpu.memory_space<vmem>>, vector<1x8x64xf32>
    %792 = vector.shape_cast %791 : vector<1x8x64xf32> to vector<8x64xf32>
    %cst_256 = arith.constant dense<0.000000e+00> : vector<8x192xf32>
    %793 = tpu.matmul %769, %501, %cst_256 {dimension_numbers = #tpu.dot_dimension_numbers<[1], [0], [0], [1], [0, 0, 1, 1], [], []>} : vector<8x64xf32>, vector<64x192xf32>, vector<8x192xf32> -> vector<8x192xf32>
    %794 = vector.extract_strided_slice %789 {offsets = [0, 0], sizes = [8, 64], strides = [1, 1]} : vector<8x192xf32> to vector<8x64xf32>
    %795 = vector.extract_strided_slice %793 {offsets = [0, 0], sizes = [8, 64], strides = [1, 1]} : vector<8x192xf32> to vector<8x64xf32>
    %796 = arith.addf %794, %795 : vector<8x64xf32>
    %797 = arith.negf %796 : vector<8x64xf32>
    %798 = math.exp %797 : vector<8x64xf32>
    %cst_257 = arith.constant 1.000000e+00 : f32
    %799 = vector.broadcast %cst_257 : f32 to vector<8x64xf32>
    %800 = arith.addf %799, %798 : vector<8x64xf32>
    %801 = arith.divf %799, %800 : vector<8x64xf32>
    %802 = vector.extract_strided_slice %789 {offsets = [0, 64], sizes = [8, 64], strides = [1, 1]} : vector<8x192xf32> to vector<8x64xf32>
    %803 = vector.extract_strided_slice %793 {offsets = [0, 64], sizes = [8, 64], strides = [1, 1]} : vector<8x192xf32> to vector<8x64xf32>
    %804 = arith.addf %802, %803 : vector<8x64xf32>
    %805 = arith.negf %804 : vector<8x64xf32>
    %806 = math.exp %805 : vector<8x64xf32>
    %cst_258 = arith.constant 1.000000e+00 : f32
    %807 = vector.broadcast %cst_258 : f32 to vector<8x64xf32>
    %808 = arith.addf %807, %806 : vector<8x64xf32>
    %809 = arith.divf %807, %808 : vector<8x64xf32>
    %810 = vector.extract_strided_slice %789 {offsets = [0, 128], sizes = [8, 64], strides = [1, 1]} : vector<8x192xf32> to vector<8x64xf32>
    %811 = vector.extract_strided_slice %793 {offsets = [0, 128], sizes = [8, 64], strides = [1, 1]} : vector<8x192xf32> to vector<8x64xf32>
    %812 = vector.broadcast %503 : vector<1x64xf32> to vector<8x64xf32>
    %813 = arith.addf %811, %812 : vector<8x64xf32>
    %814 = arith.mulf %801, %813 : vector<8x64xf32>
    %815 = arith.addf %810, %814 : vector<8x64xf32>
    %816 = math.tanh %815 : vector<8x64xf32>
    %817 = arith.subf %769, %816 : vector<8x64xf32>
    %818 = arith.mulf %809, %817 : vector<8x64xf32>
    %819 = arith.addf %816, %818 : vector<8x64xf32>
    %820 = arith.mulf %792, %819 : vector<8x64xf32>
    %cst_259 = arith.constant 1.000000e+00 : f32
    %821 = vector.broadcast %cst_259 : f32 to vector<8x64xf32>
    %822 = arith.subf %821, %792 : vector<8x64xf32>
    %823 = arith.mulf %822, %769 : vector<8x64xf32>
    %824 = arith.addf %820, %823 : vector<8x64xf32>
    %825 = vector.extract_strided_slice %820 {offsets = [0, 0], sizes = [8, 32], strides = [1, 1]} : vector<8x64xf32> to vector<8x32xf32>
    %826 = arith.index_cast %c5_i32_248 : i32 to index
    %c0_260 = arith.constant 0 : index
    %c0_261 = arith.constant 0 : index
    %827 = vector.load %arg16[%826, %c0_260, %c0_261] : memref<8x8x64xf32, #tpu.memory_space<vmem>>, vector<1x8x32xf32>
    %828 = vector.shape_cast %827 : vector<1x8x32xf32> to vector<8x32xf32>
    %829 = vector.shape_cast %825 : vector<8x32xf32> to vector<1x8x32xf32>
    tpu.vector_store %arg16[%826, %c0_260, %c0_261], %829 {strides = array<i32>} : memref<8x8x64xf32, #tpu.memory_space<vmem>>, vector<1x8x32xf32>,
    %830 = vector.extract_strided_slice %820 {offsets = [0, 32], sizes = [8, 32], strides = [1, 1]} : vector<8x64xf32> to vector<8x32xf32>
    %831 = arith.index_cast %780 : i32 to index
    %c0_262 = arith.constant 0 : index
    %c32_263 = arith.constant 32 : index
    %832 = vector.load %arg16[%831, %c0_262, %c32_263] : memref<8x8x64xf32, #tpu.memory_space<vmem>>, vector<1x8x32xf32>
    %833 = vector.shape_cast %832 : vector<1x8x32xf32> to vector<8x32xf32>
    %834 = vector.shape_cast %830 : vector<8x32xf32> to vector<1x8x32xf32>
    tpu.vector_store %arg16[%831, %c0_262, %c32_263], %834 {strides = array<i32>} : memref<8x8x64xf32, #tpu.memory_space<vmem>>, vector<1x8x32xf32>,
    %c6_i32_264 = arith.constant 6 : i32
    %c7_i32_265 = arith.constant 7 : i32
    %835 = arith.subi %c7_i32_265, %c6_i32_264 : i32
    %836 = arith.index_cast %c6_i32_264 : i32 to index
    %c0_266 = arith.constant 0 : index
    %c0_267 = arith.constant 0 : index
    %837 = vector.load %arg13[%836, %c0_266, %c0_267] : memref<8x8x192xf32, #tpu.memory_space<vmem>>, vector<1x8x192xf32>
    %838 = vector.shape_cast %837 : vector<1x8x192xf32> to vector<8x192xf32>
    %839 = arith.index_cast %835 : i32 to index
    %c0_268 = arith.constant 0 : index
    %c0_269 = arith.constant 0 : index
    %840 = vector.load %arg13[%839, %c0_268, %c0_269] : memref<8x8x192xf32, #tpu.memory_space<vmem>>, vector<1x8x192xf32>
    %841 = vector.shape_cast %840 : vector<1x8x192xf32> to vector<8x192xf32>
    %842 = vector.shape_cast %32 : vector<1x192xi1> to vector<1x192xi1>
    %843 = vector.broadcast %842 : vector<1x192xi1> to vector<8x192xi1>
    %844 = arith.select %843, %838, %841 : vector<8x192xi1>, vector<8x192xf32>
    %845 = arith.index_cast %c6_i32_264 : i32 to index
    %c0_270 = arith.constant 0 : index
    %c0_271 = arith.constant 0 : index
    %846 = vector.load %arg14[%845, %c0_270, %c0_271] : memref<8x8x64xf32, #tpu.memory_space<vmem>>, vector<1x8x64xf32>
    %847 = vector.shape_cast %846 : vector<1x8x64xf32> to vector<8x64xf32>
    %cst_272 = arith.constant dense<0.000000e+00> : vector<8x192xf32>
    %848 = tpu.matmul %824, %501, %cst_272 {dimension_numbers = #tpu.dot_dimension_numbers<[1], [0], [0], [1], [0, 0, 1, 1], [], []>} : vector<8x64xf32>, vector<64x192xf32>, vector<8x192xf32> -> vector<8x192xf32>
    %849 = vector.extract_strided_slice %844 {offsets = [0, 0], sizes = [8, 64], strides = [1, 1]} : vector<8x192xf32> to vector<8x64xf32>
    %850 = vector.extract_strided_slice %848 {offsets = [0, 0], sizes = [8, 64], strides = [1, 1]} : vector<8x192xf32> to vector<8x64xf32>
    %851 = arith.addf %849, %850 : vector<8x64xf32>
    %852 = arith.negf %851 : vector<8x64xf32>
    %853 = math.exp %852 : vector<8x64xf32>
    %cst_273 = arith.constant 1.000000e+00 : f32
    %854 = vector.broadcast %cst_273 : f32 to vector<8x64xf32>
    %855 = arith.addf %854, %853 : vector<8x64xf32>
    %856 = arith.divf %854, %855 : vector<8x64xf32>
    %857 = vector.extract_strided_slice %844 {offsets = [0, 64], sizes = [8, 64], strides = [1, 1]} : vector<8x192xf32> to vector<8x64xf32>
    %858 = vector.extract_strided_slice %848 {offsets = [0, 64], sizes = [8, 64], strides = [1, 1]} : vector<8x192xf32> to vector<8x64xf32>
    %859 = arith.addf %857, %858 : vector<8x64xf32>
    %860 = arith.negf %859 : vector<8x64xf32>
    %861 = math.exp %860 : vector<8x64xf32>
    %cst_274 = arith.constant 1.000000e+00 : f32
    %862 = vector.broadcast %cst_274 : f32 to vector<8x64xf32>
    %863 = arith.addf %862, %861 : vector<8x64xf32>
    %864 = arith.divf %862, %863 : vector<8x64xf32>
    %865 = vector.extract_strided_slice %844 {offsets = [0, 128], sizes = [8, 64], strides = [1, 1]} : vector<8x192xf32> to vector<8x64xf32>
    %866 = vector.extract_strided_slice %848 {offsets = [0, 128], sizes = [8, 64], strides = [1, 1]} : vector<8x192xf32> to vector<8x64xf32>
    %867 = vector.broadcast %503 : vector<1x64xf32> to vector<8x64xf32>
    %868 = arith.addf %866, %867 : vector<8x64xf32>
    %869 = arith.mulf %856, %868 : vector<8x64xf32>
    %870 = arith.addf %865, %869 : vector<8x64xf32>
    %871 = math.tanh %870 : vector<8x64xf32>
    %872 = arith.subf %824, %871 : vector<8x64xf32>
    %873 = arith.mulf %864, %872 : vector<8x64xf32>
    %874 = arith.addf %871, %873 : vector<8x64xf32>
    %875 = arith.mulf %847, %874 : vector<8x64xf32>
    %cst_275 = arith.constant 1.000000e+00 : f32
    %876 = vector.broadcast %cst_275 : f32 to vector<8x64xf32>
    %877 = arith.subf %876, %847 : vector<8x64xf32>
    %878 = arith.mulf %877, %824 : vector<8x64xf32>
    %879 = arith.addf %875, %878 : vector<8x64xf32>
    %880 = vector.extract_strided_slice %875 {offsets = [0, 0], sizes = [8, 32], strides = [1, 1]} : vector<8x64xf32> to vector<8x32xf32>
    %881 = arith.index_cast %c6_i32_264 : i32 to index
    %c0_276 = arith.constant 0 : index
    %c0_277 = arith.constant 0 : index
    %882 = vector.load %arg16[%881, %c0_276, %c0_277] : memref<8x8x64xf32, #tpu.memory_space<vmem>>, vector<1x8x32xf32>
    %883 = vector.shape_cast %882 : vector<1x8x32xf32> to vector<8x32xf32>
    %884 = vector.shape_cast %880 : vector<8x32xf32> to vector<1x8x32xf32>
    tpu.vector_store %arg16[%881, %c0_276, %c0_277], %884 {strides = array<i32>} : memref<8x8x64xf32, #tpu.memory_space<vmem>>, vector<1x8x32xf32>,
    %885 = vector.extract_strided_slice %875 {offsets = [0, 32], sizes = [8, 32], strides = [1, 1]} : vector<8x64xf32> to vector<8x32xf32>
    %886 = arith.index_cast %835 : i32 to index
    %c0_278 = arith.constant 0 : index
    %c32_279 = arith.constant 32 : index
    %887 = vector.load %arg16[%886, %c0_278, %c32_279] : memref<8x8x64xf32, #tpu.memory_space<vmem>>, vector<1x8x32xf32>
    %888 = vector.shape_cast %887 : vector<1x8x32xf32> to vector<8x32xf32>
    %889 = vector.shape_cast %885 : vector<8x32xf32> to vector<1x8x32xf32>
    tpu.vector_store %arg16[%886, %c0_278, %c32_279], %889 {strides = array<i32>} : memref<8x8x64xf32, #tpu.memory_space<vmem>>, vector<1x8x32xf32>,
    %c7_i32_280 = arith.constant 7 : i32
    %c7_i32_281 = arith.constant 7 : i32
    %890 = arith.subi %c7_i32_281, %c7_i32_280 : i32
    %891 = arith.index_cast %c7_i32_280 : i32 to index
    %c0_282 = arith.constant 0 : index
    %c0_283 = arith.constant 0 : index
    %892 = vector.load %arg13[%891, %c0_282, %c0_283] : memref<8x8x192xf32, #tpu.memory_space<vmem>>, vector<1x8x192xf32>
    %893 = vector.shape_cast %892 : vector<1x8x192xf32> to vector<8x192xf32>
    %894 = arith.index_cast %890 : i32 to index
    %c0_284 = arith.constant 0 : index
    %c0_285 = arith.constant 0 : index
    %895 = vector.load %arg13[%894, %c0_284, %c0_285] : memref<8x8x192xf32, #tpu.memory_space<vmem>>, vector<1x8x192xf32>
    %896 = vector.shape_cast %895 : vector<1x8x192xf32> to vector<8x192xf32>
    %897 = vector.shape_cast %32 : vector<1x192xi1> to vector<1x192xi1>
    %898 = vector.broadcast %897 : vector<1x192xi1> to vector<8x192xi1>
    %899 = arith.select %898, %893, %896 : vector<8x192xi1>, vector<8x192xf32>
    %900 = arith.index_cast %c7_i32_280 : i32 to index
    %c0_286 = arith.constant 0 : index
    %c0_287 = arith.constant 0 : index
    %901 = vector.load %arg14[%900, %c0_286, %c0_287] : memref<8x8x64xf32, #tpu.memory_space<vmem>>, vector<1x8x64xf32>
    %902 = vector.shape_cast %901 : vector<1x8x64xf32> to vector<8x64xf32>
    %cst_288 = arith.constant dense<0.000000e+00> : vector<8x192xf32>
    %903 = tpu.matmul %879, %501, %cst_288 {dimension_numbers = #tpu.dot_dimension_numbers<[1], [0], [0], [1], [0, 0, 1, 1], [], []>} : vector<8x64xf32>, vector<64x192xf32>, vector<8x192xf32> -> vector<8x192xf32>
    %904 = vector.extract_strided_slice %899 {offsets = [0, 0], sizes = [8, 64], strides = [1, 1]} : vector<8x192xf32> to vector<8x64xf32>
    %905 = vector.extract_strided_slice %903 {offsets = [0, 0], sizes = [8, 64], strides = [1, 1]} : vector<8x192xf32> to vector<8x64xf32>
    %906 = arith.addf %904, %905 : vector<8x64xf32>
    %907 = arith.negf %906 : vector<8x64xf32>
    %908 = math.exp %907 : vector<8x64xf32>
    %cst_289 = arith.constant 1.000000e+00 : f32
    %909 = vector.broadcast %cst_289 : f32 to vector<8x64xf32>
    %910 = arith.addf %909, %908 : vector<8x64xf32>
    %911 = arith.divf %909, %910 : vector<8x64xf32>
    %912 = vector.extract_strided_slice %899 {offsets = [0, 64], sizes = [8, 64], strides = [1, 1]} : vector<8x192xf32> to vector<8x64xf32>
    %913 = vector.extract_strided_slice %903 {offsets = [0, 64], sizes = [8, 64], strides = [1, 1]} : vector<8x192xf32> to vector<8x64xf32>
    %914 = arith.addf %912, %913 : vector<8x64xf32>
    %915 = arith.negf %914 : vector<8x64xf32>
    %916 = math.exp %915 : vector<8x64xf32>
    %cst_290 = arith.constant 1.000000e+00 : f32
    %917 = vector.broadcast %cst_290 : f32 to vector<8x64xf32>
    %918 = arith.addf %917, %916 : vector<8x64xf32>
    %919 = arith.divf %917, %918 : vector<8x64xf32>
    %920 = vector.extract_strided_slice %899 {offsets = [0, 128], sizes = [8, 64], strides = [1, 1]} : vector<8x192xf32> to vector<8x64xf32>
    %921 = vector.extract_strided_slice %903 {offsets = [0, 128], sizes = [8, 64], strides = [1, 1]} : vector<8x192xf32> to vector<8x64xf32>
    %922 = vector.broadcast %503 : vector<1x64xf32> to vector<8x64xf32>
    %923 = arith.addf %921, %922 : vector<8x64xf32>
    %924 = arith.mulf %911, %923 : vector<8x64xf32>
    %925 = arith.addf %920, %924 : vector<8x64xf32>
    %926 = math.tanh %925 : vector<8x64xf32>
    %927 = arith.subf %879, %926 : vector<8x64xf32>
    %928 = arith.mulf %919, %927 : vector<8x64xf32>
    %929 = arith.addf %926, %928 : vector<8x64xf32>
    %930 = arith.mulf %902, %929 : vector<8x64xf32>
    %cst_291 = arith.constant 1.000000e+00 : f32
    %931 = vector.broadcast %cst_291 : f32 to vector<8x64xf32>
    %932 = arith.subf %931, %902 : vector<8x64xf32>
    %933 = arith.mulf %932, %879 : vector<8x64xf32>
    %934 = arith.addf %930, %933 : vector<8x64xf32>
    %935 = vector.extract_strided_slice %930 {offsets = [0, 0], sizes = [8, 32], strides = [1, 1]} : vector<8x64xf32> to vector<8x32xf32>
    %936 = arith.index_cast %c7_i32_280 : i32 to index
    %c0_292 = arith.constant 0 : index
    %c0_293 = arith.constant 0 : index
    %937 = vector.load %arg16[%936, %c0_292, %c0_293] : memref<8x8x64xf32, #tpu.memory_space<vmem>>, vector<1x8x32xf32>
    %938 = vector.shape_cast %937 : vector<1x8x32xf32> to vector<8x32xf32>
    %939 = vector.shape_cast %935 : vector<8x32xf32> to vector<1x8x32xf32>
    tpu.vector_store %arg16[%936, %c0_292, %c0_293], %939 {strides = array<i32>} : memref<8x8x64xf32, #tpu.memory_space<vmem>>, vector<1x8x32xf32>,
    %940 = vector.extract_strided_slice %930 {offsets = [0, 32], sizes = [8, 32], strides = [1, 1]} : vector<8x64xf32> to vector<8x32xf32>
    %941 = arith.index_cast %890 : i32 to index
    %c0_294 = arith.constant 0 : index
    %c32_295 = arith.constant 32 : index
    %942 = vector.load %arg16[%941, %c0_294, %c32_295] : memref<8x8x64xf32, #tpu.memory_space<vmem>>, vector<1x8x32xf32>
    %943 = vector.shape_cast %942 : vector<1x8x32xf32> to vector<8x32xf32>
    %944 = vector.shape_cast %940 : vector<8x32xf32> to vector<1x8x32xf32>
    tpu.vector_store %arg16[%941, %c0_294, %c32_295], %944 {strides = array<i32>} : memref<8x8x64xf32, #tpu.memory_space<vmem>>, vector<1x8x32xf32>,
    %c8_i32_296 = arith.constant 8 : i32
    %c0_297 = arith.constant 0 : index
    %c0_298 = arith.constant 0 : index
    %c0_299 = arith.constant 0 : index
    %945 = vector.load %arg16[%c0_297, %c0_298, %c0_299] : memref<8x8x64xf32, #tpu.memory_space<vmem>>, vector<8x8x64xf32>
    %946 = vector.shape_cast %945 : vector<8x8x64xf32> to vector<64x64xf32>
    %c2 = arith.constant 2 : index
    %c0_300 = arith.constant 0 : index
    %c0_301 = arith.constant 0 : index
    %947 = vector.load %arg3[%c2, %c0_300, %c0_301] : memref<3x64x192xf32, #tpu.memory_space<vmem>>, vector<1x64x192xf32>
    %948 = vector.shape_cast %947 : vector<1x64x192xf32> to vector<64x192xf32>
    %cst_302 = arith.constant dense<0.000000e+00> : vector<64x192xf32>
    %949 = tpu.matmul %946, %948, %cst_302 {dimension_numbers = #tpu.dot_dimension_numbers<[1], [0], [0], [1], [0, 0, 1, 1], [], []>} : vector<64x64xf32>, vector<64x192xf32>, vector<64x192xf32> -> vector<64x192xf32>
    %c2_303 = arith.constant 2 : index
    %c0_304 = arith.constant 0 : index
    %c0_305 = arith.constant 0 : index
    %950 = vector.load %arg4[%c2_303, %c0_304, %c0_305] : memref<3x1x192xf32, #tpu.memory_space<vmem>>, vector<1x1x192xf32>
    %951 = vector.shape_cast %950 : vector<1x1x192xf32> to vector<1x192xf32>
    %952 = vector.broadcast %951 : vector<1x192xf32> to vector<64x192xf32>
    %953 = arith.addf %949, %952 : vector<64x192xf32>
    %954 = vector.shape_cast %953 : vector<64x192xf32> to vector<8x8x192xf32>
    %c0_306 = arith.constant 0 : index
    %c0_307 = arith.constant 0 : index
    %c0_308 = arith.constant 0 : index
    %955 = vector.load %arg13[%c0_306, %c0_307, %c0_308] : memref<8x8x192xf32, #tpu.memory_space<vmem>>, vector<8x8x192xf32>
    tpu.vector_store %arg13[%c0_306, %c0_307, %c0_308], %954 {strides = array<i32>} : memref<8x8x192xf32, #tpu.memory_space<vmem>>, vector<8x8x192xf32>,
    %c2_309 = arith.constant 2 : index
    %c0_310 = arith.constant 0 : index
    %c0_311 = arith.constant 0 : index
    %956 = vector.load %arg5[%c2_309, %c0_310, %c0_311] : memref<3x64x192xf32, #tpu.memory_space<vmem>>, vector<1x64x192xf32>
    %957 = vector.shape_cast %956 : vector<1x64x192xf32> to vector<64x192xf32>
    %c2_312 = arith.constant 2 : index
    %c0_313 = arith.constant 0 : index
    %c0_314 = arith.constant 0 : index
    %958 = vector.load %arg6[%c2_312, %c0_313, %c0_314] : memref<3x1x64xf32, #tpu.memory_space<vmem>>, vector<1x1x64xf32>
    %959 = vector.shape_cast %958 : vector<1x1x64xf32> to vector<1x64xf32>
    %cst_315 = arith.constant 0.000000e+00 : f32
    %960 = vector.broadcast %cst_315 : f32 to vector<8x64xf32>
    %c0_i32_316 = arith.constant 0 : i32
    %c7_i32_317 = arith.constant 7 : i32
    %961 = arith.subi %c7_i32_317, %c0_i32_316 : i32
    %962 = arith.index_cast %c0_i32_316 : i32 to index
    %c0_318 = arith.constant 0 : index
    %c0_319 = arith.constant 0 : index
    %963 = vector.load %arg13[%962, %c0_318, %c0_319] : memref<8x8x192xf32, #tpu.memory_space<vmem>>, vector<1x8x192xf32>
    %964 = vector.shape_cast %963 : vector<1x8x192xf32> to vector<8x192xf32>
    %965 = arith.index_cast %961 : i32 to index
    %c0_320 = arith.constant 0 : index
    %c0_321 = arith.constant 0 : index
    %966 = vector.load %arg13[%965, %c0_320, %c0_321] : memref<8x8x192xf32, #tpu.memory_space<vmem>>, vector<1x8x192xf32>
    %967 = vector.shape_cast %966 : vector<1x8x192xf32> to vector<8x192xf32>
    %968 = vector.shape_cast %32 : vector<1x192xi1> to vector<1x192xi1>
    %969 = vector.broadcast %968 : vector<1x192xi1> to vector<8x192xi1>
    %970 = arith.select %969, %964, %967 : vector<8x192xi1>, vector<8x192xf32>
    %971 = arith.index_cast %c0_i32_316 : i32 to index
    %c0_322 = arith.constant 0 : index
    %c0_323 = arith.constant 0 : index
    %972 = vector.load %arg14[%971, %c0_322, %c0_323] : memref<8x8x64xf32, #tpu.memory_space<vmem>>, vector<1x8x64xf32>
    %973 = vector.shape_cast %972 : vector<1x8x64xf32> to vector<8x64xf32>
    %cst_324 = arith.constant dense<0.000000e+00> : vector<8x192xf32>
    %974 = tpu.matmul %960, %957, %cst_324 {dimension_numbers = #tpu.dot_dimension_numbers<[1], [0], [0], [1], [0, 0, 1, 1], [], []>} : vector<8x64xf32>, vector<64x192xf32>, vector<8x192xf32> -> vector<8x192xf32>
    %975 = vector.extract_strided_slice %970 {offsets = [0, 0], sizes = [8, 64], strides = [1, 1]} : vector<8x192xf32> to vector<8x64xf32>
    %976 = vector.extract_strided_slice %974 {offsets = [0, 0], sizes = [8, 64], strides = [1, 1]} : vector<8x192xf32> to vector<8x64xf32>
    %977 = arith.addf %975, %976 : vector<8x64xf32>
    %978 = arith.negf %977 : vector<8x64xf32>
    %979 = math.exp %978 : vector<8x64xf32>
    %cst_325 = arith.constant 1.000000e+00 : f32
    %980 = vector.broadcast %cst_325 : f32 to vector<8x64xf32>
    %981 = arith.addf %980, %979 : vector<8x64xf32>
    %982 = arith.divf %980, %981 : vector<8x64xf32>
    %983 = vector.extract_strided_slice %970 {offsets = [0, 64], sizes = [8, 64], strides = [1, 1]} : vector<8x192xf32> to vector<8x64xf32>
    %984 = vector.extract_strided_slice %974 {offsets = [0, 64], sizes = [8, 64], strides = [1, 1]} : vector<8x192xf32> to vector<8x64xf32>
    %985 = arith.addf %983, %984 : vector<8x64xf32>
    %986 = arith.negf %985 : vector<8x64xf32>
    %987 = math.exp %986 : vector<8x64xf32>
    %cst_326 = arith.constant 1.000000e+00 : f32
    %988 = vector.broadcast %cst_326 : f32 to vector<8x64xf32>
    %989 = arith.addf %988, %987 : vector<8x64xf32>
    %990 = arith.divf %988, %989 : vector<8x64xf32>
    %991 = vector.extract_strided_slice %970 {offsets = [0, 128], sizes = [8, 64], strides = [1, 1]} : vector<8x192xf32> to vector<8x64xf32>
    %992 = vector.extract_strided_slice %974 {offsets = [0, 128], sizes = [8, 64], strides = [1, 1]} : vector<8x192xf32> to vector<8x64xf32>
    %993 = vector.broadcast %959 : vector<1x64xf32> to vector<8x64xf32>
    %994 = arith.addf %992, %993 : vector<8x64xf32>
    %995 = arith.mulf %982, %994 : vector<8x64xf32>
    %996 = arith.addf %991, %995 : vector<8x64xf32>
    %997 = math.tanh %996 : vector<8x64xf32>
    %998 = arith.subf %960, %997 : vector<8x64xf32>
    %999 = arith.mulf %990, %998 : vector<8x64xf32>
    %1000 = arith.addf %997, %999 : vector<8x64xf32>
    %1001 = arith.mulf %973, %1000 : vector<8x64xf32>
    %cst_327 = arith.constant 1.000000e+00 : f32
    %1002 = vector.broadcast %cst_327 : f32 to vector<8x64xf32>
    %1003 = arith.subf %1002, %973 : vector<8x64xf32>
    %1004 = arith.mulf %1003, %960 : vector<8x64xf32>
    %1005 = arith.addf %1001, %1004 : vector<8x64xf32>
    %1006 = vector.extract_strided_slice %1001 {offsets = [0, 0], sizes = [8, 32], strides = [1, 1]} : vector<8x64xf32> to vector<8x32xf32>
    %1007 = arith.index_cast %c0_i32_316 : i32 to index
    %c0_328 = arith.constant 0 : index
    %c0_329 = arith.constant 0 : index
    %1008 = vector.load %arg15[%1007, %c0_328, %c0_329] : memref<8x8x64xf32, #tpu.memory_space<vmem>>, vector<1x8x32xf32>
    %1009 = vector.shape_cast %1008 : vector<1x8x32xf32> to vector<8x32xf32>
    %1010 = vector.shape_cast %1006 : vector<8x32xf32> to vector<1x8x32xf32>
    tpu.vector_store %arg15[%1007, %c0_328, %c0_329], %1010 {strides = array<i32>} : memref<8x8x64xf32, #tpu.memory_space<vmem>>, vector<1x8x32xf32>,
    %1011 = vector.extract_strided_slice %1001 {offsets = [0, 32], sizes = [8, 32], strides = [1, 1]} : vector<8x64xf32> to vector<8x32xf32>
    %1012 = arith.index_cast %961 : i32 to index
    %c0_330 = arith.constant 0 : index
    %c32_331 = arith.constant 32 : index
    %1013 = vector.load %arg15[%1012, %c0_330, %c32_331] : memref<8x8x64xf32, #tpu.memory_space<vmem>>, vector<1x8x32xf32>
    %1014 = vector.shape_cast %1013 : vector<1x8x32xf32> to vector<8x32xf32>
    %1015 = vector.shape_cast %1011 : vector<8x32xf32> to vector<1x8x32xf32>
    tpu.vector_store %arg15[%1012, %c0_330, %c32_331], %1015 {strides = array<i32>} : memref<8x8x64xf32, #tpu.memory_space<vmem>>, vector<1x8x32xf32>,
    %c1_i32_332 = arith.constant 1 : i32
    %c7_i32_333 = arith.constant 7 : i32
    %1016 = arith.subi %c7_i32_333, %c1_i32_332 : i32
    %1017 = arith.index_cast %c1_i32_332 : i32 to index
    %c0_334 = arith.constant 0 : index
    %c0_335 = arith.constant 0 : index
    %1018 = vector.load %arg13[%1017, %c0_334, %c0_335] : memref<8x8x192xf32, #tpu.memory_space<vmem>>, vector<1x8x192xf32>
    %1019 = vector.shape_cast %1018 : vector<1x8x192xf32> to vector<8x192xf32>
    %1020 = arith.index_cast %1016 : i32 to index
    %c0_336 = arith.constant 0 : index
    %c0_337 = arith.constant 0 : index
    %1021 = vector.load %arg13[%1020, %c0_336, %c0_337] : memref<8x8x192xf32, #tpu.memory_space<vmem>>, vector<1x8x192xf32>
    %1022 = vector.shape_cast %1021 : vector<1x8x192xf32> to vector<8x192xf32>
    %1023 = vector.shape_cast %32 : vector<1x192xi1> to vector<1x192xi1>
    %1024 = vector.broadcast %1023 : vector<1x192xi1> to vector<8x192xi1>
    %1025 = arith.select %1024, %1019, %1022 : vector<8x192xi1>, vector<8x192xf32>
    %1026 = arith.index_cast %c1_i32_332 : i32 to index
    %c0_338 = arith.constant 0 : index
    %c0_339 = arith.constant 0 : index
    %1027 = vector.load %arg14[%1026, %c0_338, %c0_339] : memref<8x8x64xf32, #tpu.memory_space<vmem>>, vector<1x8x64xf32>
    %1028 = vector.shape_cast %1027 : vector<1x8x64xf32> to vector<8x64xf32>
    %cst_340 = arith.constant dense<0.000000e+00> : vector<8x192xf32>
    %1029 = tpu.matmul %1005, %957, %cst_340 {dimension_numbers = #tpu.dot_dimension_numbers<[1], [0], [0], [1], [0, 0, 1, 1], [], []>} : vector<8x64xf32>, vector<64x192xf32>, vector<8x192xf32> -> vector<8x192xf32>
    %1030 = vector.extract_strided_slice %1025 {offsets = [0, 0], sizes = [8, 64], strides = [1, 1]} : vector<8x192xf32> to vector<8x64xf32>
    %1031 = vector.extract_strided_slice %1029 {offsets = [0, 0], sizes = [8, 64], strides = [1, 1]} : vector<8x192xf32> to vector<8x64xf32>
    %1032 = arith.addf %1030, %1031 : vector<8x64xf32>
    %1033 = arith.negf %1032 : vector<8x64xf32>
    %1034 = math.exp %1033 : vector<8x64xf32>
    %cst_341 = arith.constant 1.000000e+00 : f32
    %1035 = vector.broadcast %cst_341 : f32 to vector<8x64xf32>
    %1036 = arith.addf %1035, %1034 : vector<8x64xf32>
    %1037 = arith.divf %1035, %1036 : vector<8x64xf32>
    %1038 = vector.extract_strided_slice %1025 {offsets = [0, 64], sizes = [8, 64], strides = [1, 1]} : vector<8x192xf32> to vector<8x64xf32>
    %1039 = vector.extract_strided_slice %1029 {offsets = [0, 64], sizes = [8, 64], strides = [1, 1]} : vector<8x192xf32> to vector<8x64xf32>
    %1040 = arith.addf %1038, %1039 : vector<8x64xf32>
    %1041 = arith.negf %1040 : vector<8x64xf32>
    %1042 = math.exp %1041 : vector<8x64xf32>
    %cst_342 = arith.constant 1.000000e+00 : f32
    %1043 = vector.broadcast %cst_342 : f32 to vector<8x64xf32>
    %1044 = arith.addf %1043, %1042 : vector<8x64xf32>
    %1045 = arith.divf %1043, %1044 : vector<8x64xf32>
    %1046 = vector.extract_strided_slice %1025 {offsets = [0, 128], sizes = [8, 64], strides = [1, 1]} : vector<8x192xf32> to vector<8x64xf32>
    %1047 = vector.extract_strided_slice %1029 {offsets = [0, 128], sizes = [8, 64], strides = [1, 1]} : vector<8x192xf32> to vector<8x64xf32>
    %1048 = vector.broadcast %959 : vector<1x64xf32> to vector<8x64xf32>
    %1049 = arith.addf %1047, %1048 : vector<8x64xf32>
    %1050 = arith.mulf %1037, %1049 : vector<8x64xf32>
    %1051 = arith.addf %1046, %1050 : vector<8x64xf32>
    %1052 = math.tanh %1051 : vector<8x64xf32>
    %1053 = arith.subf %1005, %1052 : vector<8x64xf32>
    %1054 = arith.mulf %1045, %1053 : vector<8x64xf32>
    %1055 = arith.addf %1052, %1054 : vector<8x64xf32>
    %1056 = arith.mulf %1028, %1055 : vector<8x64xf32>
    %cst_343 = arith.constant 1.000000e+00 : f32
    %1057 = vector.broadcast %cst_343 : f32 to vector<8x64xf32>
    %1058 = arith.subf %1057, %1028 : vector<8x64xf32>
    %1059 = arith.mulf %1058, %1005 : vector<8x64xf32>
    %1060 = arith.addf %1056, %1059 : vector<8x64xf32>
    %1061 = vector.extract_strided_slice %1056 {offsets = [0, 0], sizes = [8, 32], strides = [1, 1]} : vector<8x64xf32> to vector<8x32xf32>
    %1062 = arith.index_cast %c1_i32_332 : i32 to index
    %c0_344 = arith.constant 0 : index
    %c0_345 = arith.constant 0 : index
    %1063 = vector.load %arg15[%1062, %c0_344, %c0_345] : memref<8x8x64xf32, #tpu.memory_space<vmem>>, vector<1x8x32xf32>
    %1064 = vector.shape_cast %1063 : vector<1x8x32xf32> to vector<8x32xf32>
    %1065 = vector.shape_cast %1061 : vector<8x32xf32> to vector<1x8x32xf32>
    tpu.vector_store %arg15[%1062, %c0_344, %c0_345], %1065 {strides = array<i32>} : memref<8x8x64xf32, #tpu.memory_space<vmem>>, vector<1x8x32xf32>,
    %1066 = vector.extract_strided_slice %1056 {offsets = [0, 32], sizes = [8, 32], strides = [1, 1]} : vector<8x64xf32> to vector<8x32xf32>
    %1067 = arith.index_cast %1016 : i32 to index
    %c0_346 = arith.constant 0 : index
    %c32_347 = arith.constant 32 : index
    %1068 = vector.load %arg15[%1067, %c0_346, %c32_347] : memref<8x8x64xf32, #tpu.memory_space<vmem>>, vector<1x8x32xf32>
    %1069 = vector.shape_cast %1068 : vector<1x8x32xf32> to vector<8x32xf32>
    %1070 = vector.shape_cast %1066 : vector<8x32xf32> to vector<1x8x32xf32>
    tpu.vector_store %arg15[%1067, %c0_346, %c32_347], %1070 {strides = array<i32>} : memref<8x8x64xf32, #tpu.memory_space<vmem>>, vector<1x8x32xf32>,
    %c2_i32_348 = arith.constant 2 : i32
    %c7_i32_349 = arith.constant 7 : i32
    %1071 = arith.subi %c7_i32_349, %c2_i32_348 : i32
    %1072 = arith.index_cast %c2_i32_348 : i32 to index
    %c0_350 = arith.constant 0 : index
    %c0_351 = arith.constant 0 : index
    %1073 = vector.load %arg13[%1072, %c0_350, %c0_351] : memref<8x8x192xf32, #tpu.memory_space<vmem>>, vector<1x8x192xf32>
    %1074 = vector.shape_cast %1073 : vector<1x8x192xf32> to vector<8x192xf32>
    %1075 = arith.index_cast %1071 : i32 to index
    %c0_352 = arith.constant 0 : index
    %c0_353 = arith.constant 0 : index
    %1076 = vector.load %arg13[%1075, %c0_352, %c0_353] : memref<8x8x192xf32, #tpu.memory_space<vmem>>, vector<1x8x192xf32>
    %1077 = vector.shape_cast %1076 : vector<1x8x192xf32> to vector<8x192xf32>
    %1078 = vector.shape_cast %32 : vector<1x192xi1> to vector<1x192xi1>
    %1079 = vector.broadcast %1078 : vector<1x192xi1> to vector<8x192xi1>
    %1080 = arith.select %1079, %1074, %1077 : vector<8x192xi1>, vector<8x192xf32>
    %1081 = arith.index_cast %c2_i32_348 : i32 to index
    %c0_354 = arith.constant 0 : index
    %c0_355 = arith.constant 0 : index
    %1082 = vector.load %arg14[%1081, %c0_354, %c0_355] : memref<8x8x64xf32, #tpu.memory_space<vmem>>, vector<1x8x64xf32>
    %1083 = vector.shape_cast %1082 : vector<1x8x64xf32> to vector<8x64xf32>
    %cst_356 = arith.constant dense<0.000000e+00> : vector<8x192xf32>
    %1084 = tpu.matmul %1060, %957, %cst_356 {dimension_numbers = #tpu.dot_dimension_numbers<[1], [0], [0], [1], [0, 0, 1, 1], [], []>} : vector<8x64xf32>, vector<64x192xf32>, vector<8x192xf32> -> vector<8x192xf32>
    %1085 = vector.extract_strided_slice %1080 {offsets = [0, 0], sizes = [8, 64], strides = [1, 1]} : vector<8x192xf32> to vector<8x64xf32>
    %1086 = vector.extract_strided_slice %1084 {offsets = [0, 0], sizes = [8, 64], strides = [1, 1]} : vector<8x192xf32> to vector<8x64xf32>
    %1087 = arith.addf %1085, %1086 : vector<8x64xf32>
    %1088 = arith.negf %1087 : vector<8x64xf32>
    %1089 = math.exp %1088 : vector<8x64xf32>
    %cst_357 = arith.constant 1.000000e+00 : f32
    %1090 = vector.broadcast %cst_357 : f32 to vector<8x64xf32>
    %1091 = arith.addf %1090, %1089 : vector<8x64xf32>
    %1092 = arith.divf %1090, %1091 : vector<8x64xf32>
    %1093 = vector.extract_strided_slice %1080 {offsets = [0, 64], sizes = [8, 64], strides = [1, 1]} : vector<8x192xf32> to vector<8x64xf32>
    %1094 = vector.extract_strided_slice %1084 {offsets = [0, 64], sizes = [8, 64], strides = [1, 1]} : vector<8x192xf32> to vector<8x64xf32>
    %1095 = arith.addf %1093, %1094 : vector<8x64xf32>
    %1096 = arith.negf %1095 : vector<8x64xf32>
    %1097 = math.exp %1096 : vector<8x64xf32>
    %cst_358 = arith.constant 1.000000e+00 : f32
    %1098 = vector.broadcast %cst_358 : f32 to vector<8x64xf32>
    %1099 = arith.addf %1098, %1097 : vector<8x64xf32>
    %1100 = arith.divf %1098, %1099 : vector<8x64xf32>
    %1101 = vector.extract_strided_slice %1080 {offsets = [0, 128], sizes = [8, 64], strides = [1, 1]} : vector<8x192xf32> to vector<8x64xf32>
    %1102 = vector.extract_strided_slice %1084 {offsets = [0, 128], sizes = [8, 64], strides = [1, 1]} : vector<8x192xf32> to vector<8x64xf32>
    %1103 = vector.broadcast %959 : vector<1x64xf32> to vector<8x64xf32>
    %1104 = arith.addf %1102, %1103 : vector<8x64xf32>
    %1105 = arith.mulf %1092, %1104 : vector<8x64xf32>
    %1106 = arith.addf %1101, %1105 : vector<8x64xf32>
    %1107 = math.tanh %1106 : vector<8x64xf32>
    %1108 = arith.subf %1060, %1107 : vector<8x64xf32>
    %1109 = arith.mulf %1100, %1108 : vector<8x64xf32>
    %1110 = arith.addf %1107, %1109 : vector<8x64xf32>
    %1111 = arith.mulf %1083, %1110 : vector<8x64xf32>
    %cst_359 = arith.constant 1.000000e+00 : f32
    %1112 = vector.broadcast %cst_359 : f32 to vector<8x64xf32>
    %1113 = arith.subf %1112, %1083 : vector<8x64xf32>
    %1114 = arith.mulf %1113, %1060 : vector<8x64xf32>
    %1115 = arith.addf %1111, %1114 : vector<8x64xf32>
    %1116 = vector.extract_strided_slice %1111 {offsets = [0, 0], sizes = [8, 32], strides = [1, 1]} : vector<8x64xf32> to vector<8x32xf32>
    %1117 = arith.index_cast %c2_i32_348 : i32 to index
    %c0_360 = arith.constant 0 : index
    %c0_361 = arith.constant 0 : index
    %1118 = vector.load %arg15[%1117, %c0_360, %c0_361] : memref<8x8x64xf32, #tpu.memory_space<vmem>>, vector<1x8x32xf32>
    %1119 = vector.shape_cast %1118 : vector<1x8x32xf32> to vector<8x32xf32>
    %1120 = vector.shape_cast %1116 : vector<8x32xf32> to vector<1x8x32xf32>
    tpu.vector_store %arg15[%1117, %c0_360, %c0_361], %1120 {strides = array<i32>} : memref<8x8x64xf32, #tpu.memory_space<vmem>>, vector<1x8x32xf32>,
    %1121 = vector.extract_strided_slice %1111 {offsets = [0, 32], sizes = [8, 32], strides = [1, 1]} : vector<8x64xf32> to vector<8x32xf32>
    %1122 = arith.index_cast %1071 : i32 to index
    %c0_362 = arith.constant 0 : index
    %c32_363 = arith.constant 32 : index
    %1123 = vector.load %arg15[%1122, %c0_362, %c32_363] : memref<8x8x64xf32, #tpu.memory_space<vmem>>, vector<1x8x32xf32>
    %1124 = vector.shape_cast %1123 : vector<1x8x32xf32> to vector<8x32xf32>
    %1125 = vector.shape_cast %1121 : vector<8x32xf32> to vector<1x8x32xf32>
    tpu.vector_store %arg15[%1122, %c0_362, %c32_363], %1125 {strides = array<i32>} : memref<8x8x64xf32, #tpu.memory_space<vmem>>, vector<1x8x32xf32>,
    %c3_i32_364 = arith.constant 3 : i32
    %c7_i32_365 = arith.constant 7 : i32
    %1126 = arith.subi %c7_i32_365, %c3_i32_364 : i32
    %1127 = arith.index_cast %c3_i32_364 : i32 to index
    %c0_366 = arith.constant 0 : index
    %c0_367 = arith.constant 0 : index
    %1128 = vector.load %arg13[%1127, %c0_366, %c0_367] : memref<8x8x192xf32, #tpu.memory_space<vmem>>, vector<1x8x192xf32>
    %1129 = vector.shape_cast %1128 : vector<1x8x192xf32> to vector<8x192xf32>
    %1130 = arith.index_cast %1126 : i32 to index
    %c0_368 = arith.constant 0 : index
    %c0_369 = arith.constant 0 : index
    %1131 = vector.load %arg13[%1130, %c0_368, %c0_369] : memref<8x8x192xf32, #tpu.memory_space<vmem>>, vector<1x8x192xf32>
    %1132 = vector.shape_cast %1131 : vector<1x8x192xf32> to vector<8x192xf32>
    %1133 = vector.shape_cast %32 : vector<1x192xi1> to vector<1x192xi1>
    %1134 = vector.broadcast %1133 : vector<1x192xi1> to vector<8x192xi1>
    %1135 = arith.select %1134, %1129, %1132 : vector<8x192xi1>, vector<8x192xf32>
    %1136 = arith.index_cast %c3_i32_364 : i32 to index
    %c0_370 = arith.constant 0 : index
    %c0_371 = arith.constant 0 : index
    %1137 = vector.load %arg14[%1136, %c0_370, %c0_371] : memref<8x8x64xf32, #tpu.memory_space<vmem>>, vector<1x8x64xf32>
    %1138 = vector.shape_cast %1137 : vector<1x8x64xf32> to vector<8x64xf32>
    %cst_372 = arith.constant dense<0.000000e+00> : vector<8x192xf32>
    %1139 = tpu.matmul %1115, %957, %cst_372 {dimension_numbers = #tpu.dot_dimension_numbers<[1], [0], [0], [1], [0, 0, 1, 1], [], []>} : vector<8x64xf32>, vector<64x192xf32>, vector<8x192xf32> -> vector<8x192xf32>
    %1140 = vector.extract_strided_slice %1135 {offsets = [0, 0], sizes = [8, 64], strides = [1, 1]} : vector<8x192xf32> to vector<8x64xf32>
    %1141 = vector.extract_strided_slice %1139 {offsets = [0, 0], sizes = [8, 64], strides = [1, 1]} : vector<8x192xf32> to vector<8x64xf32>
    %1142 = arith.addf %1140, %1141 : vector<8x64xf32>
    %1143 = arith.negf %1142 : vector<8x64xf32>
    %1144 = math.exp %1143 : vector<8x64xf32>
    %cst_373 = arith.constant 1.000000e+00 : f32
    %1145 = vector.broadcast %cst_373 : f32 to vector<8x64xf32>
    %1146 = arith.addf %1145, %1144 : vector<8x64xf32>
    %1147 = arith.divf %1145, %1146 : vector<8x64xf32>
    %1148 = vector.extract_strided_slice %1135 {offsets = [0, 64], sizes = [8, 64], strides = [1, 1]} : vector<8x192xf32> to vector<8x64xf32>
    %1149 = vector.extract_strided_slice %1139 {offsets = [0, 64], sizes = [8, 64], strides = [1, 1]} : vector<8x192xf32> to vector<8x64xf32>
    %1150 = arith.addf %1148, %1149 : vector<8x64xf32>
    %1151 = arith.negf %1150 : vector<8x64xf32>
    %1152 = math.exp %1151 : vector<8x64xf32>
    %cst_374 = arith.constant 1.000000e+00 : f32
    %1153 = vector.broadcast %cst_374 : f32 to vector<8x64xf32>
    %1154 = arith.addf %1153, %1152 : vector<8x64xf32>
    %1155 = arith.divf %1153, %1154 : vector<8x64xf32>
    %1156 = vector.extract_strided_slice %1135 {offsets = [0, 128], sizes = [8, 64], strides = [1, 1]} : vector<8x192xf32> to vector<8x64xf32>
    %1157 = vector.extract_strided_slice %1139 {offsets = [0, 128], sizes = [8, 64], strides = [1, 1]} : vector<8x192xf32> to vector<8x64xf32>
    %1158 = vector.broadcast %959 : vector<1x64xf32> to vector<8x64xf32>
    %1159 = arith.addf %1157, %1158 : vector<8x64xf32>
    %1160 = arith.mulf %1147, %1159 : vector<8x64xf32>
    %1161 = arith.addf %1156, %1160 : vector<8x64xf32>
    %1162 = math.tanh %1161 : vector<8x64xf32>
    %1163 = arith.subf %1115, %1162 : vector<8x64xf32>
    %1164 = arith.mulf %1155, %1163 : vector<8x64xf32>
    %1165 = arith.addf %1162, %1164 : vector<8x64xf32>
    %1166 = arith.mulf %1138, %1165 : vector<8x64xf32>
    %cst_375 = arith.constant 1.000000e+00 : f32
    %1167 = vector.broadcast %cst_375 : f32 to vector<8x64xf32>
    %1168 = arith.subf %1167, %1138 : vector<8x64xf32>
    %1169 = arith.mulf %1168, %1115 : vector<8x64xf32>
    %1170 = arith.addf %1166, %1169 : vector<8x64xf32>
    %1171 = vector.extract_strided_slice %1166 {offsets = [0, 0], sizes = [8, 32], strides = [1, 1]} : vector<8x64xf32> to vector<8x32xf32>
    %1172 = arith.index_cast %c3_i32_364 : i32 to index
    %c0_376 = arith.constant 0 : index
    %c0_377 = arith.constant 0 : index
    %1173 = vector.load %arg15[%1172, %c0_376, %c0_377] : memref<8x8x64xf32, #tpu.memory_space<vmem>>, vector<1x8x32xf32>
    %1174 = vector.shape_cast %1173 : vector<1x8x32xf32> to vector<8x32xf32>
    %1175 = vector.shape_cast %1171 : vector<8x32xf32> to vector<1x8x32xf32>
    tpu.vector_store %arg15[%1172, %c0_376, %c0_377], %1175 {strides = array<i32>} : memref<8x8x64xf32, #tpu.memory_space<vmem>>, vector<1x8x32xf32>,
    %1176 = vector.extract_strided_slice %1166 {offsets = [0, 32], sizes = [8, 32], strides = [1, 1]} : vector<8x64xf32> to vector<8x32xf32>
    %1177 = arith.index_cast %1126 : i32 to index
    %c0_378 = arith.constant 0 : index
    %c32_379 = arith.constant 32 : index
    %1178 = vector.load %arg15[%1177, %c0_378, %c32_379] : memref<8x8x64xf32, #tpu.memory_space<vmem>>, vector<1x8x32xf32>
    %1179 = vector.shape_cast %1178 : vector<1x8x32xf32> to vector<8x32xf32>
    %1180 = vector.shape_cast %1176 : vector<8x32xf32> to vector<1x8x32xf32>
    tpu.vector_store %arg15[%1177, %c0_378, %c32_379], %1180 {strides = array<i32>} : memref<8x8x64xf32, #tpu.memory_space<vmem>>, vector<1x8x32xf32>,
    %c4_i32_380 = arith.constant 4 : i32
    %c7_i32_381 = arith.constant 7 : i32
    %1181 = arith.subi %c7_i32_381, %c4_i32_380 : i32
    %1182 = arith.index_cast %c4_i32_380 : i32 to index
    %c0_382 = arith.constant 0 : index
    %c0_383 = arith.constant 0 : index
    %1183 = vector.load %arg13[%1182, %c0_382, %c0_383] : memref<8x8x192xf32, #tpu.memory_space<vmem>>, vector<1x8x192xf32>
    %1184 = vector.shape_cast %1183 : vector<1x8x192xf32> to vector<8x192xf32>
    %1185 = arith.index_cast %1181 : i32 to index
    %c0_384 = arith.constant 0 : index
    %c0_385 = arith.constant 0 : index
    %1186 = vector.load %arg13[%1185, %c0_384, %c0_385] : memref<8x8x192xf32, #tpu.memory_space<vmem>>, vector<1x8x192xf32>
    %1187 = vector.shape_cast %1186 : vector<1x8x192xf32> to vector<8x192xf32>
    %1188 = vector.shape_cast %32 : vector<1x192xi1> to vector<1x192xi1>
    %1189 = vector.broadcast %1188 : vector<1x192xi1> to vector<8x192xi1>
    %1190 = arith.select %1189, %1184, %1187 : vector<8x192xi1>, vector<8x192xf32>
    %1191 = arith.index_cast %c4_i32_380 : i32 to index
    %c0_386 = arith.constant 0 : index
    %c0_387 = arith.constant 0 : index
    %1192 = vector.load %arg14[%1191, %c0_386, %c0_387] : memref<8x8x64xf32, #tpu.memory_space<vmem>>, vector<1x8x64xf32>
    %1193 = vector.shape_cast %1192 : vector<1x8x64xf32> to vector<8x64xf32>
    %cst_388 = arith.constant dense<0.000000e+00> : vector<8x192xf32>
    %1194 = tpu.matmul %1170, %957, %cst_388 {dimension_numbers = #tpu.dot_dimension_numbers<[1], [0], [0], [1], [0, 0, 1, 1], [], []>} : vector<8x64xf32>, vector<64x192xf32>, vector<8x192xf32> -> vector<8x192xf32>
    %1195 = vector.extract_strided_slice %1190 {offsets = [0, 0], sizes = [8, 64], strides = [1, 1]} : vector<8x192xf32> to vector<8x64xf32>
    %1196 = vector.extract_strided_slice %1194 {offsets = [0, 0], sizes = [8, 64], strides = [1, 1]} : vector<8x192xf32> to vector<8x64xf32>
    %1197 = arith.addf %1195, %1196 : vector<8x64xf32>
    %1198 = arith.negf %1197 : vector<8x64xf32>
    %1199 = math.exp %1198 : vector<8x64xf32>
    %cst_389 = arith.constant 1.000000e+00 : f32
    %1200 = vector.broadcast %cst_389 : f32 to vector<8x64xf32>
    %1201 = arith.addf %1200, %1199 : vector<8x64xf32>
    %1202 = arith.divf %1200, %1201 : vector<8x64xf32>
    %1203 = vector.extract_strided_slice %1190 {offsets = [0, 64], sizes = [8, 64], strides = [1, 1]} : vector<8x192xf32> to vector<8x64xf32>
    %1204 = vector.extract_strided_slice %1194 {offsets = [0, 64], sizes = [8, 64], strides = [1, 1]} : vector<8x192xf32> to vector<8x64xf32>
    %1205 = arith.addf %1203, %1204 : vector<8x64xf32>
    %1206 = arith.negf %1205 : vector<8x64xf32>
    %1207 = math.exp %1206 : vector<8x64xf32>
    %cst_390 = arith.constant 1.000000e+00 : f32
    %1208 = vector.broadcast %cst_390 : f32 to vector<8x64xf32>
    %1209 = arith.addf %1208, %1207 : vector<8x64xf32>
    %1210 = arith.divf %1208, %1209 : vector<8x64xf32>
    %1211 = vector.extract_strided_slice %1190 {offsets = [0, 128], sizes = [8, 64], strides = [1, 1]} : vector<8x192xf32> to vector<8x64xf32>
    %1212 = vector.extract_strided_slice %1194 {offsets = [0, 128], sizes = [8, 64], strides = [1, 1]} : vector<8x192xf32> to vector<8x64xf32>
    %1213 = vector.broadcast %959 : vector<1x64xf32> to vector<8x64xf32>
    %1214 = arith.addf %1212, %1213 : vector<8x64xf32>
    %1215 = arith.mulf %1202, %1214 : vector<8x64xf32>
    %1216 = arith.addf %1211, %1215 : vector<8x64xf32>
    %1217 = math.tanh %1216 : vector<8x64xf32>
    %1218 = arith.subf %1170, %1217 : vector<8x64xf32>
    %1219 = arith.mulf %1210, %1218 : vector<8x64xf32>
    %1220 = arith.addf %1217, %1219 : vector<8x64xf32>
    %1221 = arith.mulf %1193, %1220 : vector<8x64xf32>
    %cst_391 = arith.constant 1.000000e+00 : f32
    %1222 = vector.broadcast %cst_391 : f32 to vector<8x64xf32>
    %1223 = arith.subf %1222, %1193 : vector<8x64xf32>
    %1224 = arith.mulf %1223, %1170 : vector<8x64xf32>
    %1225 = arith.addf %1221, %1224 : vector<8x64xf32>
    %1226 = vector.extract_strided_slice %1221 {offsets = [0, 0], sizes = [8, 32], strides = [1, 1]} : vector<8x64xf32> to vector<8x32xf32>
    %1227 = arith.index_cast %c4_i32_380 : i32 to index
    %c0_392 = arith.constant 0 : index
    %c0_393 = arith.constant 0 : index
    %1228 = vector.load %arg15[%1227, %c0_392, %c0_393] : memref<8x8x64xf32, #tpu.memory_space<vmem>>, vector<1x8x32xf32>
    %1229 = vector.shape_cast %1228 : vector<1x8x32xf32> to vector<8x32xf32>
    %1230 = vector.shape_cast %1226 : vector<8x32xf32> to vector<1x8x32xf32>
    tpu.vector_store %arg15[%1227, %c0_392, %c0_393], %1230 {strides = array<i32>} : memref<8x8x64xf32, #tpu.memory_space<vmem>>, vector<1x8x32xf32>,
    %1231 = vector.extract_strided_slice %1221 {offsets = [0, 32], sizes = [8, 32], strides = [1, 1]} : vector<8x64xf32> to vector<8x32xf32>
    %1232 = arith.index_cast %1181 : i32 to index
    %c0_394 = arith.constant 0 : index
    %c32_395 = arith.constant 32 : index
    %1233 = vector.load %arg15[%1232, %c0_394, %c32_395] : memref<8x8x64xf32, #tpu.memory_space<vmem>>, vector<1x8x32xf32>
    %1234 = vector.shape_cast %1233 : vector<1x8x32xf32> to vector<8x32xf32>
    %1235 = vector.shape_cast %1231 : vector<8x32xf32> to vector<1x8x32xf32>
    tpu.vector_store %arg15[%1232, %c0_394, %c32_395], %1235 {strides = array<i32>} : memref<8x8x64xf32, #tpu.memory_space<vmem>>, vector<1x8x32xf32>,
    %c5_i32_396 = arith.constant 5 : i32
    %c7_i32_397 = arith.constant 7 : i32
    %1236 = arith.subi %c7_i32_397, %c5_i32_396 : i32
    %1237 = arith.index_cast %c5_i32_396 : i32 to index
    %c0_398 = arith.constant 0 : index
    %c0_399 = arith.constant 0 : index
    %1238 = vector.load %arg13[%1237, %c0_398, %c0_399] : memref<8x8x192xf32, #tpu.memory_space<vmem>>, vector<1x8x192xf32>
    %1239 = vector.shape_cast %1238 : vector<1x8x192xf32> to vector<8x192xf32>
    %1240 = arith.index_cast %1236 : i32 to index
    %c0_400 = arith.constant 0 : index
    %c0_401 = arith.constant 0 : index
    %1241 = vector.load %arg13[%1240, %c0_400, %c0_401] : memref<8x8x192xf32, #tpu.memory_space<vmem>>, vector<1x8x192xf32>
    %1242 = vector.shape_cast %1241 : vector<1x8x192xf32> to vector<8x192xf32>
    %1243 = vector.shape_cast %32 : vector<1x192xi1> to vector<1x192xi1>
    %1244 = vector.broadcast %1243 : vector<1x192xi1> to vector<8x192xi1>
    %1245 = arith.select %1244, %1239, %1242 : vector<8x192xi1>, vector<8x192xf32>
    %1246 = arith.index_cast %c5_i32_396 : i32 to index
    %c0_402 = arith.constant 0 : index
    %c0_403 = arith.constant 0 : index
    %1247 = vector.load %arg14[%1246, %c0_402, %c0_403] : memref<8x8x64xf32, #tpu.memory_space<vmem>>, vector<1x8x64xf32>
    %1248 = vector.shape_cast %1247 : vector<1x8x64xf32> to vector<8x64xf32>
    %cst_404 = arith.constant dense<0.000000e+00> : vector<8x192xf32>
    %1249 = tpu.matmul %1225, %957, %cst_404 {dimension_numbers = #tpu.dot_dimension_numbers<[1], [0], [0], [1], [0, 0, 1, 1], [], []>} : vector<8x64xf32>, vector<64x192xf32>, vector<8x192xf32> -> vector<8x192xf32>
    %1250 = vector.extract_strided_slice %1245 {offsets = [0, 0], sizes = [8, 64], strides = [1, 1]} : vector<8x192xf32> to vector<8x64xf32>
    %1251 = vector.extract_strided_slice %1249 {offsets = [0, 0], sizes = [8, 64], strides = [1, 1]} : vector<8x192xf32> to vector<8x64xf32>
    %1252 = arith.addf %1250, %1251 : vector<8x64xf32>
    %1253 = arith.negf %1252 : vector<8x64xf32>
    %1254 = math.exp %1253 : vector<8x64xf32>
    %cst_405 = arith.constant 1.000000e+00 : f32
    %1255 = vector.broadcast %cst_405 : f32 to vector<8x64xf32>
    %1256 = arith.addf %1255, %1254 : vector<8x64xf32>
    %1257 = arith.divf %1255, %1256 : vector<8x64xf32>
    %1258 = vector.extract_strided_slice %1245 {offsets = [0, 64], sizes = [8, 64], strides = [1, 1]} : vector<8x192xf32> to vector<8x64xf32>
    %1259 = vector.extract_strided_slice %1249 {offsets = [0, 64], sizes = [8, 64], strides = [1, 1]} : vector<8x192xf32> to vector<8x64xf32>
    %1260 = arith.addf %1258, %1259 : vector<8x64xf32>
    %1261 = arith.negf %1260 : vector<8x64xf32>
    %1262 = math.exp %1261 : vector<8x64xf32>
    %cst_406 = arith.constant 1.000000e+00 : f32
    %1263 = vector.broadcast %cst_406 : f32 to vector<8x64xf32>
    %1264 = arith.addf %1263, %1262 : vector<8x64xf32>
    %1265 = arith.divf %1263, %1264 : vector<8x64xf32>
    %1266 = vector.extract_strided_slice %1245 {offsets = [0, 128], sizes = [8, 64], strides = [1, 1]} : vector<8x192xf32> to vector<8x64xf32>
    %1267 = vector.extract_strided_slice %1249 {offsets = [0, 128], sizes = [8, 64], strides = [1, 1]} : vector<8x192xf32> to vector<8x64xf32>
    %1268 = vector.broadcast %959 : vector<1x64xf32> to vector<8x64xf32>
    %1269 = arith.addf %1267, %1268 : vector<8x64xf32>
    %1270 = arith.mulf %1257, %1269 : vector<8x64xf32>
    %1271 = arith.addf %1266, %1270 : vector<8x64xf32>
    %1272 = math.tanh %1271 : vector<8x64xf32>
    %1273 = arith.subf %1225, %1272 : vector<8x64xf32>
    %1274 = arith.mulf %1265, %1273 : vector<8x64xf32>
    %1275 = arith.addf %1272, %1274 : vector<8x64xf32>
    %1276 = arith.mulf %1248, %1275 : vector<8x64xf32>
    %cst_407 = arith.constant 1.000000e+00 : f32
    %1277 = vector.broadcast %cst_407 : f32 to vector<8x64xf32>
    %1278 = arith.subf %1277, %1248 : vector<8x64xf32>
    %1279 = arith.mulf %1278, %1225 : vector<8x64xf32>
    %1280 = arith.addf %1276, %1279 : vector<8x64xf32>
    %1281 = vector.extract_strided_slice %1276 {offsets = [0, 0], sizes = [8, 32], strides = [1, 1]} : vector<8x64xf32> to vector<8x32xf32>
    %1282 = arith.index_cast %c5_i32_396 : i32 to index
    %c0_408 = arith.constant 0 : index
    %c0_409 = arith.constant 0 : index
    %1283 = vector.load %arg15[%1282, %c0_408, %c0_409] : memref<8x8x64xf32, #tpu.memory_space<vmem>>, vector<1x8x32xf32>
    %1284 = vector.shape_cast %1283 : vector<1x8x32xf32> to vector<8x32xf32>
    %1285 = vector.shape_cast %1281 : vector<8x32xf32> to vector<1x8x32xf32>
    tpu.vector_store %arg15[%1282, %c0_408, %c0_409], %1285 {strides = array<i32>} : memref<8x8x64xf32, #tpu.memory_space<vmem>>, vector<1x8x32xf32>,
    %1286 = vector.extract_strided_slice %1276 {offsets = [0, 32], sizes = [8, 32], strides = [1, 1]} : vector<8x64xf32> to vector<8x32xf32>
    %1287 = arith.index_cast %1236 : i32 to index
    %c0_410 = arith.constant 0 : index
    %c32_411 = arith.constant 32 : index
    %1288 = vector.load %arg15[%1287, %c0_410, %c32_411] : memref<8x8x64xf32, #tpu.memory_space<vmem>>, vector<1x8x32xf32>
    %1289 = vector.shape_cast %1288 : vector<1x8x32xf32> to vector<8x32xf32>
    %1290 = vector.shape_cast %1286 : vector<8x32xf32> to vector<1x8x32xf32>
    tpu.vector_store %arg15[%1287, %c0_410, %c32_411], %1290 {strides = array<i32>} : memref<8x8x64xf32, #tpu.memory_space<vmem>>, vector<1x8x32xf32>,
    %c6_i32_412 = arith.constant 6 : i32
    %c7_i32_413 = arith.constant 7 : i32
    %1291 = arith.subi %c7_i32_413, %c6_i32_412 : i32
    %1292 = arith.index_cast %c6_i32_412 : i32 to index
    %c0_414 = arith.constant 0 : index
    %c0_415 = arith.constant 0 : index
    %1293 = vector.load %arg13[%1292, %c0_414, %c0_415] : memref<8x8x192xf32, #tpu.memory_space<vmem>>, vector<1x8x192xf32>
    %1294 = vector.shape_cast %1293 : vector<1x8x192xf32> to vector<8x192xf32>
    %1295 = arith.index_cast %1291 : i32 to index
    %c0_416 = arith.constant 0 : index
    %c0_417 = arith.constant 0 : index
    %1296 = vector.load %arg13[%1295, %c0_416, %c0_417] : memref<8x8x192xf32, #tpu.memory_space<vmem>>, vector<1x8x192xf32>
    %1297 = vector.shape_cast %1296 : vector<1x8x192xf32> to vector<8x192xf32>
    %1298 = vector.shape_cast %32 : vector<1x192xi1> to vector<1x192xi1>
    %1299 = vector.broadcast %1298 : vector<1x192xi1> to vector<8x192xi1>
    %1300 = arith.select %1299, %1294, %1297 : vector<8x192xi1>, vector<8x192xf32>
    %1301 = arith.index_cast %c6_i32_412 : i32 to index
    %c0_418 = arith.constant 0 : index
    %c0_419 = arith.constant 0 : index
    %1302 = vector.load %arg14[%1301, %c0_418, %c0_419] : memref<8x8x64xf32, #tpu.memory_space<vmem>>, vector<1x8x64xf32>
    %1303 = vector.shape_cast %1302 : vector<1x8x64xf32> to vector<8x64xf32>
    %cst_420 = arith.constant dense<0.000000e+00> : vector<8x192xf32>
    %1304 = tpu.matmul %1280, %957, %cst_420 {dimension_numbers = #tpu.dot_dimension_numbers<[1], [0], [0], [1], [0, 0, 1, 1], [], []>} : vector<8x64xf32>, vector<64x192xf32>, vector<8x192xf32> -> vector<8x192xf32>
    %1305 = vector.extract_strided_slice %1300 {offsets = [0, 0], sizes = [8, 64], strides = [1, 1]} : vector<8x192xf32> to vector<8x64xf32>
    %1306 = vector.extract_strided_slice %1304 {offsets = [0, 0], sizes = [8, 64], strides = [1, 1]} : vector<8x192xf32> to vector<8x64xf32>
    %1307 = arith.addf %1305, %1306 : vector<8x64xf32>
    %1308 = arith.negf %1307 : vector<8x64xf32>
    %1309 = math.exp %1308 : vector<8x64xf32>
    %cst_421 = arith.constant 1.000000e+00 : f32
    %1310 = vector.broadcast %cst_421 : f32 to vector<8x64xf32>
    %1311 = arith.addf %1310, %1309 : vector<8x64xf32>
    %1312 = arith.divf %1310, %1311 : vector<8x64xf32>
    %1313 = vector.extract_strided_slice %1300 {offsets = [0, 64], sizes = [8, 64], strides = [1, 1]} : vector<8x192xf32> to vector<8x64xf32>
    %1314 = vector.extract_strided_slice %1304 {offsets = [0, 64], sizes = [8, 64], strides = [1, 1]} : vector<8x192xf32> to vector<8x64xf32>
    %1315 = arith.addf %1313, %1314 : vector<8x64xf32>
    %1316 = arith.negf %1315 : vector<8x64xf32>
    %1317 = math.exp %1316 : vector<8x64xf32>
    %cst_422 = arith.constant 1.000000e+00 : f32
    %1318 = vector.broadcast %cst_422 : f32 to vector<8x64xf32>
    %1319 = arith.addf %1318, %1317 : vector<8x64xf32>
    %1320 = arith.divf %1318, %1319 : vector<8x64xf32>
    %1321 = vector.extract_strided_slice %1300 {offsets = [0, 128], sizes = [8, 64], strides = [1, 1]} : vector<8x192xf32> to vector<8x64xf32>
    %1322 = vector.extract_strided_slice %1304 {offsets = [0, 128], sizes = [8, 64], strides = [1, 1]} : vector<8x192xf32> to vector<8x64xf32>
    %1323 = vector.broadcast %959 : vector<1x64xf32> to vector<8x64xf32>
    %1324 = arith.addf %1322, %1323 : vector<8x64xf32>
    %1325 = arith.mulf %1312, %1324 : vector<8x64xf32>
    %1326 = arith.addf %1321, %1325 : vector<8x64xf32>
    %1327 = math.tanh %1326 : vector<8x64xf32>
    %1328 = arith.subf %1280, %1327 : vector<8x64xf32>
    %1329 = arith.mulf %1320, %1328 : vector<8x64xf32>
    %1330 = arith.addf %1327, %1329 : vector<8x64xf32>
    %1331 = arith.mulf %1303, %1330 : vector<8x64xf32>
    %cst_423 = arith.constant 1.000000e+00 : f32
    %1332 = vector.broadcast %cst_423 : f32 to vector<8x64xf32>
    %1333 = arith.subf %1332, %1303 : vector<8x64xf32>
    %1334 = arith.mulf %1333, %1280 : vector<8x64xf32>
    %1335 = arith.addf %1331, %1334 : vector<8x64xf32>
    %1336 = vector.extract_strided_slice %1331 {offsets = [0, 0], sizes = [8, 32], strides = [1, 1]} : vector<8x64xf32> to vector<8x32xf32>
    %1337 = arith.index_cast %c6_i32_412 : i32 to index
    %c0_424 = arith.constant 0 : index
    %c0_425 = arith.constant 0 : index
    %1338 = vector.load %arg15[%1337, %c0_424, %c0_425] : memref<8x8x64xf32, #tpu.memory_space<vmem>>, vector<1x8x32xf32>
    %1339 = vector.shape_cast %1338 : vector<1x8x32xf32> to vector<8x32xf32>
    %1340 = vector.shape_cast %1336 : vector<8x32xf32> to vector<1x8x32xf32>
    tpu.vector_store %arg15[%1337, %c0_424, %c0_425], %1340 {strides = array<i32>} : memref<8x8x64xf32, #tpu.memory_space<vmem>>, vector<1x8x32xf32>,
    %1341 = vector.extract_strided_slice %1331 {offsets = [0, 32], sizes = [8, 32], strides = [1, 1]} : vector<8x64xf32> to vector<8x32xf32>
    %1342 = arith.index_cast %1291 : i32 to index
    %c0_426 = arith.constant 0 : index
    %c32_427 = arith.constant 32 : index
    %1343 = vector.load %arg15[%1342, %c0_426, %c32_427] : memref<8x8x64xf32, #tpu.memory_space<vmem>>, vector<1x8x32xf32>
    %1344 = vector.shape_cast %1343 : vector<1x8x32xf32> to vector<8x32xf32>
    %1345 = vector.shape_cast %1341 : vector<8x32xf32> to vector<1x8x32xf32>
    tpu.vector_store %arg15[%1342, %c0_426, %c32_427], %1345 {strides = array<i32>} : memref<8x8x64xf32, #tpu.memory_space<vmem>>, vector<1x8x32xf32>,
    %c7_i32_428 = arith.constant 7 : i32
    %c7_i32_429 = arith.constant 7 : i32
    %1346 = arith.subi %c7_i32_429, %c7_i32_428 : i32
    %1347 = arith.index_cast %c7_i32_428 : i32 to index
    %c0_430 = arith.constant 0 : index
    %c0_431 = arith.constant 0 : index
    %1348 = vector.load %arg13[%1347, %c0_430, %c0_431] : memref<8x8x192xf32, #tpu.memory_space<vmem>>, vector<1x8x192xf32>
    %1349 = vector.shape_cast %1348 : vector<1x8x192xf32> to vector<8x192xf32>
    %1350 = arith.index_cast %1346 : i32 to index
    %c0_432 = arith.constant 0 : index
    %c0_433 = arith.constant 0 : index
    %1351 = vector.load %arg13[%1350, %c0_432, %c0_433] : memref<8x8x192xf32, #tpu.memory_space<vmem>>, vector<1x8x192xf32>
    %1352 = vector.shape_cast %1351 : vector<1x8x192xf32> to vector<8x192xf32>
    %1353 = vector.shape_cast %32 : vector<1x192xi1> to vector<1x192xi1>
    %1354 = vector.broadcast %1353 : vector<1x192xi1> to vector<8x192xi1>
    %1355 = arith.select %1354, %1349, %1352 : vector<8x192xi1>, vector<8x192xf32>
    %1356 = arith.index_cast %c7_i32_428 : i32 to index
    %c0_434 = arith.constant 0 : index
    %c0_435 = arith.constant 0 : index
    %1357 = vector.load %arg14[%1356, %c0_434, %c0_435] : memref<8x8x64xf32, #tpu.memory_space<vmem>>, vector<1x8x64xf32>
    %1358 = vector.shape_cast %1357 : vector<1x8x64xf32> to vector<8x64xf32>
    %cst_436 = arith.constant dense<0.000000e+00> : vector<8x192xf32>
    %1359 = tpu.matmul %1335, %957, %cst_436 {dimension_numbers = #tpu.dot_dimension_numbers<[1], [0], [0], [1], [0, 0, 1, 1], [], []>} : vector<8x64xf32>, vector<64x192xf32>, vector<8x192xf32> -> vector<8x192xf32>
    %1360 = vector.extract_strided_slice %1355 {offsets = [0, 0], sizes = [8, 64], strides = [1, 1]} : vector<8x192xf32> to vector<8x64xf32>
    %1361 = vector.extract_strided_slice %1359 {offsets = [0, 0], sizes = [8, 64], strides = [1, 1]} : vector<8x192xf32> to vector<8x64xf32>
    %1362 = arith.addf %1360, %1361 : vector<8x64xf32>
    %1363 = arith.negf %1362 : vector<8x64xf32>
    %1364 = math.exp %1363 : vector<8x64xf32>
    %cst_437 = arith.constant 1.000000e+00 : f32
    %1365 = vector.broadcast %cst_437 : f32 to vector<8x64xf32>
    %1366 = arith.addf %1365, %1364 : vector<8x64xf32>
    %1367 = arith.divf %1365, %1366 : vector<8x64xf32>
    %1368 = vector.extract_strided_slice %1355 {offsets = [0, 64], sizes = [8, 64], strides = [1, 1]} : vector<8x192xf32> to vector<8x64xf32>
    %1369 = vector.extract_strided_slice %1359 {offsets = [0, 64], sizes = [8, 64], strides = [1, 1]} : vector<8x192xf32> to vector<8x64xf32>
    %1370 = arith.addf %1368, %1369 : vector<8x64xf32>
    %1371 = arith.negf %1370 : vector<8x64xf32>
    %1372 = math.exp %1371 : vector<8x64xf32>
    %cst_438 = arith.constant 1.000000e+00 : f32
    %1373 = vector.broadcast %cst_438 : f32 to vector<8x64xf32>
    %1374 = arith.addf %1373, %1372 : vector<8x64xf32>
    %1375 = arith.divf %1373, %1374 : vector<8x64xf32>
    %1376 = vector.extract_strided_slice %1355 {offsets = [0, 128], sizes = [8, 64], strides = [1, 1]} : vector<8x192xf32> to vector<8x64xf32>
    %1377 = vector.extract_strided_slice %1359 {offsets = [0, 128], sizes = [8, 64], strides = [1, 1]} : vector<8x192xf32> to vector<8x64xf32>
    %1378 = vector.broadcast %959 : vector<1x64xf32> to vector<8x64xf32>
    %1379 = arith.addf %1377, %1378 : vector<8x64xf32>
    %1380 = arith.mulf %1367, %1379 : vector<8x64xf32>
    %1381 = arith.addf %1376, %1380 : vector<8x64xf32>
    %1382 = math.tanh %1381 : vector<8x64xf32>
    %1383 = arith.subf %1335, %1382 : vector<8x64xf32>
    %1384 = arith.mulf %1375, %1383 : vector<8x64xf32>
    %1385 = arith.addf %1382, %1384 : vector<8x64xf32>
    %1386 = arith.mulf %1358, %1385 : vector<8x64xf32>
    %cst_439 = arith.constant 1.000000e+00 : f32
    %1387 = vector.broadcast %cst_439 : f32 to vector<8x64xf32>
    %1388 = arith.subf %1387, %1358 : vector<8x64xf32>
    %1389 = arith.mulf %1388, %1335 : vector<8x64xf32>
    %1390 = arith.addf %1386, %1389 : vector<8x64xf32>
    %1391 = vector.extract_strided_slice %1386 {offsets = [0, 0], sizes = [8, 32], strides = [1, 1]} : vector<8x64xf32> to vector<8x32xf32>
    %1392 = arith.index_cast %c7_i32_428 : i32 to index
    %c0_440 = arith.constant 0 : index
    %c0_441 = arith.constant 0 : index
    %1393 = vector.load %arg15[%1392, %c0_440, %c0_441] : memref<8x8x64xf32, #tpu.memory_space<vmem>>, vector<1x8x32xf32>
    %1394 = vector.shape_cast %1393 : vector<1x8x32xf32> to vector<8x32xf32>
    %1395 = vector.shape_cast %1391 : vector<8x32xf32> to vector<1x8x32xf32>
    tpu.vector_store %arg15[%1392, %c0_440, %c0_441], %1395 {strides = array<i32>} : memref<8x8x64xf32, #tpu.memory_space<vmem>>, vector<1x8x32xf32>,
    %1396 = vector.extract_strided_slice %1386 {offsets = [0, 32], sizes = [8, 32], strides = [1, 1]} : vector<8x64xf32> to vector<8x32xf32>
    %1397 = arith.index_cast %1346 : i32 to index
    %c0_442 = arith.constant 0 : index
    %c32_443 = arith.constant 32 : index
    %1398 = vector.load %arg15[%1397, %c0_442, %c32_443] : memref<8x8x64xf32, #tpu.memory_space<vmem>>, vector<1x8x32xf32>
    %1399 = vector.shape_cast %1398 : vector<1x8x32xf32> to vector<8x32xf32>
    %1400 = vector.shape_cast %1396 : vector<8x32xf32> to vector<1x8x32xf32>
    tpu.vector_store %arg15[%1397, %c0_442, %c32_443], %1400 {strides = array<i32>} : memref<8x8x64xf32, #tpu.memory_space<vmem>>, vector<1x8x32xf32>,
    %c8_i32_444 = arith.constant 8 : i32
    %c0_445 = arith.constant 0 : index
    %c0_446 = arith.constant 0 : index
    %c0_447 = arith.constant 0 : index
    %1401 = vector.load %arg15[%c0_445, %c0_446, %c0_447] : memref<8x8x64xf32, #tpu.memory_space<vmem>>, vector<8x8x64xf32>
    %1402 = vector.shape_cast %1401 : vector<8x8x64xf32> to vector<64x64xf32>
    %c0_448 = arith.constant 0 : index
    %c0_449 = arith.constant 0 : index
    %1403 = vector.load %arg7[%c0_448, %c0_449] : memref<64x64xf32, #tpu.memory_space<vmem>>, vector<64x64xf32>
    %cst_450 = arith.constant dense<0.000000e+00> : vector<64x64xf32>
    %1404 = tpu.matmul %1402, %1403, %cst_450 {dimension_numbers = #tpu.dot_dimension_numbers<[1], [0], [0], [1], [0, 0, 1, 1], [], []>} : vector<64x64xf32>, vector<64x64xf32>, vector<64x64xf32> -> vector<64x64xf32>
    %c0_451 = arith.constant 0 : index
    %c0_452 = arith.constant 0 : index
    %1405 = vector.load %arg8[%c0_451, %c0_452] : memref<1x64xf32, #tpu.memory_space<vmem>>, vector<1x64xf32>
    %1406 = vector.broadcast %1405 : vector<1x64xf32> to vector<64x64xf32>
    %1407 = arith.addf %1404, %1406 : vector<64x64xf32>
    %1408 = math.tanh %1407 : vector<64x64xf32>
    %c0_453 = arith.constant 0 : index
    %c0_454 = arith.constant 0 : index
    %1409 = vector.load %arg9[%c0_453, %c0_454] : memref<64x1xf32, #tpu.memory_space<vmem>>, vector<64x1xf32>
    %cst_455 = arith.constant dense<0.000000e+00> : vector<64x1xf32>
    %1410 = tpu.matmul %1408, %1409, %cst_455 {dimension_numbers = #tpu.dot_dimension_numbers<[1], [0], [0], [1], [0, 0, 1, 1], [], []>} : vector<64x64xf32>, vector<64x1xf32>, vector<64x1xf32> -> vector<64x1xf32>
    %cst_456 = arith.constant dense<0.000000e+00> : vector<64xf32>
    %1411 = vector.multi_reduction <add>, %1402, %cst_456 [1] : vector<64x64xf32> to vector<64xf32>
    %1412 = vector.shape_cast %1411 : vector<64xf32> to vector<64x1xf32>
    %cst_457 = arith.constant 0.000000e+00 : f32
    %1413 = vector.broadcast %cst_457 : f32 to vector<64x1xf32>
    %1414 = arith.cmpf oeq, %1412, %1413 : vector<64x1xf32>
    %cst_458 = arith.constant -1.000000e+10 : f32
    %1415 = vector.broadcast %cst_458 : f32 to vector<64x1xf32>
    %1416 = arith.select %1414, %1415, %1410 : vector<64x1xi1>, vector<64x1xf32>
    %1417 = vector.shape_cast %1416 : vector<64x1xf32> to vector<8x8x1xf32>
    %cst_459 = arith.constant dense<0xFF800000> : vector<8x1xf32>
    %1418 = vector.multi_reduction <maximumf>, %1417, %cst_459 [0] : vector<8x8x1xf32> to vector<8x1xf32>
    %1419 = vector.shape_cast %1418 : vector<8x1xf32> to vector<1x8x1xf32>
    %1420 = vector.broadcast %1419 : vector<1x8x1xf32> to vector<8x8x1xf32>
    %1421 = arith.subf %1417, %1420 : vector<8x8x1xf32>
    %1422 = math.exp %1421 : vector<8x8x1xf32>
    %cst_460 = arith.constant dense<0.000000e+00> : vector<8x1xf32>
    %1423 = vector.multi_reduction <add>, %1422, %cst_460 [0] : vector<8x8x1xf32> to vector<8x1xf32>
    %1424 = vector.shape_cast %1423 : vector<8x1xf32> to vector<1x8x1xf32>
    %1425 = vector.broadcast %1424 : vector<1x8x1xf32> to vector<8x8x1xf32>
    %1426 = arith.divf %1422, %1425 : vector<8x8x1xf32>
    %1427 = vector.broadcast %1426 : vector<8x8x1xf32> to vector<8x8x64xf32>
    %1428 = arith.mulf %1427, %1401 : vector<8x8x64xf32>
    %cst_461 = arith.constant dense<0.000000e+00> : vector<8x64xf32>
    %1429 = vector.multi_reduction <add>, %1428, %cst_461 [0] : vector<8x8x64xf32> to vector<8x64xf32>
    %cst_462 = arith.constant 0.000000e+00 : f32
    %1430 = vector.broadcast %cst_462 : f32 to vector<8x64xf32>
    %1431 = arith.maximumf %1429, %1430 : vector<8x64xf32>
    %c0_463 = arith.constant 0 : index
    %c0_464 = arith.constant 0 : index
    %1432 = vector.load %arg10[%c0_463, %c0_464] : memref<64x32xf32, #tpu.memory_space<vmem>>, vector<64x32xf32>
    %cst_465 = arith.constant dense<0.000000e+00> : vector<8x32xf32>
    %1433 = tpu.matmul %1431, %1432, %cst_465 {dimension_numbers = #tpu.dot_dimension_numbers<[1], [0], [0], [1], [0, 0, 1, 1], [], []>} : vector<8x64xf32>, vector<64x32xf32>, vector<8x32xf32> -> vector<8x32xf32>
    %c0_466 = arith.constant 0 : index
    %c0_467 = arith.constant 0 : index
    %1434 = vector.load %arg11[%c0_466, %c0_467] : memref<1x32xf32, #tpu.memory_space<vmem>>, vector<1x32xf32>
    %1435 = vector.broadcast %1434 : vector<1x32xf32> to vector<8x32xf32>
    %1436 = arith.addf %1433, %1435 : vector<8x32xf32>
    %c0_468 = arith.constant 0 : index
    %c0_469 = arith.constant 0 : index
    %1437 = vector.load %arg12[%c0_468, %c0_469] : memref<8x32xf32, #tpu.memory_space<vmem>>, vector<8x32xf32>
    tpu.vector_store %arg12[%c0_468, %c0_469], %1436 {strides = array<i32>} : memref<8x32xf32, #tpu.memory_space<vmem>>, vector<8x32xf32>,
    return
  }
  func.func @transform_0(%arg0: i32) -> (i32, i32, i32) {
    %c0_i32 = arith.constant 0 : i32
    %c0_i32_0 = arith.constant 0 : i32
    %c0_i32_1 = arith.constant 0 : i32
    return %c0_i32, %arg0, %c0_i32_0 : i32, i32, i32
  }
  func.func @transform_1(%arg0: i32) -> (i32, i32) {
    %c0_i32 = arith.constant 0 : i32
    %c0_i32_0 = arith.constant 0 : i32
    return %arg0, %c0_i32 : i32, i32
  }
  func.func @transform_2(%arg0: i32) -> (i32, i32, i32) {
    %c0_i32 = arith.constant 0 : i32
    %c0_i32_0 = arith.constant 0 : i32
    %c0_i32_1 = arith.constant 0 : i32
    %c0_i32_2 = arith.constant 0 : i32
    return %c0_i32, %c0_i32_0, %c0_i32_1 : i32, i32, i32
  }
  func.func @transform_3(%arg0: i32) -> (i32, i32, i32) {
    %c0_i32 = arith.constant 0 : i32
    %c0_i32_0 = arith.constant 0 : i32
    %c0_i32_1 = arith.constant 0 : i32
    %c0_i32_2 = arith.constant 0 : i32
    return %c0_i32, %c0_i32_0, %c0_i32_1 : i32, i32, i32
  }
  func.func @transform_4(%arg0: i32) -> (i32, i32, i32) {
    %c0_i32 = arith.constant 0 : i32
    %c0_i32_0 = arith.constant 0 : i32
    %c0_i32_1 = arith.constant 0 : i32
    %c0_i32_2 = arith.constant 0 : i32
    return %c0_i32, %c0_i32_0, %c0_i32_1 : i32, i32, i32
  }
  func.func @transform_5(%arg0: i32) -> (i32, i32, i32) {
    %c0_i32 = arith.constant 0 : i32
    %c0_i32_0 = arith.constant 0 : i32
    %c0_i32_1 = arith.constant 0 : i32
    %c0_i32_2 = arith.constant 0 : i32
    return %c0_i32, %c0_i32_0, %c0_i32_1 : i32, i32, i32
  }
  func.func @transform_6(%arg0: i32) -> (i32, i32) {
    %c0_i32 = arith.constant 0 : i32
    %c0_i32_0 = arith.constant 0 : i32
    %c0_i32_1 = arith.constant 0 : i32
    return %c0_i32, %c0_i32_0 : i32, i32
  }
  func.func @transform_7(%arg0: i32) -> (i32, i32) {
    %c0_i32 = arith.constant 0 : i32
    %c0_i32_0 = arith.constant 0 : i32
    %c0_i32_1 = arith.constant 0 : i32
    return %c0_i32, %c0_i32_0 : i32, i32
  }
  func.func @transform_8(%arg0: i32) -> (i32, i32) {
    %c0_i32 = arith.constant 0 : i32
    %c0_i32_0 = arith.constant 0 : i32
    %c0_i32_1 = arith.constant 0 : i32
    return %c0_i32, %c0_i32_0 : i32, i32
  }
  func.func @transform_9(%arg0: i32) -> (i32, i32) {
    %c0_i32 = arith.constant 0 : i32
    %c0_i32_0 = arith.constant 0 : i32
    %c0_i32_1 = arith.constant 0 : i32
    return %c0_i32, %c0_i32_0 : i32, i32
  }
  func.func @transform_10(%arg0: i32) -> (i32, i32) {
    %c0_i32 = arith.constant 0 : i32
    %c0_i32_0 = arith.constant 0 : i32
    %c0_i32_1 = arith.constant 0 : i32
    return %c0_i32, %c0_i32_0 : i32, i32
  }
  func.func @transform_11(%arg0: i32) -> (i32, i32) {
    %c0_i32 = arith.constant 0 : i32
    %c0_i32_0 = arith.constant 0 : i32
    return %arg0, %c0_i32 : i32, i32
  }
}

</mosaic_0001>

<llo_original>
// kernel: tpu_custom_call.1
$region0: #{tpu_custom_call.1}
  #allocation0 [shape = 'u32[]', space=smem, size = 0x4, offset = 0x4, fixed_abs, tag = 'smem constant byte address 0x4 - core index']
  #allocation1 [shape = 'u32[72,128]{1,0:T(1,128)}', space=vmem, size = 0x9000, scoped, tag = 'internal scratch']
  #allocation2 [shape = 'f32[8,8,192]{2,1,0:T(8,128)}', space=vmem, size = 0x10000, scoped, tag = 'scratch operand']
  #allocation3 [shape = 'f32[8,8,64]{2,1,0:T(8,128)}', space=vmem, size = 0x8000, scoped, tag = 'scratch operand']
  #allocation4 [shape = 'f32[8,8,64]{2,1,0:T(8,128)}', space=vmem, size = 0x8000, scoped, tag = 'scratch operand']
  #allocation5 [shape = 'f32[8,8,64]{2,1,0:T(8,128)}', space=vmem, size = 0x8000, scoped, tag = 'scratch operand']
  %s0 = inlined_call_operand.vmem [shape: f32[8,8,64], index: 0, kind: input, shape index: {}]
  %s1 = inlined_call_operand.vmem [shape: s32[8,1], index: 1, kind: input, shape index: {}]
  %s2 = inlined_call_operand.hbm [shape: f32[3,64,192], index: 2, kind: input, shape index: {}]
  %s3 = inlined_call_operand.vmem [shape: f32[3,1,192], index: 3, kind: input, shape index: {}]
  %s4 = inlined_call_operand.hbm [shape: f32[3,64,192], index: 4, kind: input, shape index: {}]
  %s5 = inlined_call_operand.vmem [shape: f32[3,1,64], index: 5, kind: input, shape index: {}]
  %s6 = inlined_call_operand.vmem [shape: f32[64,64], index: 6, kind: input, shape index: {}]
  %s7 = inlined_call_operand.vmem [shape: f32[1,64], index: 7, kind: input, shape index: {}]
  %s8 = inlined_call_operand.vmem [shape: f32[64,1], index: 8, kind: input, shape index: {}]
  %s9 = inlined_call_operand.vmem [shape: f32[64,32], index: 9, kind: input, shape index: {}]
  %s10 = inlined_call_operand.vmem [shape: f32[1,32], index: 10, kind: input, shape index: {}]
  %s11 = inlined_call_operand.hbm [shape: f32[8,32], index: 11, kind: output, shape index: {}]
  %s12 = sld [smem:[#allocation0]]
  $region62: #{tpu_custom_call.1} parent=0
    _
  %s14 = ssub.s32 1, %s12
  %s15 = scalar_select 0, %s14, %s12
  $region1: #{tpu_custom_call.1} parent=0
    #allocation6 [shape = 'u8[196608]{0}', space=vmem, size = 0x30000, scoped, tag = 'input window, operand 2, single buffered']
    #allocation7 [shape = 's32[1]{0}', space=sflag, size = 0x4, scoped, tag = 'scoped memory for tpu_custom_call.1']
    #allocation8 [shape = 's32[1]{0}', space=sflag, size = 0x4, scoped, tag = 'scoped memory for tpu_custom_call.1']
    #allocation9 [shape = 'u8[196608]{0}', space=vmem, size = 0x30000, scoped, tag = 'input window, operand 4, single buffered']
    #allocation10 [shape = 's32[1]{0}', space=sflag, size = 0x4, scoped, tag = 'scoped memory for tpu_custom_call.1']
    #allocation11 [shape = 'u8[4096]{0}', space=vmem, size = 0x1000, scoped, tag = 'output window, operand 0, single buffered']
    %16 = vsyncpa [#allocation7], 0
    %17 = vsyncpa [#allocation10], 0
    %18 = vsyncpa [#allocation8], 0
    // Predicated region
    $region2: #{tpu_custom_call.1} parent=1 // pred_check
      _
    $region3: #{tpu_custom_call.1} parent=1 // pred_check_branch
      %20 = sbr.rel (0) target = $region5
    $region4: #{tpu_custom_call.1} parent=1 // pred_region
      _
    $region5: #{tpu_custom_call.1} parent=1 // pred_fallthru
      _
    // Predicated region
    $region6: #{tpu_custom_call.1} parent=1 // pred_check
      _
    $region7: #{tpu_custom_call.1} parent=1 // pred_check_branch
      %22 = sbr.rel (0) target = $region9
    $region8: #{tpu_custom_call.1} parent=1 // pred_region
      _
    $region9: #{tpu_custom_call.1} parent=1 // pred_fallthru
      _
    // Predicated region
    $region10: #{tpu_custom_call.1} parent=1 // pred_check
      _
    $region11: #{tpu_custom_call.1} parent=1 // pred_check_branch
      %24 = sbr.rel (0) target = $region13
    $region12: #{tpu_custom_call.1} parent=1 // pred_region
      %26 = vsyncadd [#allocation7], 0
      %s27 = sshll.u32 %s2, 4
      %s28 = int_to_ptr.hbm [resolvable:$true] %s27
      %s29 = sshll.u32 [#allocation6], 4
      %s30 = int_to_ptr.vmem [resolvable:$true] %s29
      %35 = dma.hbm_to_vmem [thread:$0]  %s28, 6144, %s30, [#allocation7], 256, 256, 16
    $region13: #{tpu_custom_call.1} parent=1 // pred_fallthru
      _
    // Predicated region
    $region14: #{tpu_custom_call.1} parent=1 // pred_check
      _
    $region15: #{tpu_custom_call.1} parent=1 // pred_check_branch
      %37 = sbr.rel (0) target = $region17
    $region16: #{tpu_custom_call.1} parent=1 // pred_region
      _
    $region17: #{tpu_custom_call.1} parent=1 // pred_fallthru
      _
    // Predicated region
    $region18: #{tpu_custom_call.1} parent=1 // pred_check
      _
    $region19: #{tpu_custom_call.1} parent=1 // pred_check_branch
      %39 = sbr.rel (0) target = $region21
    $region20: #{tpu_custom_call.1} parent=1 // pred_region
      %41 = vsyncadd [#allocation10], 0
      %s42 = sshll.u32 %s4, 4
      %s43 = int_to_ptr.hbm [resolvable:$true] %s42
      %s44 = sshll.u32 [#allocation9], 4
      %s45 = int_to_ptr.vmem [resolvable:$true] %s44
      %50 = dma.hbm_to_vmem [thread:$0]  %s43, 6144, %s45, [#allocation10], 256, 256, 16
    $region21: #{tpu_custom_call.1} parent=1 // pred_fallthru
      _
    // Predicated region
    $region22: #{tpu_custom_call.1} parent=1 // pred_check
      _
    $region23: #{tpu_custom_call.1} parent=1 // pred_check_branch
      %52 = sbr.rel (0) target = $region25
    $region24: #{tpu_custom_call.1} parent=1 // pred_region
      _
    $region25: #{tpu_custom_call.1} parent=1 // pred_fallthru
      _
    // Predicated region
    $region26: #{tpu_custom_call.1} parent=1 // pred_check
      _
    $region27: #{tpu_custom_call.1} parent=1 // pred_check_branch
      %54 = sbr.rel (0) target = $region29
    $region28: #{tpu_custom_call.1} parent=1 // pred_region
      _
    $region29: #{tpu_custom_call.1} parent=1 // pred_fallthru
      _
    // Predicated region
    $region30: #{tpu_custom_call.1} parent=1 // pred_check
      _
    $region31: #{tpu_custom_call.1} parent=1 // pred_check_branch
      %56 = sbr.rel (0) target = $region33
    $region32: #{tpu_custom_call.1} parent=1 // pred_region
      _
    $region33: #{tpu_custom_call.1} parent=1 // pred_fallthru
      _
    // Predicated region
    $region34: #{tpu_custom_call.1} parent=1 // pred_check
      _
    $region35: #{tpu_custom_call.1} parent=1 // pred_check_branch
      %58 = sbr.rel (0) target = $region37
    $region36: #{tpu_custom_call.1} parent=1 // pred_region
      _
    $region37: #{tpu_custom_call.1} parent=1 // pred_fallthru
      _
    // Predicated region
    $region38: #{tpu_custom_call.1} parent=1 // pred_check
      _
    $region39: #{tpu_custom_call.1} parent=1 // pred_check_branch
      %60 = sbr.rel (0) target = $region41
    $region40: #{tpu_custom_call.1} parent=1 // pred_region
      _
    $region41: #{tpu_custom_call.1} parent=1 // pred_fallthru
      _
    // Predicated region
    $region42: #{tpu_custom_call.1} parent=1 // pred_check
      _
    $region43: #{tpu_custom_call.1} parent=1 // pred_check_branch
      %62 = sbr.rel (0) target = $region45
    $region44: #{tpu_custom_call.1} parent=1 // pred_region
      _
    $region45: #{tpu_custom_call.1} parent=1 // pred_fallthru
      _
    // Predicated region
    $region46: #{tpu_custom_call.1} parent=1 // pred_check
      _
    $region47: #{tpu_custom_call.1} parent=1 // pred_check_branch
      %64 = sbr.rel (0) target = $region49
    $region48: #{tpu_custom_call.1} parent=1 // pred_region
      %66 = dma.done [#allocation7], 6144
    $region49: #{tpu_custom_call.1} parent=1 // pred_fallthru
      _
    // Predicated region
    $region50: #{tpu_custom_call.1} parent=1 // pred_check
      _
    $region51: #{tpu_custom_call.1} parent=1 // pred_check_branch
      %68 = sbr.rel (0) target = $region53
    $region52: #{tpu_custom_call.1} parent=1 // pred_region
      %70 = dma.done [#allocation10], 6144
    $region53: #{tpu_custom_call.1} parent=1 // pred_fallthru
      _
    %v71 = vlaneseq
    %v72 = vand.u32 %v71, 127
    %vm73 = vcmp.lt.s32.totalorder %v72, 32
    %v74 = vsel %vm73, 0, 7
    %v75 = vsel %vm73, 1, 6
    %v76 = vsel %vm73, 2, 5
    %v77 = vsel %vm73, 3, 4
    %v78 = vsel %vm73, 4, 3
    %v79 = vsel %vm73, 5, 2
    %v80 = vsel %vm73, 6, 1
    %v81 = vsel %vm73, 7, 0
    %v82 = vld [vmem:[%s1] sm:$0xff]
    %83 = vset.pattern.permute.xlu0 0
    %84 = vperm.xlu0 %83, %v82
    %v85 = vpop.permute.xlu0 %84
    %vm86 = vcmp.lt.s32.totalorder %v74, %v85
    %vm87 = vcmp.lt.s32.totalorder %v75, %v85
    %vm88 = vcmp.lt.s32.totalorder %v76, %v85
    %vm89 = vcmp.lt.s32.totalorder %v77, %v85
    %vm90 = vcmp.lt.s32.totalorder %v78, %v85
    %vm91 = vcmp.lt.s32.totalorder %v79, %v85
    %vm92 = vcmp.lt.s32.totalorder %v80, %v85
    %vm93 = vcmp.lt.s32.totalorder %v81, %v85
    %v94 = vsel %vm86, 1, 0
    %v95 = vsel %vm87, 1, 0
    %v96 = vsel %vm88, 1, 0
    %v97 = vsel %vm89, 1, 0
    %v98 = vsel %vm90, 1, 0
    %v99 = vsel %vm91, 1, 0
    %v100 = vsel %vm92, 1, 0
    %v101 = vsel %vm93, 1, 0
    %v102 = vcvt.s32.f32 %v94
    %v103 = vcvt.s32.f32 %v95
    %v104 = vcvt.s32.f32 %v96
    %v105 = vcvt.s32.f32 %v97
    %v106 = vcvt.s32.f32 %v98
    %v107 = vcvt.s32.f32 %v99
    %v108 = vcvt.s32.f32 %v100
    %v109 = vcvt.s32.f32 %v101
    %vm110 = vcmask 523264
    %111 = vst.msk [vmem:[#allocation3] sm:$0xff] %vm110, %v102
    %112 = vst.msk [vmem:[#allocation3 + $0x8] sm:$0xff] %vm110, %v103
    %113 = vst.msk [vmem:[#allocation3 + $0x10] sm:$0xff] %vm110, %v104
    %114 = vst.msk [vmem:[#allocation3 + $0x18] sm:$0xff] %vm110, %v105
    %115 = vst.msk [vmem:[#allocation3 + $0x20] sm:$0xff] %vm110, %v106
    %116 = vst.msk [vmem:[#allocation3 + $0x28] sm:$0xff] %vm110, %v107
    %117 = vst.msk [vmem:[#allocation3 + $0x30] sm:$0xff] %vm110, %v108
    %118 = vst.msk [vmem:[#allocation3 + $0x38] sm:$0xff] %vm110, %v109
    %v119 = vadd.s32 %v72, 128
    %vm120 = vcmp.lt.s32.totalorder %v72, 0
    %v121 = vsub.s32 0, %v72
    %v122 = vsel %vm120, %v121, %v72
    %v123 = vshrl.u32 %v122, 6
    %v124 = vand.u32 %v122, 63
    %v125 = vsub.s32 0, %v124
    %v126 = vsel %vm120, %v125, %v124
    %vm127 = vcmp.lt.s32.totalorder %v119, 0
    %v128 = vsub.s32 0, %v119
    %v129 = vsel %vm127, %v128, %v119
    %v130 = vshrl.u32 %v129, 6
    %v131 = vand.u32 %v129, 63
    %v132 = vsub.s32 0, %v131
    %v133 = vsel %vm127, %v132, %v131
    %vm134 = vcmp.ne.s32.totalorder %v126, 0
    %vm135 = vcmp.ne.s32.totalorder %v133, 0
    %vm136 = vcmp.lt.s32.totalorder %v126, 0
    %vm137 = vcmp.lt.s32.totalorder %v133, 0
    %vm138 = vmand %vm136, %vm134
    %vm139 = vmand %vm137, %vm135
    %v140 = vadd.s32 %v126, 64
    %v141 = vadd.s32 %v133, 64
    %v142 = vsel %vm138, %v140, %v126
    %v143 = vsel %vm139, %v141, %v133
    %vm144 = vcmp.lt.s32.totalorder %v142, 32
    %vm145 = vcmp.lt.s32.totalorder %v143, 32
    %v146 = vld [vmem:[%s0] sm:$0xff]
    %v147 = vld [vmem:[%s0 + $0x8] sm:$0xff]
    %v148 = vld [vmem:[%s0 + $0x10] sm:$0xff]
    %v149 = vld [vmem:[%s0 + $0x18] sm:$0xff]
    %v150 = vld [vmem:[%s0 + $0x20] sm:$0xff]
    %v151 = vld [vmem:[%s0 + $0x28] sm:$0xff]
    %v152 = vld [vmem:[%s0 + $0x30] sm:$0xff]
    %v153 = vld [vmem:[%s0 + $0x38] sm:$0xff]
    %v154 = vld [vmem:[#allocation6] sm:$0xff]
    %v155 = vld [vmem:[#allocation6 + $0x8] sm:$0xff]
    %v156 = vld [vmem:[#allocation6 + $0x10] sm:$0xff]
    %v157 = vld [vmem:[#allocation6 + $0x18] sm:$0xff]
    %v158 = vld [vmem:[#allocation6 + $0x20] sm:$0xff]
    %v159 = vld [vmem:[#allocation6 + $0x28] sm:$0xff]
    %v160 = vld [vmem:[#allocation6 + $0x30] sm:$0xff]
    %v161 = vld [vmem:[#allocation6 + $0x38] sm:$0xff]
    %v162 = vld [vmem:[#allocation6 + $0x40] sm:$0xff]
    %v163 = vld [vmem:[#allocation6 + $0x48] sm:$0xff]
    %v164 = vld [vmem:[#allocation6 + $0x50] sm:$0xff]
    %v165 = vld [vmem:[#allocation6 + $0x58] sm:$0xff]
    %v166 = vld [vmem:[#allocation6 + $0x60] sm:$0xff]
    %v167 = vld [vmem:[#allocation6 + $0x68] sm:$0xff]
    %v168 = vld [vmem:[#allocation6 + $0x70] sm:$0xff]
    %v169 = vld [vmem:[#allocation6 + $0x78] sm:$0xff]
    %v170 = vld [vmem:[%s3] sm:$0x3]
    %v172 = vperm.slane %v170, 0
    %v173 = vperm.slane %v170, 1
    %v177 = vsel %vm110, %v146, 0
    %v180 = vsel %vm110, %v147, 0
    %v183 = vsel %vm110, %v148, 0
    %v186 = vsel %vm110, %v149, 0
    %v189 = vsel %vm110, %v150, 0
    %v192 = vsel %vm110, %v151, 0
    %v195 = vsel %vm110, %v152, 0
    %v198 = vsel %vm110, %v153, 0
    %200 = vmatpush.msra.mxu0 0.0
    %201 = vmatpush.msra.mxu0 0.0
    %202 = vmatpush.msra.mxu0 0.0
    %203 = vmatpush.msra.mxu0 0.0
    %204 = vmatpush.msra.mxu0 0.0
    %205 = vmatpush.msra.mxu0 0.0
    %206 = vmatpush.msra.mxu0 0.0
    %207 = vmatpush.msra.mxu0 0.0
    %208 = vmatpush.msra.mxu0 %v168
    %209 = vmatpush.msra.mxu0 %v166
    %210 = vmatpush.msra.mxu0 %v164
    %211 = vmatpush.msra.mxu0 %v162
    %212 = vmatpush.msra.mxu0 %v160
    %213 = vmatpush.msra.mxu0 %v158
    %214 = vmatpush.msra.mxu0 %v156
    %215 = vmatpush.msra.mxu0 %v154
    %216 = vmatmul.f32.gmra.mxu0 %v177
    %v217 = vpop.f32.mrf.mxu0
    %v218 = vadd.f32 %v172, %v217
    %219 = vmatmul.f32.gmra.mxu0 %v180
    %v220 = vpop.f32.mrf.mxu0
    %v221 = vadd.f32 %v172, %v220
    %222 = vmatmul.f32.gmra.mxu0 %v183
    %v223 = vpop.f32.mrf.mxu0
    %v224 = vadd.f32 %v172, %v223
    %225 = vmatmul.f32.gmra.mxu0 %v186
    %v226 = vpop.f32.mrf.mxu0
    %v227 = vadd.f32 %v172, %v226
    %228 = vmatmul.f32.gmra.mxu0 %v189
    %v229 = vpop.f32.mrf.mxu0
    %v230 = vadd.f32 %v172, %v229
    %231 = vmatmul.f32.gmra.mxu0 %v192
    %v232 = vpop.f32.mrf.mxu0
    %v233 = vadd.f32 %v172, %v232
    %234 = vmatmul.f32.gmra.mxu0 %v195
    %v235 = vpop.f32.mrf.mxu0
    %v236 = vadd.f32 %v172, %v235
    %237 = vmatmul.f32.gmra.mxu0 %v198
    %v238 = vpop.f32.mrf.mxu0
    %v239 = vadd.f32 %v172, %v238
    %240 = vdwg.mxu0
    %241 = vmatpush.msra.mxu0 0.0
    %242 = vmatpush.msra.mxu0 0.0
    %243 = vmatpush.msra.mxu0 0.0
    %244 = vmatpush.msra.mxu0 0.0
    %245 = vmatpush.msra.mxu0 0.0
    %246 = vmatpush.msra.mxu0 0.0
    %247 = vmatpush.msra.mxu0 0.0
    %248 = vmatpush.msra.mxu0 0.0
    %249 = vmatpush.msra.mxu0 %v169
    %250 = vmatpush.msra.mxu0 %v167
    %251 = vmatpush.msra.mxu0 %v165
    %252 = vmatpush.msra.mxu0 %v163
    %253 = vmatpush.msra.mxu0 %v161
    %254 = vmatpush.msra.mxu0 %v159
    %255 = vmatpush.msra.mxu0 %v157
    %256 = vmatpush.msra.mxu0 %v155
    %257 = vmatmul.f32.gmra.mxu0 %v177
    %v258 = vpop.f32.mrf.mxu0
    %v259 = vadd.f32 %v173, %v258
    %260 = vmatmul.f32.gmra.mxu0 %v180
    %v261 = vpop.f32.mrf.mxu0
    %v262 = vadd.f32 %v173, %v261
    %263 = vmatmul.f32.gmra.mxu0 %v183
    %v264 = vpop.f32.mrf.mxu0
    %v265 = vadd.f32 %v173, %v264
    %266 = vmatmul.f32.gmra.mxu0 %v186
    %v267 = vpop.f32.mrf.mxu0
    %v268 = vadd.f32 %v173, %v267
    %269 = vmatmul.f32.gmra.mxu0 %v189
    %v270 = vpop.f32.mrf.mxu0
    %v271 = vadd.f32 %v173, %v270
    %272 = vmatmul.f32.gmra.mxu0 %v192
    %v273 = vpop.f32.mrf.mxu0
    %v274 = vadd.f32 %v173, %v273
    %275 = vmatmul.f32.gmra.mxu0 %v195
    %v276 = vpop.f32.mrf.mxu0
    %v277 = vadd.f32 %v173, %v276
    %278 = vmatmul.f32.gmra.mxu0 %v198
    %v279 = vpop.f32.mrf.mxu0
    %v280 = vadd.f32 %v173, %v279
    %281 = vdwg.mxu0
    %282 = vst [vmem:[#allocation2] sm:$0xff] %v218
    %283 = vst.msk [vmem:[#allocation2 + $0x8] sm:$0xff] %vm110, %v259
    %284 = vst [vmem:[#allocation2 + $0x10] sm:$0xff] %v221
    %285 = vst.msk [vmem:[#allocation2 + $0x18] sm:$0xff] %vm110, %v262
    %286 = vst [vmem:[#allocation2 + $0x20] sm:$0xff] %v224
    %287 = vst.msk [vmem:[#allocation2 + $0x28] sm:$0xff] %vm110, %v265
    %288 = vst [vmem:[#allocation2 + $0x30] sm:$0xff] %v227
    %289 = vst.msk [vmem:[#allocation2 + $0x38] sm:$0xff] %vm110, %v268
    %290 = vst [vmem:[#allocation2 + $0x40] sm:$0xff] %v230
    %291 = vst.msk [vmem:[#allocation2 + $0x48] sm:$0xff] %vm110, %v271
    %292 = vst [vmem:[#allocation2 + $0x50] sm:$0xff] %v233
    %293 = vst.msk [vmem:[#allocation2 + $0x58] sm:$0xff] %vm110, %v274
    %294 = vst [vmem:[#allocation2 + $0x60] sm:$0xff] %v236
    %295 = vst.msk [vmem:[#allocation2 + $0x68] sm:$0xff] %vm110, %v277
    %296 = vst [vmem:[#allocation2 + $0x70] sm:$0xff] %v239
    %297 = vst.msk [vmem:[#allocation2 + $0x78] sm:$0xff] %vm110, %v280
    %v298 = vld [vmem:[#allocation9] sm:$0xff]
    %v299 = vld [vmem:[#allocation9 + $0x8] sm:$0xff]
    %v300 = vld [vmem:[#allocation9 + $0x10] sm:$0xff]
    %v301 = vld [vmem:[#allocation9 + $0x18] sm:$0xff]
    %v302 = vld [vmem:[#allocation9 + $0x20] sm:$0xff]
    %v303 = vld [vmem:[#allocation9 + $0x28] sm:$0xff]
    %v304 = vld [vmem:[#allocation9 + $0x30] sm:$0xff]
    %v305 = vld [vmem:[#allocation9 + $0x38] sm:$0xff]
    %v306 = vld [vmem:[#allocation9 + $0x40] sm:$0xff]
    %v307 = vld [vmem:[#allocation9 + $0x48] sm:$0xff]
    %v308 = vld [vmem:[#allocation9 + $0x50] sm:$0xff]
    %v309 = vld [vmem:[#allocation9 + $0x58] sm:$0xff]
    %v310 = vld [vmem:[#allocation9 + $0x60] sm:$0xff]
    %v311 = vld [vmem:[#allocation9 + $0x68] sm:$0xff]
    %v312 = vld [vmem:[#allocation9 + $0x70] sm:$0xff]
    %v313 = vld [vmem:[#allocation9 + $0x78] sm:$0xff]
    %v314 = vld [vmem:[%s5] sm:$0x1]
    %v315 = vld [vmem:[#allocation2] sm:$0xff]
    %v316 = vld [vmem:[#allocation2 + $0x8] sm:$0xff]
    %s317 = scalar_lea.vmem [#allocation2], 112
    %v318 = vld [vmem:[%s317] sm:$0xff]
    %v319 = vld [vmem:[%s317 + $0x8] sm:$0xff]
    %v320 = vsel %vm144, 1, 0
    %v321 = vsel %vm145, 1, 0
    %vm322 = vcmp.eq.s32.totalorder %v320, 1
    %vm323 = vcmp.eq.s32.totalorder %v321, 1
    %v324 = vsel %vm322, %v315, %v318
    %v325 = vsel %vm323, %v316, %v319
    %v326 = vld [vmem:[#allocation3] sm:$0xff]
    %v328 = vsel %vm110, 0.0, 0
    %330 = vmatpush.msra.mxu0 0.0
    %331 = vmatpush.msra.mxu0 0.0
    %332 = vmatpush.msra.mxu0 0.0
    %333 = vmatpush.msra.mxu0 0.0
    %334 = vmatpush.msra.mxu0 0.0
    %335 = vmatpush.msra.mxu0 0.0
    %336 = vmatpush.msra.mxu0 0.0
    %337 = vmatpush.msra.mxu0 0.0
    %338 = vmatpush.msra.mxu0 %v312
    %339 = vmatpush.msra.mxu0 %v310
    %340 = vmatpush.msra.mxu0 %v308
    %341 = vmatpush.msra.mxu0 %v306
    %342 = vmatpush.msra.mxu0 %v304
    %343 = vmatpush.msra.mxu0 %v302
    %344 = vmatpush.msra.mxu0 %v300
    %345 = vmatpush.msra.mxu0 %v298
    %346 = vmatmul.f32.gmra.mxu0 %v328
    %v347 = vpop.f32.mrf.mxu0
    %v348 = vadd.f32 0.0, %v347
    %349 = vdwg.mxu0
    %350 = vmatpush.msra.mxu0 0.0
    %351 = vmatpush.msra.mxu0 0.0
    %352 = vmatpush.msra.mxu0 0.0
    %353 = vmatpush.msra.mxu0 0.0
    %354 = vmatpush.msra.mxu0 0.0
    %355 = vmatpush.msra.mxu0 0.0
    %356 = vmatpush.msra.mxu0 0.0
    %357 = vmatpush.msra.mxu0 0.0
    %358 = vmatpush.msra.mxu0 %v313
    %359 = vmatpush.msra.mxu0 %v311
    %360 = vmatpush.msra.mxu0 %v309
    %361 = vmatpush.msra.mxu0 %v307
    %362 = vmatpush.msra.mxu0 %v305
    %363 = vmatpush.msra.mxu0 %v303
    %364 = vmatpush.msra.mxu0 %v301
    %365 = vmatpush.msra.mxu0 %v299
    %366 = vmatmul.f32.gmra.mxu0 %v328
    %v367 = vpop.f32.mrf.mxu0
    %v368 = vadd.f32 0.0, %v367
    %369 = vdwg.mxu0
    %v370 = vadd.f32 %v324, %v348
    %v371 = vxor.u32 %v370, 2147483648
    %v372 = vmul.f32 %v371, 1.442695
    %v373 = vpow.pop %v372
    %v374 = vadd.f32 %v373, 1.0
    %v375 = vrcp.pop %v374
    %v376 = vmul.f32 %v374, %v375
    %v377 = vsub.f32 1.0, %v376
    %v378 = vmul.f32 %v375, %v377
    %v379 = vadd.f32 %v375, %v378
    %vm380 = vweird.f32 %v374
    %vm381 = vweird.f32 %v375
    %vm382 = vmor %vm380, %vm381
    %v383 = vsel %vm382, %v375, %v379
    %v384 = vand.u32 2147483647, %v374
    %vm385 = vcmp.eq.f32.partialorder %v384, 8.507059e+37
    %v386 = vand.u32 %v374, 2147483648
    %v387 = vor.u32 1.1754944e-38, %v386
    %v388 = vsel %vm385, %v387, %v383
    %v389 = vmul.f32 1.0, %v388
    %v391 = vperm.slane %v314, 0
    %v393 = vadd.f32 %v368, %v391
    %v394 = vmul.f32 %v389, %v393
    %v395 = vadd.f32 %v325, %v394
    %v396 = vtanh.pop %v395
    %v397 = vsub.f32 0.0, %v396
    %399 = vrot.lane.b32.xlu0 %v397, 64
    %v400 = vpop.permute.xlu0 %399
    %v402 = vmul.f32 %v389, %v400
    %404 = vrot.lane.b32.xlu0 %v402, 64
    %v405 = vpop.permute.xlu0 %404
    %v407 = vadd.f32 %v396, %v405
    %v408 = vmul.f32 %v326, %v407
    %v409 = vsub.f32 1.0, %v326
    %v410 = vmul.f32 %v409, 0.0
    %v411 = vadd.f32 %v408, %v410
    %vm412 = vcmask 261120
    %413 = vst.msk [vmem:[#allocation4] sm:$0xff] %vm412, %v408
    %s414 = scalar_lea.vmem [#allocation4], 56
    %vm415 = vcmask 523520
    %416 = vst.msk [vmem:[%s414] sm:$0xff] %vm415, %v408
    %s417 = scalar_lea.vmem [#allocation2], 16
    %v418 = vld [vmem:[%s417] sm:$0xff]
    %v419 = vld [vmem:[%s417 + $0x8] sm:$0xff]
    %s420 = scalar_lea.vmem [#allocation2], 96
    %v421 = vld [vmem:[%s420] sm:$0xff]
    %v422 = vld [vmem:[%s420 + $0x8] sm:$0xff]
    %v423 = vsel %vm322, %v418, %v421
    %v424 = vsel %vm323, %v419, %v422
    %s425 = scalar_lea.vmem [#allocation3], 8
    %v426 = vld [vmem:[%s425] sm:$0xff]
    %v428 = vsel %vm110, %v411, 0
    %430 = vmatpush.msra.mxu0 0.0
    %431 = vmatpush.msra.mxu0 0.0
    %432 = vmatpush.msra.mxu0 0.0
    %433 = vmatpush.msra.mxu0 0.0
    %434 = vmatpush.msra.mxu0 0.0
    %435 = vmatpush.msra.mxu0 0.0
    %436 = vmatpush.msra.mxu0 0.0
    %437 = vmatpush.msra.mxu0 0.0
    %438 = vmatpush.msra.mxu0 %v312
    %439 = vmatpush.msra.mxu0 %v310
    %440 = vmatpush.msra.mxu0 %v308
    %441 = vmatpush.msra.mxu0 %v306
    %442 = vmatpush.msra.mxu0 %v304
    %443 = vmatpush.msra.mxu0 %v302
    %444 = vmatpush.msra.mxu0 %v300
    %445 = vmatpush.msra.mxu0 %v298
    %446 = vmatmul.f32.gmra.mxu0 %v428
    %v447 = vpop.f32.mrf.mxu0
    %v448 = vadd.f32 0.0, %v447
    %449 = vdwg.mxu0
    %450 = vmatpush.msra.mxu0 0.0
    %451 = vmatpush.msra.mxu0 0.0
    %452 = vmatpush.msra.mxu0 0.0
    %453 = vmatpush.msra.mxu0 0.0
    %454 = vmatpush.msra.mxu0 0.0
    %455 = vmatpush.msra.mxu0 0.0
    %456 = vmatpush.msra.mxu0 0.0
    %457 = vmatpush.msra.mxu0 0.0
    %458 = vmatpush.msra.mxu0 %v313
    %459 = vmatpush.msra.mxu0 %v311
    %460 = vmatpush.msra.mxu0 %v309
    %461 = vmatpush.msra.mxu0 %v307
    %462 = vmatpush.msra.mxu0 %v305
    %463 = vmatpush.msra.mxu0 %v303
    %464 = vmatpush.msra.mxu0 %v301
    %465 = vmatpush.msra.mxu0 %v299
    %466 = vmatmul.f32.gmra.mxu0 %v428
    %v467 = vpop.f32.mrf.mxu0
    %v468 = vadd.f32 0.0, %v467
    %469 = vdwg.mxu0
    %v470 = vadd.f32 %v423, %v448
    %v471 = vxor.u32 %v470, 2147483648
    %v472 = vmul.f32 %v471, 1.442695
    %v473 = vpow.pop %v472
    %v474 = vadd.f32 %v473, 1.0
    %v475 = vrcp.pop %v474
    %v476 = vmul.f32 %v474, %v475
    %v477 = vsub.f32 1.0, %v476
    %v478 = vmul.f32 %v475, %v477
    %v479 = vadd.f32 %v475, %v478
    %vm480 = vweird.f32 %v474
    %vm481 = vweird.f32 %v475
    %vm482 = vmor %vm480, %vm481
    %v483 = vsel %vm482, %v475, %v479
    %v484 = vand.u32 2147483647, %v474
    %vm485 = vcmp.eq.f32.partialorder %v484, 8.507059e+37
    %v486 = vand.u32 %v474, 2147483648
    %v487 = vor.u32 1.1754944e-38, %v486
    %v488 = vsel %vm485, %v487, %v483
    %v489 = vmul.f32 1.0, %v488
    %v490 = vadd.f32 %v468, %v391
    %v491 = vmul.f32 %v489, %v490
    %v492 = vadd.f32 %v424, %v491
    %v493 = vtanh.pop %v492
    %v494 = vsub.f32 %v411, %v493
    %496 = vrot.lane.b32.xlu0 %v494, 64
    %v497 = vpop.permute.xlu0 %496
    %v499 = vmul.f32 %v489, %v497
    %501 = vrot.lane.b32.xlu0 %v499, 64
    %v502 = vpop.permute.xlu0 %501
    %v504 = vadd.f32 %v493, %v502
    %v505 = vmul.f32 %v426, %v504
    %v506 = vsub.f32 1.0, %v426
    %v507 = vmul.f32 %v506, %v411
    %v508 = vadd.f32 %v505, %v507
    %s509 = scalar_lea.vmem [#allocation4], 8
    %510 = vst.msk [vmem:[%s509] sm:$0xff] %vm412, %v505
    %s511 = scalar_lea.vmem [#allocation4], 48
    %512 = vst.msk [vmem:[%s511] sm:$0xff] %vm415, %v505
    %s513 = scalar_lea.vmem [#allocation2], 32
    %v514 = vld [vmem:[%s513] sm:$0xff]
    %v515 = vld [vmem:[%s513 + $0x8] sm:$0xff]
    %s516 = scalar_lea.vmem [#allocation2], 80
    %v517 = vld [vmem:[%s516] sm:$0xff]
    %v518 = vld [vmem:[%s516 + $0x8] sm:$0xff]
    %v519 = vsel %vm322, %v514, %v517
    %v520 = vsel %vm323, %v515, %v518
    %s521 = scalar_lea.vmem [#allocation3], 16
    %v522 = vld [vmem:[%s521] sm:$0xff]
    %v524 = vsel %vm110, %v508, 0
    %526 = vmatpush.msra.mxu0 0.0
    %527 = vmatpush.msra.mxu0 0.0
    %528 = vmatpush.msra.mxu0 0.0
    %529 = vmatpush.msra.mxu0 0.0
    %530 = vmatpush.msra.mxu0 0.0
    %531 = vmatpush.msra.mxu0 0.0
    %532 = vmatpush.msra.mxu0 0.0
    %533 = vmatpush.msra.mxu0 0.0
    %534 = vmatpush.msra.mxu0 %v312
    %535 = vmatpush.msra.mxu0 %v310
    %536 = vmatpush.msra.mxu0 %v308
    %537 = vmatpush.msra.mxu0 %v306
    %538 = vmatpush.msra.mxu0 %v304
    %539 = vmatpush.msra.mxu0 %v302
    %540 = vmatpush.msra.mxu0 %v300
    %541 = vmatpush.msra.mxu0 %v298
    %542 = vmatmul.f32.gmra.mxu0 %v524
    %v543 = vpop.f32.mrf.mxu0
    %v544 = vadd.f32 0.0, %v543
    %545 = vdwg.mxu0
    %546 = vmatpush.msra.mxu0 0.0
    %547 = vmatpush.msra.mxu0 0.0
    %548 = vmatpush.msra.mxu0 0.0
    %549 = vmatpush.msra.mxu0 0.0
    %550 = vmatpush.msra.mxu0 0.0
    %551 = vmatpush.msra.mxu0 0.0
    %552 = vmatpush.msra.mxu0 0.0
    %553 = vmatpush.msra.mxu0 0.0
    %554 = vmatpush.msra.mxu0 %v313
    %555 = vmatpush.msra.mxu0 %v311
    %556 = vmatpush.msra.mxu0 %v309
    %557 = vmatpush.msra.mxu0 %v307
    %558 = vmatpush.msra.mxu0 %v305
    %559 = vmatpush.msra.mxu0 %v303
    %560 = vmatpush.msra.mxu0 %v301
    %561 = vmatpush.msra.mxu0 %v299
    %562 = vmatmul.f32.gmra.mxu0 %v524
    %v563 = vpop.f32.mrf.mxu0
    %v564 = vadd.f32 0.0, %v563
    %565 = vdwg.mxu0
    %v566 = vadd.f32 %v519, %v544
    %v567 = vxor.u32 %v566, 2147483648
    %v568 = vmul.f32 %v567, 1.442695
    %v569 = vpow.pop %v568
    %v570 = vadd.f32 %v569, 1.0
    %v571 = vrcp.pop %v570
    %v572 = vmul.f32 %v570, %v571
    %v573 = vsub.f32 1.0, %v572
    %v574 = vmul.f32 %v571, %v573
    %v575 = vadd.f32 %v571, %v574
    %vm576 = vweird.f32 %v570
    %vm577 = vweird.f32 %v571
    %vm578 = vmor %vm576, %vm577
    %v579 = vsel %vm578, %v571, %v575
    %v580 = vand.u32 2147483647, %v570
    %vm581 = vcmp.eq.f32.partialorder %v580, 8.507059e+37
    %v582 = vand.u32 %v570, 2147483648
    %v583 = vor.u32 1.1754944e-38, %v582
    %v584 = vsel %vm581, %v583, %v579
    %v585 = vmul.f32 1.0, %v584
    %v586 = vadd.f32 %v564, %v391
    %v587 = vmul.f32 %v585, %v586
    %v588 = vadd.f32 %v520, %v587
    %v589 = vtanh.pop %v588
    %v590 = vsub.f32 %v508, %v589
    %592 = vrot.lane.b32.xlu0 %v590, 64
    %v593 = vpop.permute.xlu0 %592
    %v595 = vmul.f32 %v585, %v593
    %597 = vrot.lane.b32.xlu0 %v595, 64
    %v598 = vpop.permute.xlu0 %597
    %v600 = vadd.f32 %v589, %v598
    %v601 = vmul.f32 %v522, %v600
    %v602 = vsub.f32 1.0, %v522
    %v603 = vmul.f32 %v602, %v508
    %v604 = vadd.f32 %v601, %v603
    %s605 = scalar_lea.vmem [#allocation4], 16
    %606 = vst.msk [vmem:[%s605] sm:$0xff] %vm412, %v601
    %s607 = scalar_lea.vmem [#allocation4], 40
    %608 = vst.msk [vmem:[%s607] sm:$0xff] %vm415, %v601
    %s609 = scalar_lea.vmem [#allocation2], 48
    %v610 = vld [vmem:[%s609] sm:$0xff]
    %v611 = vld [vmem:[%s609 + $0x8] sm:$0xff]
    %s612 = scalar_lea.vmem [#allocation2], 64
    %v613 = vld [vmem:[%s612] sm:$0xff]
    %v614 = vld [vmem:[%s612 + $0x8] sm:$0xff]
    %v615 = vsel %vm322, %v610, %v613
    %v616 = vsel %vm323, %v611, %v614
    %s617 = scalar_lea.vmem [#allocation3], 24
    %v618 = vld [vmem:[%s617] sm:$0xff]
    %v620 = vsel %vm110, %v604, 0
    %622 = vmatpush.msra.mxu0 0.0
    %623 = vmatpush.msra.mxu0 0.0
    %624 = vmatpush.msra.mxu0 0.0
    %625 = vmatpush.msra.mxu0 0.0
    %626 = vmatpush.msra.mxu0 0.0
    %627 = vmatpush.msra.mxu0 0.0
    %628 = vmatpush.msra.mxu0 0.0
    %629 = vmatpush.msra.mxu0 0.0
    %630 = vmatpush.msra.mxu0 %v312
    %631 = vmatpush.msra.mxu0 %v310
    %632 = vmatpush.msra.mxu0 %v308
    %633 = vmatpush.msra.mxu0 %v306
    %634 = vmatpush.msra.mxu0 %v304
    %635 = vmatpush.msra.mxu0 %v302
    %636 = vmatpush.msra.mxu0 %v300
    %637 = vmatpush.msra.mxu0 %v298
    %638 = vmatmul.f32.gmra.mxu0 %v620
    %v639 = vpop.f32.mrf.mxu0
    %v640 = vadd.f32 0.0, %v639
    %641 = vdwg.mxu0
    %642 = vmatpush.msra.mxu0 0.0
    %643 = vmatpush.msra.mxu0 0.0
    %644 = vmatpush.msra.mxu0 0.0
    %645 = vmatpush.msra.mxu0 0.0
    %646 = vmatpush.msra.mxu0 0.0
    %647 = vmatpush.msra.mxu0 0.0
    %648 = vmatpush.msra.mxu0 0.0
    %649 = vmatpush.msra.mxu0 0.0
    %650 = vmatpush.msra.mxu0 %v313
    %651 = vmatpush.msra.mxu0 %v311
    %652 = vmatpush.msra.mxu0 %v309
    %653 = vmatpush.msra.mxu0 %v307
    %654 = vmatpush.msra.mxu0 %v305
    %655 = vmatpush.msra.mxu0 %v303
    %656 = vmatpush.msra.mxu0 %v301
    %657 = vmatpush.msra.mxu0 %v299
    %658 = vmatmul.f32.gmra.mxu0 %v620
    %v659 = vpop.f32.mrf.mxu0
    %v660 = vadd.f32 0.0, %v659
    %661 = vdwg.mxu0
    %v662 = vadd.f32 %v615, %v640
    %v663 = vxor.u32 %v662, 2147483648
    %v664 = vmul.f32 %v663, 1.442695
    %v665 = vpow.pop %v664
    %v666 = vadd.f32 %v665, 1.0
    %v667 = vrcp.pop %v666
    %v668 = vmul.f32 %v666, %v667
    %v669 = vsub.f32 1.0, %v668
    %v670 = vmul.f32 %v667, %v669
    %v671 = vadd.f32 %v667, %v670
    %vm672 = vweird.f32 %v666
    %vm673 = vweird.f32 %v667
    %vm674 = vmor %vm672, %vm673
    %v675 = vsel %vm674, %v667, %v671
    %v676 = vand.u32 2147483647, %v666
    %vm677 = vcmp.eq.f32.partialorder %v676, 8.507059e+37
    %v678 = vand.u32 %v666, 2147483648
    %v679 = vor.u32 1.1754944e-38, %v678
    %v680 = vsel %vm677, %v679, %v675
    %v681 = vmul.f32 1.0, %v680
    %v682 = vadd.f32 %v660, %v391
    %v683 = vmul.f32 %v681, %v682
    %v684 = vadd.f32 %v616, %v683
    %v685 = vtanh.pop %v684
    %v686 = vsub.f32 %v604, %v685
    %688 = vrot.lane.b32.xlu0 %v686, 64
    %v689 = vpop.permute.xlu0 %688
    %v691 = vmul.f32 %v681, %v689
    %693 = vrot.lane.b32.xlu0 %v691, 64
    %v694 = vpop.permute.xlu0 %693
    %v696 = vadd.f32 %v685, %v694
    %v697 = vmul.f32 %v618, %v696
    %v698 = vsub.f32 1.0, %v618
    %v699 = vmul.f32 %v698, %v604
    %v700 = vadd.f32 %v697, %v699
    %s701 = scalar_lea.vmem [#allocation4], 24
    %702 = vst.msk [vmem:[%s701] sm:$0xff] %vm412, %v697
    %s703 = scalar_lea.vmem [#allocation4], 32
    %704 = vst.msk [vmem:[%s703] sm:$0xff] %vm415, %v697
    %v705 = vld [vmem:[%s612] sm:$0xff]
    %v706 = vld [vmem:[%s612 + $0x8] sm:$0xff]
    %v707 = vld [vmem:[%s609] sm:$0xff]
    %v708 = vld [vmem:[%s609 + $0x8] sm:$0xff]
    %v709 = vsel %vm322, %v705, %v707
    %v710 = vsel %vm323, %v706, %v708
    %s711 = scalar_lea.vmem [#allocation3], 32
    %v712 = vld [vmem:[%s711] sm:$0xff]
    %v714 = vsel %vm110, %v700, 0
    %716 = vmatpush.msra.mxu0 0.0
    %717 = vmatpush.msra.mxu0 0.0
    %718 = vmatpush.msra.mxu0 0.0
    %719 = vmatpush.msra.mxu0 0.0
    %720 = vmatpush.msra.mxu0 0.0
    %721 = vmatpush.msra.mxu0 0.0
    %722 = vmatpush.msra.mxu0 0.0
    %723 = vmatpush.msra.mxu0 0.0
    %724 = vmatpush.msra.mxu0 %v312
    %725 = vmatpush.msra.mxu0 %v310
    %726 = vmatpush.msra.mxu0 %v308
    %727 = vmatpush.msra.mxu0 %v306
    %728 = vmatpush.msra.mxu0 %v304
    %729 = vmatpush.msra.mxu0 %v302
    %730 = vmatpush.msra.mxu0 %v300
    %731 = vmatpush.msra.mxu0 %v298
    %732 = vmatmul.f32.gmra.mxu0 %v714
    %v733 = vpop.f32.mrf.mxu0
    %v734 = vadd.f32 0.0, %v733
    %735 = vdwg.mxu0
    %736 = vmatpush.msra.mxu0 0.0
    %737 = vmatpush.msra.mxu0 0.0
    %738 = vmatpush.msra.mxu0 0.0
    %739 = vmatpush.msra.mxu0 0.0
    %740 = vmatpush.msra.mxu0 0.0
    %741 = vmatpush.msra.mxu0 0.0
    %742 = vmatpush.msra.mxu0 0.0
    %743 = vmatpush.msra.mxu0 0.0
    %744 = vmatpush.msra.mxu0 %v313
    %745 = vmatpush.msra.mxu0 %v311
    %746 = vmatpush.msra.mxu0 %v309
    %747 = vmatpush.msra.mxu0 %v307
    %748 = vmatpush.msra.mxu0 %v305
    %749 = vmatpush.msra.mxu0 %v303
    %750 = vmatpush.msra.mxu0 %v301
    %751 = vmatpush.msra.mxu0 %v299
    %752 = vmatmul.f32.gmra.mxu0 %v714
    %v753 = vpop.f32.mrf.mxu0
    %v754 = vadd.f32 0.0, %v753
    %755 = vdwg.mxu0
    %v756 = vadd.f32 %v709, %v734
    %v757 = vxor.u32 %v756, 2147483648
    %v758 = vmul.f32 %v757, 1.442695
    %v759 = vpow.pop %v758
    %v760 = vadd.f32 %v759, 1.0
    %v761 = vrcp.pop %v760
    %v762 = vmul.f32 %v760, %v761
    %v763 = vsub.f32 1.0, %v762
    %v764 = vmul.f32 %v761, %v763
    %v765 = vadd.f32 %v761, %v764
    %vm766 = vweird.f32 %v760
    %vm767 = vweird.f32 %v761
    %vm768 = vmor %vm766, %vm767
    %v769 = vsel %vm768, %v761, %v765
    %v770 = vand.u32 2147483647, %v760
    %vm771 = vcmp.eq.f32.partialorder %v770, 8.507059e+37
    %v772 = vand.u32 %v760, 2147483648
    %v773 = vor.u32 1.1754944e-38, %v772
    %v774 = vsel %vm771, %v773, %v769
    %v775 = vmul.f32 1.0, %v774
    %v776 = vadd.f32 %v754, %v391
    %v777 = vmul.f32 %v775, %v776
    %v778 = vadd.f32 %v710, %v777
    %v779 = vtanh.pop %v778
    %v780 = vsub.f32 %v700, %v779
    %782 = vrot.lane.b32.xlu0 %v780, 64
    %v783 = vpop.permute.xlu0 %782
    %v785 = vmul.f32 %v775, %v783
    %787 = vrot.lane.b32.xlu0 %v785, 64
    %v788 = vpop.permute.xlu0 %787
    %v790 = vadd.f32 %v779, %v788
    %v791 = vmul.f32 %v712, %v790
    %v792 = vsub.f32 1.0, %v712
    %v793 = vmul.f32 %v792, %v700
    %v794 = vadd.f32 %v791, %v793
    %795 = vst.msk [vmem:[%s703] sm:$0xff] %vm412, %v791
    %796 = vst.msk [vmem:[%s701] sm:$0xff] %vm415, %v791
    %v797 = vld [vmem:[%s516] sm:$0xff]
    %v798 = vld [vmem:[%s516 + $0x8] sm:$0xff]
    %v799 = vld [vmem:[%s513] sm:$0xff]
    %v800 = vld [vmem:[%s513 + $0x8] sm:$0xff]
    %v801 = vsel %vm322, %v797, %v799
    %v802 = vsel %vm323, %v798, %v800
    %s803 = scalar_lea.vmem [#allocation3], 40
    %v804 = vld [vmem:[%s803] sm:$0xff]
    %v806 = vsel %vm110, %v794, 0
    %808 = vmatpush.msra.mxu0 0.0
    %809 = vmatpush.msra.mxu0 0.0
    %810 = vmatpush.msra.mxu0 0.0
    %811 = vmatpush.msra.mxu0 0.0
    %812 = vmatpush.msra.mxu0 0.0
    %813 = vmatpush.msra.mxu0 0.0
    %814 = vmatpush.msra.mxu0 0.0
    %815 = vmatpush.msra.mxu0 0.0
    %816 = vmatpush.msra.mxu0 %v312
    %817 = vmatpush.msra.mxu0 %v310
    %818 = vmatpush.msra.mxu0 %v308
    %819 = vmatpush.msra.mxu0 %v306
    %820 = vmatpush.msra.mxu0 %v304
    %821 = vmatpush.msra.mxu0 %v302
    %822 = vmatpush.msra.mxu0 %v300
    %823 = vmatpush.msra.mxu0 %v298
    %824 = vmatmul.f32.gmra.mxu0 %v806
    %v825 = vpop.f32.mrf.mxu0
    %v826 = vadd.f32 0.0, %v825
    %827 = vdwg.mxu0
    %828 = vmatpush.msra.mxu0 0.0
    %829 = vmatpush.msra.mxu0 0.0
    %830 = vmatpush.msra.mxu0 0.0
    %831 = vmatpush.msra.mxu0 0.0
    %832 = vmatpush.msra.mxu0 0.0
    %833 = vmatpush.msra.mxu0 0.0
    %834 = vmatpush.msra.mxu0 0.0
    %835 = vmatpush.msra.mxu0 0.0
    %836 = vmatpush.msra.mxu0 %v313
    %837 = vmatpush.msra.mxu0 %v311
    %838 = vmatpush.msra.mxu0 %v309
    %839 = vmatpush.msra.mxu0 %v307
    %840 = vmatpush.msra.mxu0 %v305
    %841 = vmatpush.msra.mxu0 %v303
    %842 = vmatpush.msra.mxu0 %v301
    %843 = vmatpush.msra.mxu0 %v299
    %844 = vmatmul.f32.gmra.mxu0 %v806
    %v845 = vpop.f32.mrf.mxu0
    %v846 = vadd.f32 0.0, %v845
    %847 = vdwg.mxu0
    %v848 = vadd.f32 %v801, %v826
    %v849 = vxor.u32 %v848, 2147483648
    %v850 = vmul.f32 %v849, 1.442695
    %v851 = vpow.pop %v850
    %v852 = vadd.f32 %v851, 1.0
    %v853 = vrcp.pop %v852
    %v854 = vmul.f32 %v852, %v853
    %v855 = vsub.f32 1.0, %v854
    %v856 = vmul.f32 %v853, %v855
    %v857 = vadd.f32 %v853, %v856
    %vm858 = vweird.f32 %v852
    %vm859 = vweird.f32 %v853
    %vm860 = vmor %vm858, %vm859
    %v861 = vsel %vm860, %v853, %v857
    %v862 = vand.u32 2147483647, %v852
    %vm863 = vcmp.eq.f32.partialorder %v862, 8.507059e+37
    %v864 = vand.u32 %v852, 2147483648
    %v865 = vor.u32 1.1754944e-38, %v864
    %v866 = vsel %vm863, %v865, %v861
    %v867 = vmul.f32 1.0, %v866
    %v868 = vadd.f32 %v846, %v391
    %v869 = vmul.f32 %v867, %v868
    %v870 = vadd.f32 %v802, %v869
    %v871 = vtanh.pop %v870
    %v872 = vsub.f32 %v794, %v871
    %874 = vrot.lane.b32.xlu0 %v872, 64
    %v875 = vpop.permute.xlu0 %874
    %v877 = vmul.f32 %v867, %v875
    %879 = vrot.lane.b32.xlu0 %v877, 64
    %v880 = vpop.permute.xlu0 %879
    %v882 = vadd.f32 %v871, %v880
    %v883 = vmul.f32 %v804, %v882
    %v884 = vsub.f32 1.0, %v804
    %v885 = vmul.f32 %v884, %v794
    %v886 = vadd.f32 %v883, %v885
    %887 = vst.msk [vmem:[%s607] sm:$0xff] %vm412, %v883
    %888 = vst.msk [vmem:[%s605] sm:$0xff] %vm415, %v883
    %v889 = vld [vmem:[%s420] sm:$0xff]
    %v890 = vld [vmem:[%s420 + $0x8] sm:$0xff]
    %v891 = vld [vmem:[%s417] sm:$0xff]
    %v892 = vld [vmem:[%s417 + $0x8] sm:$0xff]
    %v893 = vsel %vm322, %v889, %v891
    %v894 = vsel %vm323, %v890, %v892
    %s895 = scalar_lea.vmem [#allocation3], 48
    %v896 = vld [vmem:[%s895] sm:$0xff]
    %v898 = vsel %vm110, %v886, 0
    %900 = vmatpush.msra.mxu0 0.0
    %901 = vmatpush.msra.mxu0 0.0
    %902 = vmatpush.msra.mxu0 0.0
    %903 = vmatpush.msra.mxu0 0.0
    %904 = vmatpush.msra.mxu0 0.0
    %905 = vmatpush.msra.mxu0 0.0
    %906 = vmatpush.msra.mxu0 0.0
    %907 = vmatpush.msra.mxu0 0.0
    %908 = vmatpush.msra.mxu0 %v312
    %909 = vmatpush.msra.mxu0 %v310
    %910 = vmatpush.msra.mxu0 %v308
    %911 = vmatpush.msra.mxu0 %v306
    %912 = vmatpush.msra.mxu0 %v304
    %913 = vmatpush.msra.mxu0 %v302
    %914 = vmatpush.msra.mxu0 %v300
    %915 = vmatpush.msra.mxu0 %v298
    %916 = vmatmul.f32.gmra.mxu0 %v898
    %v917 = vpop.f32.mrf.mxu0
    %v918 = vadd.f32 0.0, %v917
    %919 = vdwg.mxu0
    %920 = vmatpush.msra.mxu0 0.0
    %921 = vmatpush.msra.mxu0 0.0
    %922 = vmatpush.msra.mxu0 0.0
    %923 = vmatpush.msra.mxu0 0.0
    %924 = vmatpush.msra.mxu0 0.0
    %925 = vmatpush.msra.mxu0 0.0
    %926 = vmatpush.msra.mxu0 0.0
    %927 = vmatpush.msra.mxu0 0.0
    %928 = vmatpush.msra.mxu0 %v313
    %929 = vmatpush.msra.mxu0 %v311
    %930 = vmatpush.msra.mxu0 %v309
    %931 = vmatpush.msra.mxu0 %v307
    %932 = vmatpush.msra.mxu0 %v305
    %933 = vmatpush.msra.mxu0 %v303
    %934 = vmatpush.msra.mxu0 %v301
    %935 = vmatpush.msra.mxu0 %v299
    %936 = vmatmul.f32.gmra.mxu0 %v898
    %v937 = vpop.f32.mrf.mxu0
    %v938 = vadd.f32 0.0, %v937
    %939 = vdwg.mxu0
    %v940 = vadd.f32 %v893, %v918
    %v941 = vxor.u32 %v940, 2147483648
    %v942 = vmul.f32 %v941, 1.442695
    %v943 = vpow.pop %v942
    %v944 = vadd.f32 %v943, 1.0
    %v945 = vrcp.pop %v944
    %v946 = vmul.f32 %v944, %v945
    %v947 = vsub.f32 1.0, %v946
    %v948 = vmul.f32 %v945, %v947
    %v949 = vadd.f32 %v945, %v948
    %vm950 = vweird.f32 %v944
    %vm951 = vweird.f32 %v945
    %vm952 = vmor %vm950, %vm951
    %v953 = vsel %vm952, %v945, %v949
    %v954 = vand.u32 2147483647, %v944
    %vm955 = vcmp.eq.f32.partialorder %v954, 8.507059e+37
    %v956 = vand.u32 %v944, 2147483648
    %v957 = vor.u32 1.1754944e-38, %v956
    %v958 = vsel %vm955, %v957, %v953
    %v959 = vmul.f32 1.0, %v958
    %v960 = vadd.f32 %v938, %v391
    %v961 = vmul.f32 %v959, %v960
    %v962 = vadd.f32 %v894, %v961
    %v963 = vtanh.pop %v962
    %v964 = vsub.f32 %v886, %v963
    %966 = vrot.lane.b32.xlu0 %v964, 64
    %v967 = vpop.permute.xlu0 %966
    %v969 = vmul.f32 %v959, %v967
    %971 = vrot.lane.b32.xlu0 %v969, 64
    %v972 = vpop.permute.xlu0 %971
    %v974 = vadd.f32 %v963, %v972
    %v975 = vmul.f32 %v896, %v974
    %v976 = vsub.f32 1.0, %v896
    %v977 = vmul.f32 %v976, %v886
    %v978 = vadd.f32 %v975, %v977
    %979 = vst.msk [vmem:[%s511] sm:$0xff] %vm412, %v975
    %980 = vst.msk [vmem:[%s509] sm:$0xff] %vm415, %v975
    %v981 = vld [vmem:[%s317] sm:$0xff]
    %v982 = vld [vmem:[%s317 + $0x8] sm:$0xff]
    %v983 = vld [vmem:[#allocation2] sm:$0xff]
    %v984 = vld [vmem:[#allocation2 + $0x8] sm:$0xff]
    %v985 = vsel %vm322, %v981, %v983
    %v986 = vsel %vm323, %v982, %v984
    %s987 = scalar_lea.vmem [#allocation3], 56
    %v988 = vld [vmem:[%s987] sm:$0xff]
    %v990 = vsel %vm110, %v978, 0
    %992 = vmatpush.msra.mxu0 0.0
    %993 = vmatpush.msra.mxu0 0.0
    %994 = vmatpush.msra.mxu0 0.0
    %995 = vmatpush.msra.mxu0 0.0
    %996 = vmatpush.msra.mxu0 0.0
    %997 = vmatpush.msra.mxu0 0.0
    %998 = vmatpush.msra.mxu0 0.0
    %999 = vmatpush.msra.mxu0 0.0
    %1000 = vmatpush.msra.mxu0 %v312
    %1001 = vmatpush.msra.mxu0 %v310
    %1002 = vmatpush.msra.mxu0 %v308
    %1003 = vmatpush.msra.mxu0 %v306
    %1004 = vmatpush.msra.mxu0 %v304
    %1005 = vmatpush.msra.mxu0 %v302
    %1006 = vmatpush.msra.mxu0 %v300
    %1007 = vmatpush.msra.mxu0 %v298
    %1008 = vmatmul.f32.gmra.mxu0 %v990
    %v1009 = vpop.f32.mrf.mxu0
    %v1010 = vadd.f32 0.0, %v1009
    %1011 = vdwg.mxu0
    %1012 = vmatpush.msra.mxu0 0.0
    %1013 = vmatpush.msra.mxu0 0.0
    %1014 = vmatpush.msra.mxu0 0.0
    %1015 = vmatpush.msra.mxu0 0.0
    %1016 = vmatpush.msra.mxu0 0.0
    %1017 = vmatpush.msra.mxu0 0.0
    %1018 = vmatpush.msra.mxu0 0.0
    %1019 = vmatpush.msra.mxu0 0.0
    %1020 = vmatpush.msra.mxu0 %v313
    %1021 = vmatpush.msra.mxu0 %v311
    %1022 = vmatpush.msra.mxu0 %v309
    %1023 = vmatpush.msra.mxu0 %v307
    %1024 = vmatpush.msra.mxu0 %v305
    %1025 = vmatpush.msra.mxu0 %v303
    %1026 = vmatpush.msra.mxu0 %v301
    %1027 = vmatpush.msra.mxu0 %v299
    %1028 = vmatmul.f32.gmra.mxu0 %v990
    %v1029 = vpop.f32.mrf.mxu0
    %v1030 = vadd.f32 0.0, %v1029
    %1031 = vdwg.mxu0
    %v1032 = vadd.f32 %v985, %v1010
    %v1033 = vxor.u32 %v1032, 2147483648
    %v1034 = vmul.f32 %v1033, 1.442695
    %v1035 = vpow.pop %v1034
    %v1036 = vadd.f32 %v1035, 1.0
    %v1037 = vrcp.pop %v1036
    %v1038 = vmul.f32 %v1036, %v1037
    %v1039 = vsub.f32 1.0, %v1038
    %v1040 = vmul.f32 %v1037, %v1039
    %v1041 = vadd.f32 %v1037, %v1040
    %vm1042 = vweird.f32 %v1036
    %vm1043 = vweird.f32 %v1037
    %vm1044 = vmor %vm1042, %vm1043
    %v1045 = vsel %vm1044, %v1037, %v1041
    %v1046 = vand.u32 2147483647, %v1036
    %vm1047 = vcmp.eq.f32.partialorder %v1046, 8.507059e+37
    %v1048 = vand.u32 %v1036, 2147483648
    %v1049 = vor.u32 1.1754944e-38, %v1048
    %v1050 = vsel %vm1047, %v1049, %v1045
    %v1051 = vmul.f32 1.0, %v1050
    %v1052 = vadd.f32 %v1030, %v391
    %v1053 = vmul.f32 %v1051, %v1052
    %v1054 = vadd.f32 %v986, %v1053
    %v1055 = vtanh.pop %v1054
    %v1056 = vsub.f32 %v978, %v1055
    %1058 = vrot.lane.b32.xlu0 %v1056, 64
    %v1059 = vpop.permute.xlu0 %1058
    %v1061 = vmul.f32 %v1051, %v1059
    %1063 = vrot.lane.b32.xlu0 %v1061, 64
    %v1064 = vpop.permute.xlu0 %1063
    %v1066 = vadd.f32 %v1055, %v1064
    %v1067 = vmul.f32 %v988, %v1066
    %1068 = vst.msk [vmem:[%s414] sm:$0xff] %vm412, %v1067
    %1069 = vst.msk [vmem:[#allocation4] sm:$0xff] %vm415, %v1067
    %v1070 = vld [vmem:[#allocation4] sm:$0xff]
    %v1071 = vld [vmem:[#allocation4 + $0x8] sm:$0xff]
    %v1072 = vld [vmem:[#allocation4 + $0x10] sm:$0xff]
    %v1073 = vld [vmem:[#allocation4 + $0x18] sm:$0xff]
    %v1074 = vld [vmem:[#allocation4 + $0x20] sm:$0xff]
    %v1075 = vld [vmem:[#allocation4 + $0x28] sm:$0xff]
    %v1076 = vld [vmem:[#allocation4 + $0x30] sm:$0xff]
    %v1077 = vld [vmem:[#allocation4 + $0x38] sm:$0xff]
    %s1078 = scalar_lea.vmem [#allocation6], 128
    %v1079 = vld [vmem:[%s1078] sm:$0xff]
    %v1080 = vld [vmem:[%s1078 + $0x8] sm:$0xff]
    %v1081 = vld [vmem:[%s1078 + $0x10] sm:$0xff]
    %v1082 = vld [vmem:[%s1078 + $0x18] sm:$0xff]
    %v1083 = vld [vmem:[%s1078 + $0x20] sm:$0xff]
    %v1084 = vld [vmem:[%s1078 + $0x28] sm:$0xff]
    %v1085 = vld [vmem:[%s1078 + $0x30] sm:$0xff]
    %v1086 = vld [vmem:[%s1078 + $0x38] sm:$0xff]
    %v1087 = vld [vmem:[%s1078 + $0x40] sm:$0xff]
    %v1088 = vld [vmem:[%s1078 + $0x48] sm:$0xff]
    %v1089 = vld [vmem:[%s1078 + $0x50] sm:$0xff]
    %v1090 = vld [vmem:[%s1078 + $0x58] sm:$0xff]
    %v1091 = vld [vmem:[%s1078 + $0x60] sm:$0xff]
    %v1092 = vld [vmem:[%s1078 + $0x68] sm:$0xff]
    %v1093 = vld [vmem:[%s1078 + $0x70] sm:$0xff]
    %v1094 = vld [vmem:[%s1078 + $0x78] sm:$0xff]
    %s1095 = scalar_lea.vmem %s3, 2
    %v1096 = vld [vmem:[%s1095] sm:$0x3]
    %v1098 = vperm.slane %v1096, 0
    %v1099 = vperm.slane %v1096, 1
    %v1103 = vsel %vm110, %v1070, 0
    %v1106 = vsel %vm110, %v1071, 0
    %v1109 = vsel %vm110, %v1072, 0
    %v1112 = vsel %vm110, %v1073, 0
    %v1115 = vsel %vm110, %v1074, 0
    %v1118 = vsel %vm110, %v1075, 0
    %v1121 = vsel %vm110, %v1076, 0
    %v1124 = vsel %vm110, %v1077, 0
    %1126 = vmatpush.msra.mxu0 0.0
    %1127 = vmatpush.msra.mxu0 0.0
    %1128 = vmatpush.msra.mxu0 0.0
    %1129 = vmatpush.msra.mxu0 0.0
    %1130 = vmatpush.msra.mxu0 0.0
    %1131 = vmatpush.msra.mxu0 0.0
    %1132 = vmatpush.msra.mxu0 0.0
    %1133 = vmatpush.msra.mxu0 0.0
    %1134 = vmatpush.msra.mxu0 %v1093
    %1135 = vmatpush.msra.mxu0 %v1091
    %1136 = vmatpush.msra.mxu0 %v1089
    %1137 = vmatpush.msra.mxu0 %v1087
    %1138 = vmatpush.msra.mxu0 %v1085
    %1139 = vmatpush.msra.mxu0 %v1083
    %1140 = vmatpush.msra.mxu0 %v1081
    %1141 = vmatpush.msra.mxu0 %v1079
    %1142 = vmatmul.f32.gmra.mxu0 %v1103
    %v1143 = vpop.f32.mrf.mxu0
    %v1144 = vadd.f32 %v1098, %v1143
    %1145 = vmatmul.f32.gmra.mxu0 %v1106
    %v1146 = vpop.f32.mrf.mxu0
    %v1147 = vadd.f32 %v1098, %v1146
    %1148 = vmatmul.f32.gmra.mxu0 %v1109
    %v1149 = vpop.f32.mrf.mxu0
    %v1150 = vadd.f32 %v1098, %v1149
    %1151 = vmatmul.f32.gmra.mxu0 %v1112
    %v1152 = vpop.f32.mrf.mxu0
    %v1153 = vadd.f32 %v1098, %v1152
    %1154 = vmatmul.f32.gmra.mxu0 %v1115
    %v1155 = vpop.f32.mrf.mxu0
    %v1156 = vadd.f32 %v1098, %v1155
    %1157 = vmatmul.f32.gmra.mxu0 %v1118
    %v1158 = vpop.f32.mrf.mxu0
    %v1159 = vadd.f32 %v1098, %v1158
    %1160 = vmatmul.f32.gmra.mxu0 %v1121
    %v1161 = vpop.f32.mrf.mxu0
    %v1162 = vadd.f32 %v1098, %v1161
    %1163 = vmatmul.f32.gmra.mxu0 %v1124
    %v1164 = vpop.f32.mrf.mxu0
    %v1165 = vadd.f32 %v1098, %v1164
    %1166 = vdwg.mxu0
    %1167 = vmatpush.msra.mxu0 0.0
    %1168 = vmatpush.msra.mxu0 0.0
    %1169 = vmatpush.msra.mxu0 0.0
    %1170 = vmatpush.msra.mxu0 0.0
    %1171 = vmatpush.msra.mxu0 0.0
    %1172 = vmatpush.msra.mxu0 0.0
    %1173 = vmatpush.msra.mxu0 0.0
    %1174 = vmatpush.msra.mxu0 0.0
    %1175 = vmatpush.msra.mxu0 %v1094
    %1176 = vmatpush.msra.mxu0 %v1092
    %1177 = vmatpush.msra.mxu0 %v1090
    %1178 = vmatpush.msra.mxu0 %v1088
    %1179 = vmatpush.msra.mxu0 %v1086
    %1180 = vmatpush.msra.mxu0 %v1084
    %1181 = vmatpush.msra.mxu0 %v1082
    %1182 = vmatpush.msra.mxu0 %v1080
    %1183 = vmatmul.f32.gmra.mxu0 %v1103
    %v1184 = vpop.f32.mrf.mxu0
    %v1185 = vadd.f32 %v1099, %v1184
    %1186 = vmatmul.f32.gmra.mxu0 %v1106
    %v1187 = vpop.f32.mrf.mxu0
    %v1188 = vadd.f32 %v1099, %v1187
    %1189 = vmatmul.f32.gmra.mxu0 %v1109
    %v1190 = vpop.f32.mrf.mxu0
    %v1191 = vadd.f32 %v1099, %v1190
    %1192 = vmatmul.f32.gmra.mxu0 %v1112
    %v1193 = vpop.f32.mrf.mxu0
    %v1194 = vadd.f32 %v1099, %v1193
    %1195 = vmatmul.f32.gmra.mxu0 %v1115
    %v1196 = vpop.f32.mrf.mxu0
    %v1197 = vadd.f32 %v1099, %v1196
    %1198 = vmatmul.f32.gmra.mxu0 %v1118
    %v1199 = vpop.f32.mrf.mxu0
    %v1200 = vadd.f32 %v1099, %v1199
    %1201 = vmatmul.f32.gmra.mxu0 %v1121
    %v1202 = vpop.f32.mrf.mxu0
    %v1203 = vadd.f32 %v1099, %v1202
    %1204 = vmatmul.f32.gmra.mxu0 %v1124
    %v1205 = vpop.f32.mrf.mxu0
    %v1206 = vadd.f32 %v1099, %v1205
    %1207 = vdwg.mxu0
    %1208 = vst [vmem:[#allocation2] sm:$0xff] %v1144
    %1209 = vst.msk [vmem:[#allocation2 + $0x8] sm:$0xff] %vm110, %v1185
    %1210 = vst [vmem:[#allocation2 + $0x10] sm:$0xff] %v1147
    %1211 = vst.msk [vmem:[#allocation2 + $0x18] sm:$0xff] %vm110, %v1188
    %1212 = vst [vmem:[#allocation2 + $0x20] sm:$0xff] %v1150
    %1213 = vst.msk [vmem:[#allocation2 + $0x28] sm:$0xff] %vm110, %v1191
    %1214 = vst [vmem:[#allocation2 + $0x30] sm:$0xff] %v1153
    %1215 = vst.msk [vmem:[#allocation2 + $0x38] sm:$0xff] %vm110, %v1194
    %1216 = vst [vmem:[#allocation2 + $0x40] sm:$0xff] %v1156
    %1217 = vst.msk [vmem:[#allocation2 + $0x48] sm:$0xff] %vm110, %v1197
    %1218 = vst [vmem:[#allocation2 + $0x50] sm:$0xff] %v1159
    %1219 = vst.msk [vmem:[#allocation2 + $0x58] sm:$0xff] %vm110, %v1200
    %1220 = vst [vmem:[#allocation2 + $0x60] sm:$0xff] %v1162
    %1221 = vst.msk [vmem:[#allocation2 + $0x68] sm:$0xff] %vm110, %v1203
    %1222 = vst [vmem:[#allocation2 + $0x70] sm:$0xff] %v1165
    %1223 = vst.msk [vmem:[#allocation2 + $0x78] sm:$0xff] %vm110, %v1206
    %s1224 = scalar_lea.vmem [#allocation9], 128
    %v1225 = vld [vmem:[%s1224] sm:$0xff]
    %v1226 = vld [vmem:[%s1224 + $0x8] sm:$0xff]
    %v1227 = vld [vmem:[%s1224 + $0x10] sm:$0xff]
    %v1228 = vld [vmem:[%s1224 + $0x18] sm:$0xff]
    %v1229 = vld [vmem:[%s1224 + $0x20] sm:$0xff]
    %v1230 = vld [vmem:[%s1224 + $0x28] sm:$0xff]
    %v1231 = vld [vmem:[%s1224 + $0x30] sm:$0xff]
    %v1232 = vld [vmem:[%s1224 + $0x38] sm:$0xff]
    %v1233 = vld [vmem:[%s1224 + $0x40] sm:$0xff]
    %v1234 = vld [vmem:[%s1224 + $0x48] sm:$0xff]
    %v1235 = vld [vmem:[%s1224 + $0x50] sm:$0xff]
    %v1236 = vld [vmem:[%s1224 + $0x58] sm:$0xff]
    %v1237 = vld [vmem:[%s1224 + $0x60] sm:$0xff]
    %v1238 = vld [vmem:[%s1224 + $0x68] sm:$0xff]
    %v1239 = vld [vmem:[%s1224 + $0x70] sm:$0xff]
    %v1240 = vld [vmem:[%s1224 + $0x78] sm:$0xff]
    %s1241 = scalar_lea.vmem %s5, 1
    %v1242 = vld [vmem:[%s1241] sm:$0x1]
    %v1243 = vld [vmem:[#allocation2] sm:$0xff]
    %v1244 = vld [vmem:[#allocation2 + $0x8] sm:$0xff]
    %v1245 = vld [vmem:[%s317] sm:$0xff]
    %v1246 = vld [vmem:[%s317 + $0x8] sm:$0xff]
    %v1247 = vsel %vm322, %v1243, %v1245
    %v1248 = vsel %vm323, %v1244, %v1246
    %v1249 = vld [vmem:[#allocation3] sm:$0xff]
    %1250 = vmatpush.msra.mxu0 0.0
    %1251 = vmatpush.msra.mxu0 0.0
    %1252 = vmatpush.msra.mxu0 0.0
    %1253 = vmatpush.msra.mxu0 0.0
    %1254 = vmatpush.msra.mxu0 0.0
    %1255 = vmatpush.msra.mxu0 0.0
    %1256 = vmatpush.msra.mxu0 0.0
    %1257 = vmatpush.msra.mxu0 0.0
    %1258 = vmatpush.msra.mxu0 %v1239
    %1259 = vmatpush.msra.mxu0 %v1237
    %1260 = vmatpush.msra.mxu0 %v1235
    %1261 = vmatpush.msra.mxu0 %v1233
    %1262 = vmatpush.msra.mxu0 %v1231
    %1263 = vmatpush.msra.mxu0 %v1229
    %1264 = vmatpush.msra.mxu0 %v1227
    %1265 = vmatpush.msra.mxu0 %v1225
    %1266 = vmatmul.f32.gmra.mxu0 %v328
    %v1267 = vpop.f32.mrf.mxu0
    %v1268 = vadd.f32 0.0, %v1267
    %1269 = vdwg.mxu0
    %1270 = vmatpush.msra.mxu0 0.0
    %1271 = vmatpush.msra.mxu0 0.0
    %1272 = vmatpush.msra.mxu0 0.0
    %1273 = vmatpush.msra.mxu0 0.0
    %1274 = vmatpush.msra.mxu0 0.0
    %1275 = vmatpush.msra.mxu0 0.0
    %1276 = vmatpush.msra.mxu0 0.0
    %1277 = vmatpush.msra.mxu0 0.0
    %1278 = vmatpush.msra.mxu0 %v1240
    %1279 = vmatpush.msra.mxu0 %v1238
    %1280 = vmatpush.msra.mxu0 %v1236
    %1281 = vmatpush.msra.mxu0 %v1234
    %1282 = vmatpush.msra.mxu0 %v1232
    %1283 = vmatpush.msra.mxu0 %v1230
    %1284 = vmatpush.msra.mxu0 %v1228
    %1285 = vmatpush.msra.mxu0 %v1226
    %1286 = vmatmul.f32.gmra.mxu0 %v328
    %v1287 = vpop.f32.mrf.mxu0
    %v1288 = vadd.f32 0.0, %v1287
    %1289 = vdwg.mxu0
    %v1290 = vadd.f32 %v1247, %v1268
    %v1291 = vxor.u32 %v1290, 2147483648
    %v1292 = vmul.f32 %v1291, 1.442695
    %v1293 = vpow.pop %v1292
    %v1294 = vadd.f32 %v1293, 1.0
    %v1295 = vrcp.pop %v1294
    %v1296 = vmul.f32 %v1294, %v1295
    %v1297 = vsub.f32 1.0, %v1296
    %v1298 = vmul.f32 %v1295, %v1297
    %v1299 = vadd.f32 %v1295, %v1298
    %vm1300 = vweird.f32 %v1294
    %vm1301 = vweird.f32 %v1295
    %vm1302 = vmor %vm1300, %vm1301
    %v1303 = vsel %vm1302, %v1295, %v1299
    %v1304 = vand.u32 2147483647, %v1294
    %vm1305 = vcmp.eq.f32.partialorder %v1304, 8.507059e+37
    %v1306 = vand.u32 %v1294, 2147483648
    %v1307 = vor.u32 1.1754944e-38, %v1306
    %v1308 = vsel %vm1305, %v1307, %v1303
    %v1309 = vmul.f32 1.0, %v1308
    %v1311 = vperm.slane %v1242, 0
    %v1313 = vadd.f32 %v1288, %v1311
    %v1314 = vmul.f32 %v1309, %v1313
    %v1315 = vadd.f32 %v1248, %v1314
    %v1316 = vtanh.pop %v1315
    %v1317 = vsub.f32 0.0, %v1316
    %1319 = vrot.lane.b32.xlu0 %v1317, 64
    %v1320 = vpop.permute.xlu0 %1319
    %v1322 = vmul.f32 %v1309, %v1320
    %1324 = vrot.lane.b32.xlu0 %v1322, 64
    %v1325 = vpop.permute.xlu0 %1324
    %v1327 = vadd.f32 %v1316, %v1325
    %v1328 = vmul.f32 %v1249, %v1327
    %v1329 = vsub.f32 1.0, %v1249
    %v1330 = vmul.f32 %v1329, 0.0
    %v1331 = vadd.f32 %v1328, %v1330
    %1332 = vst.msk [vmem:[#allocation5] sm:$0xff] %vm412, %v1328
    %s1333 = scalar_lea.vmem [#allocation5], 56
    %1334 = vst.msk [vmem:[%s1333] sm:$0xff] %vm415, %v1328
    %v1335 = vld [vmem:[%s417] sm:$0xff]
    %v1336 = vld [vmem:[%s417 + $0x8] sm:$0xff]
    %v1337 = vld [vmem:[%s420] sm:$0xff]
    %v1338 = vld [vmem:[%s420 + $0x8] sm:$0xff]
    %v1339 = vsel %vm322, %v1335, %v1337
    %v1340 = vsel %vm323, %v1336, %v1338
    %v1341 = vld [vmem:[%s425] sm:$0xff]
    %v1343 = vsel %vm110, %v1331, 0
    %1345 = vmatpush.msra.mxu0 0.0
    %1346 = vmatpush.msra.mxu0 0.0
    %1347 = vmatpush.msra.mxu0 0.0
    %1348 = vmatpush.msra.mxu0 0.0
    %1349 = vmatpush.msra.mxu0 0.0
    %1350 = vmatpush.msra.mxu0 0.0
    %1351 = vmatpush.msra.mxu0 0.0
    %1352 = vmatpush.msra.mxu0 0.0
    %1353 = vmatpush.msra.mxu0 %v1239
    %1354 = vmatpush.msra.mxu0 %v1237
    %1355 = vmatpush.msra.mxu0 %v1235
    %1356 = vmatpush.msra.mxu0 %v1233
    %1357 = vmatpush.msra.mxu0 %v1231
    %1358 = vmatpush.msra.mxu0 %v1229
    %1359 = vmatpush.msra.mxu0 %v1227
    %1360 = vmatpush.msra.mxu0 %v1225
    %1361 = vmatmul.f32.gmra.mxu0 %v1343
    %v1362 = vpop.f32.mrf.mxu0
    %v1363 = vadd.f32 0.0, %v1362
    %1364 = vdwg.mxu0
    %1365 = vmatpush.msra.mxu0 0.0
    %1366 = vmatpush.msra.mxu0 0.0
    %1367 = vmatpush.msra.mxu0 0.0
    %1368 = vmatpush.msra.mxu0 0.0
    %1369 = vmatpush.msra.mxu0 0.0
    %1370 = vmatpush.msra.mxu0 0.0
    %1371 = vmatpush.msra.mxu0 0.0
    %1372 = vmatpush.msra.mxu0 0.0
    %1373 = vmatpush.msra.mxu0 %v1240
    %1374 = vmatpush.msra.mxu0 %v1238
    %1375 = vmatpush.msra.mxu0 %v1236
    %1376 = vmatpush.msra.mxu0 %v1234
    %1377 = vmatpush.msra.mxu0 %v1232
    %1378 = vmatpush.msra.mxu0 %v1230
    %1379 = vmatpush.msra.mxu0 %v1228
    %1380 = vmatpush.msra.mxu0 %v1226
    %1381 = vmatmul.f32.gmra.mxu0 %v1343
    %v1382 = vpop.f32.mrf.mxu0
    %v1383 = vadd.f32 0.0, %v1382
    %1384 = vdwg.mxu0
    %v1385 = vadd.f32 %v1339, %v1363
    %v1386 = vxor.u32 %v1385, 2147483648
    %v1387 = vmul.f32 %v1386, 1.442695
    %v1388 = vpow.pop %v1387
    %v1389 = vadd.f32 %v1388, 1.0
    %v1390 = vrcp.pop %v1389
    %v1391 = vmul.f32 %v1389, %v1390
    %v1392 = vsub.f32 1.0, %v1391
    %v1393 = vmul.f32 %v1390, %v1392
    %v1394 = vadd.f32 %v1390, %v1393
    %vm1395 = vweird.f32 %v1389
    %vm1396 = vweird.f32 %v1390
    %vm1397 = vmor %vm1395, %vm1396
    %v1398 = vsel %vm1397, %v1390, %v1394
    %v1399 = vand.u32 2147483647, %v1389
    %vm1400 = vcmp.eq.f32.partialorder %v1399, 8.507059e+37
    %v1401 = vand.u32 %v1389, 2147483648
    %v1402 = vor.u32 1.1754944e-38, %v1401
    %v1403 = vsel %vm1400, %v1402, %v1398
    %v1404 = vmul.f32 1.0, %v1403
    %v1405 = vadd.f32 %v1383, %v1311
    %v1406 = vmul.f32 %v1404, %v1405
    %v1407 = vadd.f32 %v1340, %v1406
    %v1408 = vtanh.pop %v1407
    %v1409 = vsub.f32 %v1331, %v1408
    %1411 = vrot.lane.b32.xlu0 %v1409, 64
    %v1412 = vpop.permute.xlu0 %1411
    %v1414 = vmul.f32 %v1404, %v1412
    %1416 = vrot.lane.b32.xlu0 %v1414, 64
    %v1417 = vpop.permute.xlu0 %1416
    %v1419 = vadd.f32 %v1408, %v1417
    %v1420 = vmul.f32 %v1341, %v1419
    %v1421 = vsub.f32 1.0, %v1341
    %v1422 = vmul.f32 %v1421, %v1331
    %v1423 = vadd.f32 %v1420, %v1422
    %s1424 = scalar_lea.vmem [#allocation5], 8
    %1425 = vst.msk [vmem:[%s1424] sm:$0xff] %vm412, %v1420
    %s1426 = scalar_lea.vmem [#allocation5], 48
    %1427 = vst.msk [vmem:[%s1426] sm:$0xff] %vm415, %v1420
    %v1428 = vld [vmem:[%s513] sm:$0xff]
    %v1429 = vld [vmem:[%s513 + $0x8] sm:$0xff]
    %v1430 = vld [vmem:[%s516] sm:$0xff]
    %v1431 = vld [vmem:[%s516 + $0x8] sm:$0xff]
    %v1432 = vsel %vm322, %v1428, %v1430
    %v1433 = vsel %vm323, %v1429, %v1431
    %v1434 = vld [vmem:[%s521] sm:$0xff]
    %v1436 = vsel %vm110, %v1423, 0
    %1438 = vmatpush.msra.mxu0 0.0
    %1439 = vmatpush.msra.mxu0 0.0
    %1440 = vmatpush.msra.mxu0 0.0
    %1441 = vmatpush.msra.mxu0 0.0
    %1442 = vmatpush.msra.mxu0 0.0
    %1443 = vmatpush.msra.mxu0 0.0
    %1444 = vmatpush.msra.mxu0 0.0
    %1445 = vmatpush.msra.mxu0 0.0
    %1446 = vmatpush.msra.mxu0 %v1239
    %1447 = vmatpush.msra.mxu0 %v1237
    %1448 = vmatpush.msra.mxu0 %v1235
    %1449 = vmatpush.msra.mxu0 %v1233
    %1450 = vmatpush.msra.mxu0 %v1231
    %1451 = vmatpush.msra.mxu0 %v1229
    %1452 = vmatpush.msra.mxu0 %v1227
    %1453 = vmatpush.msra.mxu0 %v1225
    %1454 = vmatmul.f32.gmra.mxu0 %v1436
    %v1455 = vpop.f32.mrf.mxu0
    %v1456 = vadd.f32 0.0, %v1455
    %1457 = vdwg.mxu0
    %1458 = vmatpush.msra.mxu0 0.0
    %1459 = vmatpush.msra.mxu0 0.0
    %1460 = vmatpush.msra.mxu0 0.0
    %1461 = vmatpush.msra.mxu0 0.0
    %1462 = vmatpush.msra.mxu0 0.0
    %1463 = vmatpush.msra.mxu0 0.0
    %1464 = vmatpush.msra.mxu0 0.0
    %1465 = vmatpush.msra.mxu0 0.0
    %1466 = vmatpush.msra.mxu0 %v1240
    %1467 = vmatpush.msra.mxu0 %v1238
    %1468 = vmatpush.msra.mxu0 %v1236
    %1469 = vmatpush.msra.mxu0 %v1234
    %1470 = vmatpush.msra.mxu0 %v1232
    %1471 = vmatpush.msra.mxu0 %v1230
    %1472 = vmatpush.msra.mxu0 %v1228
    %1473 = vmatpush.msra.mxu0 %v1226
    %1474 = vmatmul.f32.gmra.mxu0 %v1436
    %v1475 = vpop.f32.mrf.mxu0
    %v1476 = vadd.f32 0.0, %v1475
    %1477 = vdwg.mxu0
    %v1478 = vadd.f32 %v1432, %v1456
    %v1479 = vxor.u32 %v1478, 2147483648
    %v1480 = vmul.f32 %v1479, 1.442695
    %v1481 = vpow.pop %v1480
    %v1482 = vadd.f32 %v1481, 1.0
    %v1483 = vrcp.pop %v1482
    %v1484 = vmul.f32 %v1482, %v1483
    %v1485 = vsub.f32 1.0, %v1484
    %v1486 = vmul.f32 %v1483, %v1485
    %v1487 = vadd.f32 %v1483, %v1486
    %vm1488 = vweird.f32 %v1482
    %vm1489 = vweird.f32 %v1483
    %vm1490 = vmor %vm1488, %vm1489
    %v1491 = vsel %vm1490, %v1483, %v1487
    %v1492 = vand.u32 2147483647, %v1482
    %vm1493 = vcmp.eq.f32.partialorder %v1492, 8.507059e+37
    %v1494 = vand.u32 %v1482, 2147483648
    %v1495 = vor.u32 1.1754944e-38, %v1494
    %v1496 = vsel %vm1493, %v1495, %v1491
    %v1497 = vmul.f32 1.0, %v1496
    %v1498 = vadd.f32 %v1476, %v1311
    %v1499 = vmul.f32 %v1497, %v1498
    %v1500 = vadd.f32 %v1433, %v1499
    %v1501 = vtanh.pop %v1500
    %v1502 = vsub.f32 %v1423, %v1501
    %1504 = vrot.lane.b32.xlu0 %v1502, 64
    %v1505 = vpop.permute.xlu0 %1504
    %v1507 = vmul.f32 %v1497, %v1505
    %1509 = vrot.lane.b32.xlu0 %v1507, 64
    %v1510 = vpop.permute.xlu0 %1509
    %v1512 = vadd.f32 %v1501, %v1510
    %v1513 = vmul.f32 %v1434, %v1512
    %v1514 = vsub.f32 1.0, %v1434
    %v1515 = vmul.f32 %v1514, %v1423
    %v1516 = vadd.f32 %v1513, %v1515
    %s1517 = scalar_lea.vmem [#allocation5], 16
    %1518 = vst.msk [vmem:[%s1517] sm:$0xff] %vm412, %v1513
    %s1519 = scalar_lea.vmem [#allocation5], 40
    %1520 = vst.msk [vmem:[%s1519] sm:$0xff] %vm415, %v1513
    %v1521 = vld [vmem:[%s609] sm:$0xff]
    %v1522 = vld [vmem:[%s609 + $0x8] sm:$0xff]
    %v1523 = vld [vmem:[%s612] sm:$0xff]
    %v1524 = vld [vmem:[%s612 + $0x8] sm:$0xff]
    %v1525 = vsel %vm322, %v1521, %v1523
    %v1526 = vsel %vm323, %v1522, %v1524
    %v1527 = vld [vmem:[%s617] sm:$0xff]
    %v1529 = vsel %vm110, %v1516, 0
    %1531 = vmatpush.msra.mxu0 0.0
    %1532 = vmatpush.msra.mxu0 0.0
    %1533 = vmatpush.msra.mxu0 0.0
    %1534 = vmatpush.msra.mxu0 0.0
    %1535 = vmatpush.msra.mxu0 0.0
    %1536 = vmatpush.msra.mxu0 0.0
    %1537 = vmatpush.msra.mxu0 0.0
    %1538 = vmatpush.msra.mxu0 0.0
    %1539 = vmatpush.msra.mxu0 %v1239
    %1540 = vmatpush.msra.mxu0 %v1237
    %1541 = vmatpush.msra.mxu0 %v1235
    %1542 = vmatpush.msra.mxu0 %v1233
    %1543 = vmatpush.msra.mxu0 %v1231
    %1544 = vmatpush.msra.mxu0 %v1229
    %1545 = vmatpush.msra.mxu0 %v1227
    %1546 = vmatpush.msra.mxu0 %v1225
    %1547 = vmatmul.f32.gmra.mxu0 %v1529
    %v1548 = vpop.f32.mrf.mxu0
    %v1549 = vadd.f32 0.0, %v1548
    %1550 = vdwg.mxu0
    %1551 = vmatpush.msra.mxu0 0.0
    %1552 = vmatpush.msra.mxu0 0.0
    %1553 = vmatpush.msra.mxu0 0.0
    %1554 = vmatpush.msra.mxu0 0.0
    %1555 = vmatpush.msra.mxu0 0.0
    %1556 = vmatpush.msra.mxu0 0.0
    %1557 = vmatpush.msra.mxu0 0.0
    %1558 = vmatpush.msra.mxu0 0.0
    %1559 = vmatpush.msra.mxu0 %v1240
    %1560 = vmatpush.msra.mxu0 %v1238
    %1561 = vmatpush.msra.mxu0 %v1236
    %1562 = vmatpush.msra.mxu0 %v1234
    %1563 = vmatpush.msra.mxu0 %v1232
    %1564 = vmatpush.msra.mxu0 %v1230
    %1565 = vmatpush.msra.mxu0 %v1228
    %1566 = vmatpush.msra.mxu0 %v1226
    %1567 = vmatmul.f32.gmra.mxu0 %v1529
    %v1568 = vpop.f32.mrf.mxu0
    %v1569 = vadd.f32 0.0, %v1568
    %1570 = vdwg.mxu0
    %v1571 = vadd.f32 %v1525, %v1549
    %v1572 = vxor.u32 %v1571, 2147483648
    %v1573 = vmul.f32 %v1572, 1.442695
    %v1574 = vpow.pop %v1573
    %v1575 = vadd.f32 %v1574, 1.0
    %v1576 = vrcp.pop %v1575
    %v1577 = vmul.f32 %v1575, %v1576
    %v1578 = vsub.f32 1.0, %v1577
    %v1579 = vmul.f32 %v1576, %v1578
    %v1580 = vadd.f32 %v1576, %v1579
    %vm1581 = vweird.f32 %v1575
    %vm1582 = vweird.f32 %v1576
    %vm1583 = vmor %vm1581, %vm1582
    %v1584 = vsel %vm1583, %v1576, %v1580
    %v1585 = vand.u32 2147483647, %v1575
    %vm1586 = vcmp.eq.f32.partialorder %v1585, 8.507059e+37
    %v1587 = vand.u32 %v1575, 2147483648
    %v1588 = vor.u32 1.1754944e-38, %v1587
    %v1589 = vsel %vm1586, %v1588, %v1584
    %v1590 = vmul.f32 1.0, %v1589
    %v1591 = vadd.f32 %v1569, %v1311
    %v1592 = vmul.f32 %v1590, %v1591
    %v1593 = vadd.f32 %v1526, %v1592
    %v1594 = vtanh.pop %v1593
    %v1595 = vsub.f32 %v1516, %v1594
    %1597 = vrot.lane.b32.xlu0 %v1595, 64
    %v1598 = vpop.permute.xlu0 %1597
    %v1600 = vmul.f32 %v1590, %v1598
    %1602 = vrot.lane.b32.xlu0 %v1600, 64
    %v1603 = vpop.permute.xlu0 %1602
    %v1605 = vadd.f32 %v1594, %v1603
    %v1606 = vmul.f32 %v1527, %v1605
    %v1607 = vsub.f32 1.0, %v1527
    %v1608 = vmul.f32 %v1607, %v1516
    %v1609 = vadd.f32 %v1606, %v1608
    %s1610 = scalar_lea.vmem [#allocation5], 24
    %1611 = vst.msk [vmem:[%s1610] sm:$0xff] %vm412, %v1606
    %s1612 = scalar_lea.vmem [#allocation5], 32
    %1613 = vst.msk [vmem:[%s1612] sm:$0xff] %vm415, %v1606
    %v1614 = vld [vmem:[%s612] sm:$0xff]
    %v1615 = vld [vmem:[%s612 + $0x8] sm:$0xff]
    %v1616 = vld [vmem:[%s609] sm:$0xff]
    %v1617 = vld [vmem:[%s609 + $0x8] sm:$0xff]
    %v1618 = vsel %vm322, %v1614, %v1616
    %v1619 = vsel %vm323, %v1615, %v1617
    %v1620 = vld [vmem:[%s711] sm:$0xff]
    %v1622 = vsel %vm110, %v1609, 0
    %1624 = vmatpush.msra.mxu0 0.0
    %1625 = vmatpush.msra.mxu0 0.0
    %1626 = vmatpush.msra.mxu0 0.0
    %1627 = vmatpush.msra.mxu0 0.0
    %1628 = vmatpush.msra.mxu0 0.0
    %1629 = vmatpush.msra.mxu0 0.0
    %1630 = vmatpush.msra.mxu0 0.0
    %1631 = vmatpush.msra.mxu0 0.0
    %1632 = vmatpush.msra.mxu0 %v1239
    %1633 = vmatpush.msra.mxu0 %v1237
    %1634 = vmatpush.msra.mxu0 %v1235
    %1635 = vmatpush.msra.mxu0 %v1233
    %1636 = vmatpush.msra.mxu0 %v1231
    %1637 = vmatpush.msra.mxu0 %v1229
    %1638 = vmatpush.msra.mxu0 %v1227
    %1639 = vmatpush.msra.mxu0 %v1225
    %1640 = vmatmul.f32.gmra.mxu0 %v1622
    %v1641 = vpop.f32.mrf.mxu0
    %v1642 = vadd.f32 0.0, %v1641
    %1643 = vdwg.mxu0
    %1644 = vmatpush.msra.mxu0 0.0
    %1645 = vmatpush.msra.mxu0 0.0
    %1646 = vmatpush.msra.mxu0 0.0
    %1647 = vmatpush.msra.mxu0 0.0
    %1648 = vmatpush.msra.mxu0 0.0
    %1649 = vmatpush.msra.mxu0 0.0
    %1650 = vmatpush.msra.mxu0 0.0
    %1651 = vmatpush.msra.mxu0 0.0
    %1652 = vmatpush.msra.mxu0 %v1240
    %1653 = vmatpush.msra.mxu0 %v1238
    %1654 = vmatpush.msra.mxu0 %v1236
    %1655 = vmatpush.msra.mxu0 %v1234
    %1656 = vmatpush.msra.mxu0 %v1232
    %1657 = vmatpush.msra.mxu0 %v1230
    %1658 = vmatpush.msra.mxu0 %v1228
    %1659 = vmatpush.msra.mxu0 %v1226
    %1660 = vmatmul.f32.gmra.mxu0 %v1622
    %v1661 = vpop.f32.mrf.mxu0
    %v1662 = vadd.f32 0.0, %v1661
    %1663 = vdwg.mxu0
    %v1664 = vadd.f32 %v1618, %v1642
    %v1665 = vxor.u32 %v1664, 2147483648
    %v1666 = vmul.f32 %v1665, 1.442695
    %v1667 = vpow.pop %v1666
    %v1668 = vadd.f32 %v1667, 1.0
    %v1669 = vrcp.pop %v1668
    %v1670 = vmul.f32 %v1668, %v1669
    %v1671 = vsub.f32 1.0, %v1670
    %v1672 = vmul.f32 %v1669, %v1671
    %v1673 = vadd.f32 %v1669, %v1672
    %vm1674 = vweird.f32 %v1668
    %vm1675 = vweird.f32 %v1669
    %vm1676 = vmor %vm1674, %vm1675
    %v1677 = vsel %vm1676, %v1669, %v1673
    %v1678 = vand.u32 2147483647, %v1668
    %vm1679 = vcmp.eq.f32.partialorder %v1678, 8.507059e+37
    %v1680 = vand.u32 %v1668, 2147483648
    %v1681 = vor.u32 1.1754944e-38, %v1680
    %v1682 = vsel %vm1679, %v1681, %v1677
    %v1683 = vmul.f32 1.0, %v1682
    %v1684 = vadd.f32 %v1662, %v1311
    %v1685 = vmul.f32 %v1683, %v1684
    %v1686 = vadd.f32 %v1619, %v1685
    %v1687 = vtanh.pop %v1686
    %v1688 = vsub.f32 %v1609, %v1687
    %1690 = vrot.lane.b32.xlu0 %v1688, 64
    %v1691 = vpop.permute.xlu0 %1690
    %v1693 = vmul.f32 %v1683, %v1691
    %1695 = vrot.lane.b32.xlu0 %v1693, 64
    %v1696 = vpop.permute.xlu0 %1695
    %v1698 = vadd.f32 %v1687, %v1696
    %v1699 = vmul.f32 %v1620, %v1698
    %v1700 = vsub.f32 1.0, %v1620
    %v1701 = vmul.f32 %v1700, %v1609
    %v1702 = vadd.f32 %v1699, %v1701
    %1703 = vst.msk [vmem:[%s1612] sm:$0xff] %vm412, %v1699
    %1704 = vst.msk [vmem:[%s1610] sm:$0xff] %vm415, %v1699
    %v1705 = vld [vmem:[%s516] sm:$0xff]
    %v1706 = vld [vmem:[%s516 + $0x8] sm:$0xff]
    %v1707 = vld [vmem:[%s513] sm:$0xff]
    %v1708 = vld [vmem:[%s513 + $0x8] sm:$0xff]
    %v1709 = vsel %vm322, %v1705, %v1707
    %v1710 = vsel %vm323, %v1706, %v1708
    %v1711 = vld [vmem:[%s803] sm:$0xff]
    %v1713 = vsel %vm110, %v1702, 0
    %1715 = vmatpush.msra.mxu0 0.0
    %1716 = vmatpush.msra.mxu0 0.0
    %1717 = vmatpush.msra.mxu0 0.0
    %1718 = vmatpush.msra.mxu0 0.0
    %1719 = vmatpush.msra.mxu0 0.0
    %1720 = vmatpush.msra.mxu0 0.0
    %1721 = vmatpush.msra.mxu0 0.0
    %1722 = vmatpush.msra.mxu0 0.0
    %1723 = vmatpush.msra.mxu0 %v1239
    %1724 = vmatpush.msra.mxu0 %v1237
    %1725 = vmatpush.msra.mxu0 %v1235
    %1726 = vmatpush.msra.mxu0 %v1233
    %1727 = vmatpush.msra.mxu0 %v1231
    %1728 = vmatpush.msra.mxu0 %v1229
    %1729 = vmatpush.msra.mxu0 %v1227
    %1730 = vmatpush.msra.mxu0 %v1225
    %1731 = vmatmul.f32.gmra.mxu0 %v1713
    %v1732 = vpop.f32.mrf.mxu0
    %v1733 = vadd.f32 0.0, %v1732
    %1734 = vdwg.mxu0
    %1735 = vmatpush.msra.mxu0 0.0
    %1736 = vmatpush.msra.mxu0 0.0
    %1737 = vmatpush.msra.mxu0 0.0
    %1738 = vmatpush.msra.mxu0 0.0
    %1739 = vmatpush.msra.mxu0 0.0
    %1740 = vmatpush.msra.mxu0 0.0
    %1741 = vmatpush.msra.mxu0 0.0
    %1742 = vmatpush.msra.mxu0 0.0
    %1743 = vmatpush.msra.mxu0 %v1240
    %1744 = vmatpush.msra.mxu0 %v1238
    %1745 = vmatpush.msra.mxu0 %v1236
    %1746 = vmatpush.msra.mxu0 %v1234
    %1747 = vmatpush.msra.mxu0 %v1232
    %1748 = vmatpush.msra.mxu0 %v1230
    %1749 = vmatpush.msra.mxu0 %v1228
    %1750 = vmatpush.msra.mxu0 %v1226
    %1751 = vmatmul.f32.gmra.mxu0 %v1713
    %v1752 = vpop.f32.mrf.mxu0
    %v1753 = vadd.f32 0.0, %v1752
    %1754 = vdwg.mxu0
    %v1755 = vadd.f32 %v1709, %v1733
    %v1756 = vxor.u32 %v1755, 2147483648
    %v1757 = vmul.f32 %v1756, 1.442695
    %v1758 = vpow.pop %v1757
    %v1759 = vadd.f32 %v1758, 1.0
    %v1760 = vrcp.pop %v1759
    %v1761 = vmul.f32 %v1759, %v1760
    %v1762 = vsub.f32 1.0, %v1761
    %v1763 = vmul.f32 %v1760, %v1762
    %v1764 = vadd.f32 %v1760, %v1763
    %vm1765 = vweird.f32 %v1759
    %vm1766 = vweird.f32 %v1760
    %vm1767 = vmor %vm1765, %vm1766
    %v1768 = vsel %vm1767, %v1760, %v1764
    %v1769 = vand.u32 2147483647, %v1759
    %vm1770 = vcmp.eq.f32.partialorder %v1769, 8.507059e+37
    %v1771 = vand.u32 %v1759, 2147483648
    %v1772 = vor.u32 1.1754944e-38, %v1771
    %v1773 = vsel %vm1770, %v1772, %v1768
    %v1774 = vmul.f32 1.0, %v1773
    %v1775 = vadd.f32 %v1753, %v1311
    %v1776 = vmul.f32 %v1774, %v1775
    %v1777 = vadd.f32 %v1710, %v1776
    %v1778 = vtanh.pop %v1777
    %v1779 = vsub.f32 %v1702, %v1778
    %1781 = vrot.lane.b32.xlu0 %v1779, 64
    %v1782 = vpop.permute.xlu0 %1781
    %v1784 = vmul.f32 %v1774, %v1782
    %1786 = vrot.lane.b32.xlu0 %v1784, 64
    %v1787 = vpop.permute.xlu0 %1786
    %v1789 = vadd.f32 %v1778, %v1787
    %v1790 = vmul.f32 %v1711, %v1789
    %v1791 = vsub.f32 1.0, %v1711
    %v1792 = vmul.f32 %v1791, %v1702
    %v1793 = vadd.f32 %v1790, %v1792
    %1794 = vst.msk [vmem:[%s1519] sm:$0xff] %vm412, %v1790
    %1795 = vst.msk [vmem:[%s1517] sm:$0xff] %vm415, %v1790
    %v1796 = vld [vmem:[%s420] sm:$0xff]
    %v1797 = vld [vmem:[%s420 + $0x8] sm:$0xff]
    %v1798 = vld [vmem:[%s417] sm:$0xff]
    %v1799 = vld [vmem:[%s417 + $0x8] sm:$0xff]
    %v1800 = vsel %vm322, %v1796, %v1798
    %v1801 = vsel %vm323, %v1797, %v1799
    %v1802 = vld [vmem:[%s895] sm:$0xff]
    %v1804 = vsel %vm110, %v1793, 0
    %1806 = vmatpush.msra.mxu0 0.0
    %1807 = vmatpush.msra.mxu0 0.0
    %1808 = vmatpush.msra.mxu0 0.0
    %1809 = vmatpush.msra.mxu0 0.0
    %1810 = vmatpush.msra.mxu0 0.0
    %1811 = vmatpush.msra.mxu0 0.0
    %1812 = vmatpush.msra.mxu0 0.0
    %1813 = vmatpush.msra.mxu0 0.0
    %1814 = vmatpush.msra.mxu0 %v1239
    %1815 = vmatpush.msra.mxu0 %v1237
    %1816 = vmatpush.msra.mxu0 %v1235
    %1817 = vmatpush.msra.mxu0 %v1233
    %1818 = vmatpush.msra.mxu0 %v1231
    %1819 = vmatpush.msra.mxu0 %v1229
    %1820 = vmatpush.msra.mxu0 %v1227
    %1821 = vmatpush.msra.mxu0 %v1225
    %1822 = vmatmul.f32.gmra.mxu0 %v1804
    %v1823 = vpop.f32.mrf.mxu0
    %v1824 = vadd.f32 0.0, %v1823
    %1825 = vdwg.mxu0
    %1826 = vmatpush.msra.mxu0 0.0
    %1827 = vmatpush.msra.mxu0 0.0
    %1828 = vmatpush.msra.mxu0 0.0
    %1829 = vmatpush.msra.mxu0 0.0
    %1830 = vmatpush.msra.mxu0 0.0
    %1831 = vmatpush.msra.mxu0 0.0
    %1832 = vmatpush.msra.mxu0 0.0
    %1833 = vmatpush.msra.mxu0 0.0
    %1834 = vmatpush.msra.mxu0 %v1240
    %1835 = vmatpush.msra.mxu0 %v1238
    %1836 = vmatpush.msra.mxu0 %v1236
    %1837 = vmatpush.msra.mxu0 %v1234
    %1838 = vmatpush.msra.mxu0 %v1232
    %1839 = vmatpush.msra.mxu0 %v1230
    %1840 = vmatpush.msra.mxu0 %v1228
    %1841 = vmatpush.msra.mxu0 %v1226
    %1842 = vmatmul.f32.gmra.mxu0 %v1804
    %v1843 = vpop.f32.mrf.mxu0
    %v1844 = vadd.f32 0.0, %v1843
    %1845 = vdwg.mxu0
    %v1846 = vadd.f32 %v1800, %v1824
    %v1847 = vxor.u32 %v1846, 2147483648
    %v1848 = vmul.f32 %v1847, 1.442695
    %v1849 = vpow.pop %v1848
    %v1850 = vadd.f32 %v1849, 1.0
    %v1851 = vrcp.pop %v1850
    %v1852 = vmul.f32 %v1850, %v1851
    %v1853 = vsub.f32 1.0, %v1852
    %v1854 = vmul.f32 %v1851, %v1853
    %v1855 = vadd.f32 %v1851, %v1854
    %vm1856 = vweird.f32 %v1850
    %vm1857 = vweird.f32 %v1851
    %vm1858 = vmor %vm1856, %vm1857
    %v1859 = vsel %vm1858, %v1851, %v1855
    %v1860 = vand.u32 2147483647, %v1850
    %vm1861 = vcmp.eq.f32.partialorder %v1860, 8.507059e+37
    %v1862 = vand.u32 %v1850, 2147483648
    %v1863 = vor.u32 1.1754944e-38, %v1862
    %v1864 = vsel %vm1861, %v1863, %v1859
    %v1865 = vmul.f32 1.0, %v1864
    %v1866 = vadd.f32 %v1844, %v1311
    %v1867 = vmul.f32 %v1865, %v1866
    %v1868 = vadd.f32 %v1801, %v1867
    %v1869 = vtanh.pop %v1868
    %v1870 = vsub.f32 %v1793, %v1869
    %1872 = vrot.lane.b32.xlu0 %v1870, 64
    %v1873 = vpop.permute.xlu0 %1872
    %v1875 = vmul.f32 %v1865, %v1873
    %1877 = vrot.lane.b32.xlu0 %v1875, 64
    %v1878 = vpop.permute.xlu0 %1877
    %v1880 = vadd.f32 %v1869, %v1878
    %v1881 = vmul.f32 %v1802, %v1880
    %v1882 = vsub.f32 1.0, %v1802
    %v1883 = vmul.f32 %v1882, %v1793
    %v1884 = vadd.f32 %v1881, %v1883
    %1885 = vst.msk [vmem:[%s1426] sm:$0xff] %vm412, %v1881
    %1886 = vst.msk [vmem:[%s1424] sm:$0xff] %vm415, %v1881
    %v1887 = vld [vmem:[%s317] sm:$0xff]
    %v1888 = vld [vmem:[%s317 + $0x8] sm:$0xff]
    %v1889 = vld [vmem:[#allocation2] sm:$0xff]
    %v1890 = vld [vmem:[#allocation2 + $0x8] sm:$0xff]
    %v1891 = vsel %vm322, %v1887, %v1889
    %v1892 = vsel %vm323, %v1888, %v1890
    %v1893 = vld [vmem:[%s987] sm:$0xff]
    %v1895 = vsel %vm110, %v1884, 0
    %1897 = vmatpush.msra.mxu0 0.0
    %1898 = vmatpush.msra.mxu0 0.0
    %1899 = vmatpush.msra.mxu0 0.0
    %1900 = vmatpush.msra.mxu0 0.0
    %1901 = vmatpush.msra.mxu0 0.0
    %1902 = vmatpush.msra.mxu0 0.0
    %1903 = vmatpush.msra.mxu0 0.0
    %1904 = vmatpush.msra.mxu0 0.0
    %1905 = vmatpush.msra.mxu0 %v1239
    %1906 = vmatpush.msra.mxu0 %v1237
    %1907 = vmatpush.msra.mxu0 %v1235
    %1908 = vmatpush.msra.mxu0 %v1233
    %1909 = vmatpush.msra.mxu0 %v1231
    %1910 = vmatpush.msra.mxu0 %v1229
    %1911 = vmatpush.msra.mxu0 %v1227
    %1912 = vmatpush.msra.mxu0 %v1225
    %1913 = vmatmul.f32.gmra.mxu0 %v1895
    %v1914 = vpop.f32.mrf.mxu0
    %v1915 = vadd.f32 0.0, %v1914
    %1916 = vdwg.mxu0
    %1917 = vmatpush.msra.mxu0 0.0
    %1918 = vmatpush.msra.mxu0 0.0
    %1919 = vmatpush.msra.mxu0 0.0
    %1920 = vmatpush.msra.mxu0 0.0
    %1921 = vmatpush.msra.mxu0 0.0
    %1922 = vmatpush.msra.mxu0 0.0
    %1923 = vmatpush.msra.mxu0 0.0
    %1924 = vmatpush.msra.mxu0 0.0
    %1925 = vmatpush.msra.mxu0 %v1240
    %1926 = vmatpush.msra.mxu0 %v1238
    %1927 = vmatpush.msra.mxu0 %v1236
    %1928 = vmatpush.msra.mxu0 %v1234
    %1929 = vmatpush.msra.mxu0 %v1232
    %1930 = vmatpush.msra.mxu0 %v1230
    %1931 = vmatpush.msra.mxu0 %v1228
    %1932 = vmatpush.msra.mxu0 %v1226
    %1933 = vmatmul.f32.gmra.mxu0 %v1895
    %v1934 = vpop.f32.mrf.mxu0
    %v1935 = vadd.f32 0.0, %v1934
    %1936 = vdwg.mxu0
    %v1937 = vadd.f32 %v1891, %v1915
    %v1938 = vxor.u32 %v1937, 2147483648
    %v1939 = vmul.f32 %v1938, 1.442695
    %v1940 = vpow.pop %v1939
    %v1941 = vadd.f32 %v1940, 1.0
    %v1942 = vrcp.pop %v1941
    %v1943 = vmul.f32 %v1941, %v1942
    %v1944 = vsub.f32 1.0, %v1943
    %v1945 = vmul.f32 %v1942, %v1944
    %v1946 = vadd.f32 %v1942, %v1945
    %vm1947 = vweird.f32 %v1941
    %vm1948 = vweird.f32 %v1942
    %vm1949 = vmor %vm1947, %vm1948
    %v1950 = vsel %vm1949, %v1942, %v1946
    %v1951 = vand.u32 2147483647, %v1941
    %vm1952 = vcmp.eq.f32.partialorder %v1951, 8.507059e+37
    %v1953 = vand.u32 %v1941, 2147483648
    %v1954 = vor.u32 1.1754944e-38, %v1953
    %v1955 = vsel %vm1952, %v1954, %v1950
    %v1956 = vmul.f32 1.0, %v1955
    %v1957 = vadd.f32 %v1935, %v1311
    %v1958 = vmul.f32 %v1956, %v1957
    %v1959 = vadd.f32 %v1892, %v1958
    %v1960 = vtanh.pop %v1959
    %v1961 = vsub.f32 %v1884, %v1960
    %1963 = vrot.lane.b32.xlu0 %v1961, 64
    %v1964 = vpop.permute.xlu0 %1963
    %v1966 = vmul.f32 %v1956, %v1964
    %1968 = vrot.lane.b32.xlu0 %v1966, 64
    %v1969 = vpop.permute.xlu0 %1968
    %v1971 = vadd.f32 %v1960, %v1969
    %v1972 = vmul.f32 %v1893, %v1971
    %1973 = vst.msk [vmem:[%s1333] sm:$0xff] %vm412, %v1972
    %1974 = vst.msk [vmem:[#allocation5] sm:$0xff] %vm415, %v1972
    %v1975 = vld [vmem:[#allocation5] sm:$0xff]
    %v1976 = vld [vmem:[#allocation5 + $0x8] sm:$0xff]
    %v1977 = vld [vmem:[#allocation5 + $0x10] sm:$0xff]
    %v1978 = vld [vmem:[#allocation5 + $0x18] sm:$0xff]
    %v1979 = vld [vmem:[#allocation5 + $0x20] sm:$0xff]
    %v1980 = vld [vmem:[#allocation5 + $0x28] sm:$0xff]
    %v1981 = vld [vmem:[#allocation5 + $0x30] sm:$0xff]
    %v1982 = vld [vmem:[#allocation5 + $0x38] sm:$0xff]
    %s1983 = scalar_lea.vmem [#allocation6], 256
    %v1984 = vld [vmem:[%s1983] sm:$0xff]
    %v1985 = vld [vmem:[%s1983 + $0x8] sm:$0xff]
    %v1986 = vld [vmem:[%s1983 + $0x10] sm:$0xff]
    %v1987 = vld [vmem:[%s1983 + $0x18] sm:$0xff]
    %v1988 = vld [vmem:[%s1983 + $0x20] sm:$0xff]
    %v1989 = vld [vmem:[%s1983 + $0x28] sm:$0xff]
    %v1990 = vld [vmem:[%s1983 + $0x30] sm:$0xff]
    %v1991 = vld [vmem:[%s1983 + $0x38] sm:$0xff]
    %v1992 = vld [vmem:[%s1983 + $0x40] sm:$0xff]
    %v1993 = vld [vmem:[%s1983 + $0x48] sm:$0xff]
    %v1994 = vld [vmem:[%s1983 + $0x50] sm:$0xff]
    %v1995 = vld [vmem:[%s1983 + $0x58] sm:$0xff]
    %v1996 = vld [vmem:[%s1983 + $0x60] sm:$0xff]
    %v1997 = vld [vmem:[%s1983 + $0x68] sm:$0xff]
    %v1998 = vld [vmem:[%s1983 + $0x70] sm:$0xff]
    %v1999 = vld [vmem:[%s1983 + $0x78] sm:$0xff]
    %s2000 = scalar_lea.vmem %s3, 4
    %v2001 = vld [vmem:[%s2000] sm:$0x3]
    %v2003 = vperm.slane %v2001, 0
    %v2004 = vperm.slane %v2001, 1
    %v2008 = vsel %vm110, %v1975, 0
    %v2011 = vsel %vm110, %v1976, 0
    %v2014 = vsel %vm110, %v1977, 0
    %v2017 = vsel %vm110, %v1978, 0
    %v2020 = vsel %vm110, %v1979, 0
    %v2023 = vsel %vm110, %v1980, 0
    %v2026 = vsel %vm110, %v1981, 0
    %v2029 = vsel %vm110, %v1982, 0
    %2031 = vmatpush.msra.mxu0 0.0
    %2032 = vmatpush.msra.mxu0 0.0
    %2033 = vmatpush.msra.mxu0 0.0
    %2034 = vmatpush.msra.mxu0 0.0
    %2035 = vmatpush.msra.mxu0 0.0
    %2036 = vmatpush.msra.mxu0 0.0
    %2037 = vmatpush.msra.mxu0 0.0
    %2038 = vmatpush.msra.mxu0 0.0
    %2039 = vmatpush.msra.mxu0 %v1998
    %2040 = vmatpush.msra.mxu0 %v1996
    %2041 = vmatpush.msra.mxu0 %v1994
    %2042 = vmatpush.msra.mxu0 %v1992
    %2043 = vmatpush.msra.mxu0 %v1990
    %2044 = vmatpush.msra.mxu0 %v1988
    %2045 = vmatpush.msra.mxu0 %v1986
    %2046 = vmatpush.msra.mxu0 %v1984
    %2047 = vmatmul.f32.gmra.mxu0 %v2008
    %v2048 = vpop.f32.mrf.mxu0
    %v2049 = vadd.f32 %v2003, %v2048
    %2050 = vmatmul.f32.gmra.mxu0 %v2011
    %v2051 = vpop.f32.mrf.mxu0
    %v2052 = vadd.f32 %v2003, %v2051
    %2053 = vmatmul.f32.gmra.mxu0 %v2014
    %v2054 = vpop.f32.mrf.mxu0
    %v2055 = vadd.f32 %v2003, %v2054
    %2056 = vmatmul.f32.gmra.mxu0 %v2017
    %v2057 = vpop.f32.mrf.mxu0
    %v2058 = vadd.f32 %v2003, %v2057
    %2059 = vmatmul.f32.gmra.mxu0 %v2020
    %v2060 = vpop.f32.mrf.mxu0
    %v2061 = vadd.f32 %v2003, %v2060
    %2062 = vmatmul.f32.gmra.mxu0 %v2023
    %v2063 = vpop.f32.mrf.mxu0
    %v2064 = vadd.f32 %v2003, %v2063
    %2065 = vmatmul.f32.gmra.mxu0 %v2026
    %v2066 = vpop.f32.mrf.mxu0
    %v2067 = vadd.f32 %v2003, %v2066
    %2068 = vmatmul.f32.gmra.mxu0 %v2029
    %v2069 = vpop.f32.mrf.mxu0
    %v2070 = vadd.f32 %v2003, %v2069
    %2071 = vdwg.mxu0
    %2072 = vmatpush.msra.mxu0 0.0
    %2073 = vmatpush.msra.mxu0 0.0
    %2074 = vmatpush.msra.mxu0 0.0
    %2075 = vmatpush.msra.mxu0 0.0
    %2076 = vmatpush.msra.mxu0 0.0
    %2077 = vmatpush.msra.mxu0 0.0
    %2078 = vmatpush.msra.mxu0 0.0
    %2079 = vmatpush.msra.mxu0 0.0
    %2080 = vmatpush.msra.mxu0 %v1999
    %2081 = vmatpush.msra.mxu0 %v1997
    %2082 = vmatpush.msra.mxu0 %v1995
    %2083 = vmatpush.msra.mxu0 %v1993
    %2084 = vmatpush.msra.mxu0 %v1991
    %2085 = vmatpush.msra.mxu0 %v1989
    %2086 = vmatpush.msra.mxu0 %v1987
    %2087 = vmatpush.msra.mxu0 %v1985
    %2088 = vmatmul.f32.gmra.mxu0 %v2008
    %v2089 = vpop.f32.mrf.mxu0
    %v2090 = vadd.f32 %v2004, %v2089
    %2091 = vmatmul.f32.gmra.mxu0 %v2011
    %v2092 = vpop.f32.mrf.mxu0
    %v2093 = vadd.f32 %v2004, %v2092
    %2094 = vmatmul.f32.gmra.mxu0 %v2014
    %v2095 = vpop.f32.mrf.mxu0
    %v2096 = vadd.f32 %v2004, %v2095
    %2097 = vmatmul.f32.gmra.mxu0 %v2017
    %v2098 = vpop.f32.mrf.mxu0
    %v2099 = vadd.f32 %v2004, %v2098
    %2100 = vmatmul.f32.gmra.mxu0 %v2020
    %v2101 = vpop.f32.mrf.mxu0
    %v2102 = vadd.f32 %v2004, %v2101
    %2103 = vmatmul.f32.gmra.mxu0 %v2023
    %v2104 = vpop.f32.mrf.mxu0
    %v2105 = vadd.f32 %v2004, %v2104
    %2106 = vmatmul.f32.gmra.mxu0 %v2026
    %v2107 = vpop.f32.mrf.mxu0
    %v2108 = vadd.f32 %v2004, %v2107
    %2109 = vmatmul.f32.gmra.mxu0 %v2029
    %v2110 = vpop.f32.mrf.mxu0
    %v2111 = vadd.f32 %v2004, %v2110
    %2112 = vdwg.mxu0
    %2113 = vst [vmem:[#allocation2] sm:$0xff] %v2049
    %2114 = vst.msk [vmem:[#allocation2 + $0x8] sm:$0xff] %vm110, %v2090
    %2115 = vst [vmem:[#allocation2 + $0x10] sm:$0xff] %v2052
    %2116 = vst.msk [vmem:[#allocation2 + $0x18] sm:$0xff] %vm110, %v2093
    %2117 = vst [vmem:[#allocation2 + $0x20] sm:$0xff] %v2055
    %2118 = vst.msk [vmem:[#allocation2 + $0x28] sm:$0xff] %vm110, %v2096
    %2119 = vst [vmem:[#allocation2 + $0x30] sm:$0xff] %v2058
    %2120 = vst.msk [vmem:[#allocation2 + $0x38] sm:$0xff] %vm110, %v2099
    %2121 = vst [vmem:[#allocation2 + $0x40] sm:$0xff] %v2061
    %2122 = vst.msk [vmem:[#allocation2 + $0x48] sm:$0xff] %vm110, %v2102
    %2123 = vst [vmem:[#allocation2 + $0x50] sm:$0xff] %v2064
    %2124 = vst.msk [vmem:[#allocation2 + $0x58] sm:$0xff] %vm110, %v2105
    %2125 = vst [vmem:[#allocation2 + $0x60] sm:$0xff] %v2067
    %2126 = vst.msk [vmem:[#allocation2 + $0x68] sm:$0xff] %vm110, %v2108
    %2127 = vst [vmem:[#allocation2 + $0x70] sm:$0xff] %v2070
    %2128 = vst.msk [vmem:[#allocation2 + $0x78] sm:$0xff] %vm110, %v2111
    %s2129 = scalar_lea.vmem [#allocation9], 256
    %v2130 = vld [vmem:[%s2129] sm:$0xff]
    %v2131 = vld [vmem:[%s2129 + $0x8] sm:$0xff]
    %v2132 = vld [vmem:[%s2129 + $0x10] sm:$0xff]
    %v2133 = vld [vmem:[%s2129 + $0x18] sm:$0xff]
    %v2134 = vld [vmem:[%s2129 + $0x20] sm:$0xff]
    %v2135 = vld [vmem:[%s2129 + $0x28] sm:$0xff]
    %v2136 = vld [vmem:[%s2129 + $0x30] sm:$0xff]
    %v2137 = vld [vmem:[%s2129 + $0x38] sm:$0xff]
    %v2138 = vld [vmem:[%s2129 + $0x40] sm:$0xff]
    %v2139 = vld [vmem:[%s2129 + $0x48] sm:$0xff]
    %v2140 = vld [vmem:[%s2129 + $0x50] sm:$0xff]
    %v2141 = vld [vmem:[%s2129 + $0x58] sm:$0xff]
    %v2142 = vld [vmem:[%s2129 + $0x60] sm:$0xff]
    %v2143 = vld [vmem:[%s2129 + $0x68] sm:$0xff]
    %v2144 = vld [vmem:[%s2129 + $0x70] sm:$0xff]
    %v2145 = vld [vmem:[%s2129 + $0x78] sm:$0xff]
    %s2146 = scalar_lea.vmem %s5, 2
    %v2147 = vld [vmem:[%s2146] sm:$0x1]
    %v2148 = vld [vmem:[#allocation2] sm:$0xff]
    %v2149 = vld [vmem:[#allocation2 + $0x8] sm:$0xff]
    %v2150 = vld [vmem:[%s317] sm:$0xff]
    %v2151 = vld [vmem:[%s317 + $0x8] sm:$0xff]
    %v2152 = vsel %vm322, %v2148, %v2150
    %v2153 = vsel %vm323, %v2149, %v2151
    %v2154 = vld [vmem:[#allocation3] sm:$0xff]
    %2155 = vmatpush.msra.mxu0 0.0
    %2156 = vmatpush.msra.mxu0 0.0
    %2157 = vmatpush.msra.mxu0 0.0
    %2158 = vmatpush.msra.mxu0 0.0
    %2159 = vmatpush.msra.mxu0 0.0
    %2160 = vmatpush.msra.mxu0 0.0
    %2161 = vmatpush.msra.mxu0 0.0
    %2162 = vmatpush.msra.mxu0 0.0
    %2163 = vmatpush.msra.mxu0 %v2144
    %2164 = vmatpush.msra.mxu0 %v2142
    %2165 = vmatpush.msra.mxu0 %v2140
    %2166 = vmatpush.msra.mxu0 %v2138
    %2167 = vmatpush.msra.mxu0 %v2136
    %2168 = vmatpush.msra.mxu0 %v2134
    %2169 = vmatpush.msra.mxu0 %v2132
    %2170 = vmatpush.msra.mxu0 %v2130
    %2171 = vmatmul.f32.gmra.mxu0 %v328
    %v2172 = vpop.f32.mrf.mxu0
    %v2173 = vadd.f32 0.0, %v2172
    %2174 = vdwg.mxu0
    %2175 = vmatpush.msra.mxu0 0.0
    %2176 = vmatpush.msra.mxu0 0.0
    %2177 = vmatpush.msra.mxu0 0.0
    %2178 = vmatpush.msra.mxu0 0.0
    %2179 = vmatpush.msra.mxu0 0.0
    %2180 = vmatpush.msra.mxu0 0.0
    %2181 = vmatpush.msra.mxu0 0.0
    %2182 = vmatpush.msra.mxu0 0.0
    %2183 = vmatpush.msra.mxu0 %v2145
    %2184 = vmatpush.msra.mxu0 %v2143
    %2185 = vmatpush.msra.mxu0 %v2141
    %2186 = vmatpush.msra.mxu0 %v2139
    %2187 = vmatpush.msra.mxu0 %v2137
    %2188 = vmatpush.msra.mxu0 %v2135
    %2189 = vmatpush.msra.mxu0 %v2133
    %2190 = vmatpush.msra.mxu0 %v2131
    %2191 = vmatmul.f32.gmra.mxu0 %v328
    %v2192 = vpop.f32.mrf.mxu0
    %v2193 = vadd.f32 0.0, %v2192
    %2194 = vdwg.mxu0
    %v2195 = vadd.f32 %v2152, %v2173
    %v2196 = vxor.u32 %v2195, 2147483648
    %v2197 = vmul.f32 %v2196, 1.442695
    %v2198 = vpow.pop %v2197
    %v2199 = vadd.f32 %v2198, 1.0
    %v2200 = vrcp.pop %v2199
    %v2201 = vmul.f32 %v2199, %v2200
    %v2202 = vsub.f32 1.0, %v2201
    %v2203 = vmul.f32 %v2200, %v2202
    %v2204 = vadd.f32 %v2200, %v2203
    %vm2205 = vweird.f32 %v2199
    %vm2206 = vweird.f32 %v2200
    %vm2207 = vmor %vm2205, %vm2206
    %v2208 = vsel %vm2207, %v2200, %v2204
    %v2209 = vand.u32 2147483647, %v2199
    %vm2210 = vcmp.eq.f32.partialorder %v2209, 8.507059e+37
    %v2211 = vand.u32 %v2199, 2147483648
    %v2212 = vor.u32 1.1754944e-38, %v2211
    %v2213 = vsel %vm2210, %v2212, %v2208
    %v2214 = vmul.f32 1.0, %v2213
    %v2216 = vperm.slane %v2147, 0
    %v2218 = vadd.f32 %v2193, %v2216
    %v2219 = vmul.f32 %v2214, %v2218
    %v2220 = vadd.f32 %v2153, %v2219
    %v2221 = vtanh.pop %v2220
    %v2222 = vsub.f32 0.0, %v2221
    %2224 = vrot.lane.b32.xlu0 %v2222, 64
    %v2225 = vpop.permute.xlu0 %2224
    %v2227 = vmul.f32 %v2214, %v2225
    %2229 = vrot.lane.b32.xlu0 %v2227, 64
    %v2230 = vpop.permute.xlu0 %2229
    %v2232 = vadd.f32 %v2221, %v2230
    %v2233 = vmul.f32 %v2154, %v2232
    %v2234 = vsub.f32 1.0, %v2154
    %v2235 = vmul.f32 %v2234, 0.0
    %v2236 = vadd.f32 %v2233, %v2235
    %2237 = vst.msk [vmem:[#allocation4] sm:$0xff] %vm412, %v2233
    %2238 = vst.msk [vmem:[%s414] sm:$0xff] %vm415, %v2233
    %v2239 = vld [vmem:[%s417] sm:$0xff]
    %v2240 = vld [vmem:[%s417 + $0x8] sm:$0xff]
    %v2241 = vld [vmem:[%s420] sm:$0xff]
    %v2242 = vld [vmem:[%s420 + $0x8] sm:$0xff]
    %v2243 = vsel %vm322, %v2239, %v2241
    %v2244 = vsel %vm323, %v2240, %v2242
    %v2245 = vld [vmem:[%s425] sm:$0xff]
    %v2247 = vsel %vm110, %v2236, 0
    %2249 = vmatpush.msra.mxu0 0.0
    %2250 = vmatpush.msra.mxu0 0.0
    %2251 = vmatpush.msra.mxu0 0.0
    %2252 = vmatpush.msra.mxu0 0.0
    %2253 = vmatpush.msra.mxu0 0.0
    %2254 = vmatpush.msra.mxu0 0.0
    %2255 = vmatpush.msra.mxu0 0.0
    %2256 = vmatpush.msra.mxu0 0.0
    %2257 = vmatpush.msra.mxu0 %v2144
    %2258 = vmatpush.msra.mxu0 %v2142
    %2259 = vmatpush.msra.mxu0 %v2140
    %2260 = vmatpush.msra.mxu0 %v2138
    %2261 = vmatpush.msra.mxu0 %v2136
    %2262 = vmatpush.msra.mxu0 %v2134
    %2263 = vmatpush.msra.mxu0 %v2132
    %2264 = vmatpush.msra.mxu0 %v2130
    %2265 = vmatmul.f32.gmra.mxu0 %v2247
    %v2266 = vpop.f32.mrf.mxu0
    %v2267 = vadd.f32 0.0, %v2266
    %2268 = vdwg.mxu0
    %2269 = vmatpush.msra.mxu0 0.0
    %2270 = vmatpush.msra.mxu0 0.0
    %2271 = vmatpush.msra.mxu0 0.0
    %2272 = vmatpush.msra.mxu0 0.0
    %2273 = vmatpush.msra.mxu0 0.0
    %2274 = vmatpush.msra.mxu0 0.0
    %2275 = vmatpush.msra.mxu0 0.0
    %2276 = vmatpush.msra.mxu0 0.0
    %2277 = vmatpush.msra.mxu0 %v2145
    %2278 = vmatpush.msra.mxu0 %v2143
    %2279 = vmatpush.msra.mxu0 %v2141
    %2280 = vmatpush.msra.mxu0 %v2139
    %2281 = vmatpush.msra.mxu0 %v2137
    %2282 = vmatpush.msra.mxu0 %v2135
    %2283 = vmatpush.msra.mxu0 %v2133
    %2284 = vmatpush.msra.mxu0 %v2131
    %2285 = vmatmul.f32.gmra.mxu0 %v2247
    %v2286 = vpop.f32.mrf.mxu0
    %v2287 = vadd.f32 0.0, %v2286
    %2288 = vdwg.mxu0
    %v2289 = vadd.f32 %v2243, %v2267
    %v2290 = vxor.u32 %v2289, 2147483648
    %v2291 = vmul.f32 %v2290, 1.442695
    %v2292 = vpow.pop %v2291
    %v2293 = vadd.f32 %v2292, 1.0
    %v2294 = vrcp.pop %v2293
    %v2295 = vmul.f32 %v2293, %v2294
    %v2296 = vsub.f32 1.0, %v2295
    %v2297 = vmul.f32 %v2294, %v2296
    %v2298 = vadd.f32 %v2294, %v2297
    %vm2299 = vweird.f32 %v2293
    %vm2300 = vweird.f32 %v2294
    %vm2301 = vmor %vm2299, %vm2300
    %v2302 = vsel %vm2301, %v2294, %v2298
    %v2303 = vand.u32 2147483647, %v2293
    %vm2304 = vcmp.eq.f32.partialorder %v2303, 8.507059e+37
    %v2305 = vand.u32 %v2293, 2147483648
    %v2306 = vor.u32 1.1754944e-38, %v2305
    %v2307 = vsel %vm2304, %v2306, %v2302
    %v2308 = vmul.f32 1.0, %v2307
    %v2309 = vadd.f32 %v2287, %v2216
    %v2310 = vmul.f32 %v2308, %v2309
    %v2311 = vadd.f32 %v2244, %v2310
    %v2312 = vtanh.pop %v2311
    %v2313 = vsub.f32 %v2236, %v2312
    %2315 = vrot.lane.b32.xlu0 %v2313, 64
    %v2316 = vpop.permute.xlu0 %2315
    %v2318 = vmul.f32 %v2308, %v2316
    %2320 = vrot.lane.b32.xlu0 %v2318, 64
    %v2321 = vpop.permute.xlu0 %2320
    %v2323 = vadd.f32 %v2312, %v2321
    %v2324 = vmul.f32 %v2245, %v2323
    %v2325 = vsub.f32 1.0, %v2245
    %v2326 = vmul.f32 %v2325, %v2236
    %v2327 = vadd.f32 %v2324, %v2326
    %2328 = vst.msk [vmem:[%s509] sm:$0xff] %vm412, %v2324
    %2329 = vst.msk [vmem:[%s511] sm:$0xff] %vm415, %v2324
    %v2330 = vld [vmem:[%s513] sm:$0xff]
    %v2331 = vld [vmem:[%s513 + $0x8] sm:$0xff]
    %v2332 = vld [vmem:[%s516] sm:$0xff]
    %v2333 = vld [vmem:[%s516 + $0x8] sm:$0xff]
    %v2334 = vsel %vm322, %v2330, %v2332
    %v2335 = vsel %vm323, %v2331, %v2333
    %v2336 = vld [vmem:[%s521] sm:$0xff]
    %v2338 = vsel %vm110, %v2327, 0
    %2340 = vmatpush.msra.mxu0 0.0
    %2341 = vmatpush.msra.mxu0 0.0
    %2342 = vmatpush.msra.mxu0 0.0
    %2343 = vmatpush.msra.mxu0 0.0
    %2344 = vmatpush.msra.mxu0 0.0
    %2345 = vmatpush.msra.mxu0 0.0
    %2346 = vmatpush.msra.mxu0 0.0
    %2347 = vmatpush.msra.mxu0 0.0
    %2348 = vmatpush.msra.mxu0 %v2144
    %2349 = vmatpush.msra.mxu0 %v2142
    %2350 = vmatpush.msra.mxu0 %v2140
    %2351 = vmatpush.msra.mxu0 %v2138
    %2352 = vmatpush.msra.mxu0 %v2136
    %2353 = vmatpush.msra.mxu0 %v2134
    %2354 = vmatpush.msra.mxu0 %v2132
    %2355 = vmatpush.msra.mxu0 %v2130
    %2356 = vmatmul.f32.gmra.mxu0 %v2338
    %v2357 = vpop.f32.mrf.mxu0
    %v2358 = vadd.f32 0.0, %v2357
    %2359 = vdwg.mxu0
    %2360 = vmatpush.msra.mxu0 0.0
    %2361 = vmatpush.msra.mxu0 0.0
    %2362 = vmatpush.msra.mxu0 0.0
    %2363 = vmatpush.msra.mxu0 0.0
    %2364 = vmatpush.msra.mxu0 0.0
    %2365 = vmatpush.msra.mxu0 0.0
    %2366 = vmatpush.msra.mxu0 0.0
    %2367 = vmatpush.msra.mxu0 0.0
    %2368 = vmatpush.msra.mxu0 %v2145
    %2369 = vmatpush.msra.mxu0 %v2143
    %2370 = vmatpush.msra.mxu0 %v2141
    %2371 = vmatpush.msra.mxu0 %v2139
    %2372 = vmatpush.msra.mxu0 %v2137
    %2373 = vmatpush.msra.mxu0 %v2135
    %2374 = vmatpush.msra.mxu0 %v2133
    %2375 = vmatpush.msra.mxu0 %v2131
    %2376 = vmatmul.f32.gmra.mxu0 %v2338
    %v2377 = vpop.f32.mrf.mxu0
    %v2378 = vadd.f32 0.0, %v2377
    %2379 = vdwg.mxu0
    %v2380 = vadd.f32 %v2334, %v2358
    %v2381 = vxor.u32 %v2380, 2147483648
    %v2382 = vmul.f32 %v2381, 1.442695
    %v2383 = vpow.pop %v2382
    %v2384 = vadd.f32 %v2383, 1.0
    %v2385 = vrcp.pop %v2384
    %v2386 = vmul.f32 %v2384, %v2385
    %v2387 = vsub.f32 1.0, %v2386
    %v2388 = vmul.f32 %v2385, %v2387
    %v2389 = vadd.f32 %v2385, %v2388
    %vm2390 = vweird.f32 %v2384
    %vm2391 = vweird.f32 %v2385
    %vm2392 = vmor %vm2390, %vm2391
    %v2393 = vsel %vm2392, %v2385, %v2389
    %v2394 = vand.u32 2147483647, %v2384
    %vm2395 = vcmp.eq.f32.partialorder %v2394, 8.507059e+37
    %v2396 = vand.u32 %v2384, 2147483648
    %v2397 = vor.u32 1.1754944e-38, %v2396
    %v2398 = vsel %vm2395, %v2397, %v2393
    %v2399 = vmul.f32 1.0, %v2398
    %v2400 = vadd.f32 %v2378, %v2216
    %v2401 = vmul.f32 %v2399, %v2400
    %v2402 = vadd.f32 %v2335, %v2401
    %v2403 = vtanh.pop %v2402
    %v2404 = vsub.f32 %v2327, %v2403
    %2406 = vrot.lane.b32.xlu0 %v2404, 64
    %v2407 = vpop.permute.xlu0 %2406
    %v2409 = vmul.f32 %v2399, %v2407
    %2411 = vrot.lane.b32.xlu0 %v2409, 64
    %v2412 = vpop.permute.xlu0 %2411
    %v2414 = vadd.f32 %v2403, %v2412
    %v2415 = vmul.f32 %v2336, %v2414
    %v2416 = vsub.f32 1.0, %v2336
    %v2417 = vmul.f32 %v2416, %v2327
    %v2418 = vadd.f32 %v2415, %v2417
    %2419 = vst.msk [vmem:[%s605] sm:$0xff] %vm412, %v2415
    %2420 = vst.msk [vmem:[%s607] sm:$0xff] %vm415, %v2415
    %v2421 = vld [vmem:[%s609] sm:$0xff]
    %v2422 = vld [vmem:[%s609 + $0x8] sm:$0xff]
    %v2423 = vld [vmem:[%s612] sm:$0xff]
    %v2424 = vld [vmem:[%s612 + $0x8] sm:$0xff]
    %v2425 = vsel %vm322, %v2421, %v2423
    %v2426 = vsel %vm323, %v2422, %v2424
    %v2427 = vld [vmem:[%s617] sm:$0xff]
    %v2429 = vsel %vm110, %v2418, 0
    %2431 = vmatpush.msra.mxu0 0.0
    %2432 = vmatpush.msra.mxu0 0.0
    %2433 = vmatpush.msra.mxu0 0.0
    %2434 = vmatpush.msra.mxu0 0.0
    %2435 = vmatpush.msra.mxu0 0.0
    %2436 = vmatpush.msra.mxu0 0.0
    %2437 = vmatpush.msra.mxu0 0.0
    %2438 = vmatpush.msra.mxu0 0.0
    %2439 = vmatpush.msra.mxu0 %v2144
    %2440 = vmatpush.msra.mxu0 %v2142
    %2441 = vmatpush.msra.mxu0 %v2140
    %2442 = vmatpush.msra.mxu0 %v2138
    %2443 = vmatpush.msra.mxu0 %v2136
    %2444 = vmatpush.msra.mxu0 %v2134
    %2445 = vmatpush.msra.mxu0 %v2132
    %2446 = vmatpush.msra.mxu0 %v2130
    %2447 = vmatmul.f32.gmra.mxu0 %v2429
    %v2448 = vpop.f32.mrf.mxu0
    %v2449 = vadd.f32 0.0, %v2448
    %2450 = vdwg.mxu0
    %2451 = vmatpush.msra.mxu0 0.0
    %2452 = vmatpush.msra.mxu0 0.0
    %2453 = vmatpush.msra.mxu0 0.0
    %2454 = vmatpush.msra.mxu0 0.0
    %2455 = vmatpush.msra.mxu0 0.0
    %2456 = vmatpush.msra.mxu0 0.0
    %2457 = vmatpush.msra.mxu0 0.0
    %2458 = vmatpush.msra.mxu0 0.0
    %2459 = vmatpush.msra.mxu0 %v2145
    %2460 = vmatpush.msra.mxu0 %v2143
    %2461 = vmatpush.msra.mxu0 %v2141
    %2462 = vmatpush.msra.mxu0 %v2139
    %2463 = vmatpush.msra.mxu0 %v2137
    %2464 = vmatpush.msra.mxu0 %v2135
    %2465 = vmatpush.msra.mxu0 %v2133
    %2466 = vmatpush.msra.mxu0 %v2131
    %2467 = vmatmul.f32.gmra.mxu0 %v2429
    %v2468 = vpop.f32.mrf.mxu0
    %v2469 = vadd.f32 0.0, %v2468
    %2470 = vdwg.mxu0
    %v2471 = vadd.f32 %v2425, %v2449
    %v2472 = vxor.u32 %v2471, 2147483648
    %v2473 = vmul.f32 %v2472, 1.442695
    %v2474 = vpow.pop %v2473
    %v2475 = vadd.f32 %v2474, 1.0
    %v2476 = vrcp.pop %v2475
    %v2477 = vmul.f32 %v2475, %v2476
    %v2478 = vsub.f32 1.0, %v2477
    %v2479 = vmul.f32 %v2476, %v2478
    %v2480 = vadd.f32 %v2476, %v2479
    %vm2481 = vweird.f32 %v2475
    %vm2482 = vweird.f32 %v2476
    %vm2483 = vmor %vm2481, %vm2482
    %v2484 = vsel %vm2483, %v2476, %v2480
    %v2485 = vand.u32 2147483647, %v2475
    %vm2486 = vcmp.eq.f32.partialorder %v2485, 8.507059e+37
    %v2487 = vand.u32 %v2475, 2147483648
    %v2488 = vor.u32 1.1754944e-38, %v2487
    %v2489 = vsel %vm2486, %v2488, %v2484
    %v2490 = vmul.f32 1.0, %v2489
    %v2491 = vadd.f32 %v2469, %v2216
    %v2492 = vmul.f32 %v2490, %v2491
    %v2493 = vadd.f32 %v2426, %v2492
    %v2494 = vtanh.pop %v2493
    %v2495 = vsub.f32 %v2418, %v2494
    %2497 = vrot.lane.b32.xlu0 %v2495, 64
    %v2498 = vpop.permute.xlu0 %2497
    %v2500 = vmul.f32 %v2490, %v2498
    %2502 = vrot.lane.b32.xlu0 %v2500, 64
    %v2503 = vpop.permute.xlu0 %2502
    %v2505 = vadd.f32 %v2494, %v2503
    %v2506 = vmul.f32 %v2427, %v2505
    %v2507 = vsub.f32 1.0, %v2427
    %v2508 = vmul.f32 %v2507, %v2418
    %v2509 = vadd.f32 %v2506, %v2508
    %2510 = vst.msk [vmem:[%s701] sm:$0xff] %vm412, %v2506
    %2511 = vst.msk [vmem:[%s703] sm:$0xff] %vm415, %v2506
    %v2512 = vld [vmem:[%s612] sm:$0xff]
    %v2513 = vld [vmem:[%s612 + $0x8] sm:$0xff]
    %v2514 = vld [vmem:[%s609] sm:$0xff]
    %v2515 = vld [vmem:[%s609 + $0x8] sm:$0xff]
    %v2516 = vsel %vm322, %v2512, %v2514
    %v2517 = vsel %vm323, %v2513, %v2515
    %v2518 = vld [vmem:[%s711] sm:$0xff]
    %v2520 = vsel %vm110, %v2509, 0
    %2522 = vmatpush.msra.mxu0 0.0
    %2523 = vmatpush.msra.mxu0 0.0
    %2524 = vmatpush.msra.mxu0 0.0
    %2525 = vmatpush.msra.mxu0 0.0
    %2526 = vmatpush.msra.mxu0 0.0
    %2527 = vmatpush.msra.mxu0 0.0
    %2528 = vmatpush.msra.mxu0 0.0
    %2529 = vmatpush.msra.mxu0 0.0
    %2530 = vmatpush.msra.mxu0 %v2144
    %2531 = vmatpush.msra.mxu0 %v2142
    %2532 = vmatpush.msra.mxu0 %v2140
    %2533 = vmatpush.msra.mxu0 %v2138
    %2534 = vmatpush.msra.mxu0 %v2136
    %2535 = vmatpush.msra.mxu0 %v2134
    %2536 = vmatpush.msra.mxu0 %v2132
    %2537 = vmatpush.msra.mxu0 %v2130
    %2538 = vmatmul.f32.gmra.mxu0 %v2520
    %v2539 = vpop.f32.mrf.mxu0
    %v2540 = vadd.f32 0.0, %v2539
    %2541 = vdwg.mxu0
    %2542 = vmatpush.msra.mxu0 0.0
    %2543 = vmatpush.msra.mxu0 0.0
    %2544 = vmatpush.msra.mxu0 0.0
    %2545 = vmatpush.msra.mxu0 0.0
    %2546 = vmatpush.msra.mxu0 0.0
    %2547 = vmatpush.msra.mxu0 0.0
    %2548 = vmatpush.msra.mxu0 0.0
    %2549 = vmatpush.msra.mxu0 0.0
    %2550 = vmatpush.msra.mxu0 %v2145
    %2551 = vmatpush.msra.mxu0 %v2143
    %2552 = vmatpush.msra.mxu0 %v2141
    %2553 = vmatpush.msra.mxu0 %v2139
    %2554 = vmatpush.msra.mxu0 %v2137
    %2555 = vmatpush.msra.mxu0 %v2135
    %2556 = vmatpush.msra.mxu0 %v2133
    %2557 = vmatpush.msra.mxu0 %v2131
    %2558 = vmatmul.f32.gmra.mxu0 %v2520
    %v2559 = vpop.f32.mrf.mxu0
    %v2560 = vadd.f32 0.0, %v2559
    %2561 = vdwg.mxu0
    %v2562 = vadd.f32 %v2516, %v2540
    %v2563 = vxor.u32 %v2562, 2147483648
    %v2564 = vmul.f32 %v2563, 1.442695
    %v2565 = vpow.pop %v2564
    %v2566 = vadd.f32 %v2565, 1.0
    %v2567 = vrcp.pop %v2566
    %v2568 = vmul.f32 %v2566, %v2567
    %v2569 = vsub.f32 1.0, %v2568
    %v2570 = vmul.f32 %v2567, %v2569
    %v2571 = vadd.f32 %v2567, %v2570
    %vm2572 = vweird.f32 %v2566
    %vm2573 = vweird.f32 %v2567
    %vm2574 = vmor %vm2572, %vm2573
    %v2575 = vsel %vm2574, %v2567, %v2571
    %v2576 = vand.u32 2147483647, %v2566
    %vm2577 = vcmp.eq.f32.partialorder %v2576, 8.507059e+37
    %v2578 = vand.u32 %v2566, 2147483648
    %v2579 = vor.u32 1.1754944e-38, %v2578
    %v2580 = vsel %vm2577, %v2579, %v2575
    %v2581 = vmul.f32 1.0, %v2580
    %v2582 = vadd.f32 %v2560, %v2216
    %v2583 = vmul.f32 %v2581, %v2582
    %v2584 = vadd.f32 %v2517, %v2583
    %v2585 = vtanh.pop %v2584
    %v2586 = vsub.f32 %v2509, %v2585
    %2588 = vrot.lane.b32.xlu0 %v2586, 64
    %v2589 = vpop.permute.xlu0 %2588
    %v2591 = vmul.f32 %v2581, %v2589
    %2593 = vrot.lane.b32.xlu0 %v2591, 64
    %v2594 = vpop.permute.xlu0 %2593
    %v2596 = vadd.f32 %v2585, %v2594
    %v2597 = vmul.f32 %v2518, %v2596
    %v2598 = vsub.f32 1.0, %v2518
    %v2599 = vmul.f32 %v2598, %v2509
    %v2600 = vadd.f32 %v2597, %v2599
    %2601 = vst.msk [vmem:[%s703] sm:$0xff] %vm412, %v2597
    %2602 = vst.msk [vmem:[%s701] sm:$0xff] %vm415, %v2597
    %v2603 = vld [vmem:[%s516] sm:$0xff]
    %v2604 = vld [vmem:[%s516 + $0x8] sm:$0xff]
    %v2605 = vld [vmem:[%s513] sm:$0xff]
    %v2606 = vld [vmem:[%s513 + $0x8] sm:$0xff]
    %v2607 = vsel %vm322, %v2603, %v2605
    %v2608 = vsel %vm323, %v2604, %v2606
    %v2609 = vld [vmem:[%s803] sm:$0xff]
    %v2611 = vsel %vm110, %v2600, 0
    %2613 = vmatpush.msra.mxu0 0.0
    %2614 = vmatpush.msra.mxu0 0.0
    %2615 = vmatpush.msra.mxu0 0.0
    %2616 = vmatpush.msra.mxu0 0.0
    %2617 = vmatpush.msra.mxu0 0.0
    %2618 = vmatpush.msra.mxu0 0.0
    %2619 = vmatpush.msra.mxu0 0.0
    %2620 = vmatpush.msra.mxu0 0.0
    %2621 = vmatpush.msra.mxu0 %v2144
    %2622 = vmatpush.msra.mxu0 %v2142
    %2623 = vmatpush.msra.mxu0 %v2140
    %2624 = vmatpush.msra.mxu0 %v2138
    %2625 = vmatpush.msra.mxu0 %v2136
    %2626 = vmatpush.msra.mxu0 %v2134
    %2627 = vmatpush.msra.mxu0 %v2132
    %2628 = vmatpush.msra.mxu0 %v2130
    %2629 = vmatmul.f32.gmra.mxu0 %v2611
    %v2630 = vpop.f32.mrf.mxu0
    %v2631 = vadd.f32 0.0, %v2630
    %2632 = vdwg.mxu0
    %2633 = vmatpush.msra.mxu0 0.0
    %2634 = vmatpush.msra.mxu0 0.0
    %2635 = vmatpush.msra.mxu0 0.0
    %2636 = vmatpush.msra.mxu0 0.0
    %2637 = vmatpush.msra.mxu0 0.0
    %2638 = vmatpush.msra.mxu0 0.0
    %2639 = vmatpush.msra.mxu0 0.0
    %2640 = vmatpush.msra.mxu0 0.0
    %2641 = vmatpush.msra.mxu0 %v2145
    %2642 = vmatpush.msra.mxu0 %v2143
    %2643 = vmatpush.msra.mxu0 %v2141
    %2644 = vmatpush.msra.mxu0 %v2139
    %2645 = vmatpush.msra.mxu0 %v2137
    %2646 = vmatpush.msra.mxu0 %v2135
    %2647 = vmatpush.msra.mxu0 %v2133
    %2648 = vmatpush.msra.mxu0 %v2131
    %2649 = vmatmul.f32.gmra.mxu0 %v2611
    %v2650 = vpop.f32.mrf.mxu0
    %v2651 = vadd.f32 0.0, %v2650
    %2652 = vdwg.mxu0
    %v2653 = vadd.f32 %v2607, %v2631
    %v2654 = vxor.u32 %v2653, 2147483648
    %v2655 = vmul.f32 %v2654, 1.442695
    %v2656 = vpow.pop %v2655
    %v2657 = vadd.f32 %v2656, 1.0
    %v2658 = vrcp.pop %v2657
    %v2659 = vmul.f32 %v2657, %v2658
    %v2660 = vsub.f32 1.0, %v2659
    %v2661 = vmul.f32 %v2658, %v2660
    %v2662 = vadd.f32 %v2658, %v2661
    %vm2663 = vweird.f32 %v2657
    %vm2664 = vweird.f32 %v2658
    %vm2665 = vmor %vm2663, %vm2664
    %v2666 = vsel %vm2665, %v2658, %v2662
    %v2667 = vand.u32 2147483647, %v2657
    %vm2668 = vcmp.eq.f32.partialorder %v2667, 8.507059e+37
    %v2669 = vand.u32 %v2657, 2147483648
    %v2670 = vor.u32 1.1754944e-38, %v2669
    %v2671 = vsel %vm2668, %v2670, %v2666
    %v2672 = vmul.f32 1.0, %v2671
    %v2673 = vadd.f32 %v2651, %v2216
    %v2674 = vmul.f32 %v2672, %v2673
    %v2675 = vadd.f32 %v2608, %v2674
    %v2676 = vtanh.pop %v2675
    %v2677 = vsub.f32 %v2600, %v2676
    %2679 = vrot.lane.b32.xlu0 %v2677, 64
    %v2680 = vpop.permute.xlu0 %2679
    %v2682 = vmul.f32 %v2672, %v2680
    %2684 = vrot.lane.b32.xlu0 %v2682, 64
    %v2685 = vpop.permute.xlu0 %2684
    %v2687 = vadd.f32 %v2676, %v2685
    %v2688 = vmul.f32 %v2609, %v2687
    %v2689 = vsub.f32 1.0, %v2609
    %v2690 = vmul.f32 %v2689, %v2600
    %v2691 = vadd.f32 %v2688, %v2690
    %2692 = vst.msk [vmem:[%s607] sm:$0xff] %vm412, %v2688
    %2693 = vst.msk [vmem:[%s605] sm:$0xff] %vm415, %v2688
    %v2694 = vld [vmem:[%s420] sm:$0xff]
    %v2695 = vld [vmem:[%s420 + $0x8] sm:$0xff]
    %v2696 = vld [vmem:[%s417] sm:$0xff]
    %v2697 = vld [vmem:[%s417 + $0x8] sm:$0xff]
    %v2698 = vsel %vm322, %v2694, %v2696
    %v2699 = vsel %vm323, %v2695, %v2697
    %v2700 = vld [vmem:[%s895] sm:$0xff]
    %v2702 = vsel %vm110, %v2691, 0
    %2704 = vmatpush.msra.mxu0 0.0
    %2705 = vmatpush.msra.mxu0 0.0
    %2706 = vmatpush.msra.mxu0 0.0
    %2707 = vmatpush.msra.mxu0 0.0
    %2708 = vmatpush.msra.mxu0 0.0
    %2709 = vmatpush.msra.mxu0 0.0
    %2710 = vmatpush.msra.mxu0 0.0
    %2711 = vmatpush.msra.mxu0 0.0
    %2712 = vmatpush.msra.mxu0 %v2144
    %2713 = vmatpush.msra.mxu0 %v2142
    %2714 = vmatpush.msra.mxu0 %v2140
    %2715 = vmatpush.msra.mxu0 %v2138
    %2716 = vmatpush.msra.mxu0 %v2136
    %2717 = vmatpush.msra.mxu0 %v2134
    %2718 = vmatpush.msra.mxu0 %v2132
    %2719 = vmatpush.msra.mxu0 %v2130
    %2720 = vmatmul.f32.gmra.mxu0 %v2702
    %v2721 = vpop.f32.mrf.mxu0
    %v2722 = vadd.f32 0.0, %v2721
    %2723 = vdwg.mxu0
    %2724 = vmatpush.msra.mxu0 0.0
    %2725 = vmatpush.msra.mxu0 0.0
    %2726 = vmatpush.msra.mxu0 0.0
    %2727 = vmatpush.msra.mxu0 0.0
    %2728 = vmatpush.msra.mxu0 0.0
    %2729 = vmatpush.msra.mxu0 0.0
    %2730 = vmatpush.msra.mxu0 0.0
    %2731 = vmatpush.msra.mxu0 0.0
    %2732 = vmatpush.msra.mxu0 %v2145
    %2733 = vmatpush.msra.mxu0 %v2143
    %2734 = vmatpush.msra.mxu0 %v2141
    %2735 = vmatpush.msra.mxu0 %v2139
    %2736 = vmatpush.msra.mxu0 %v2137
    %2737 = vmatpush.msra.mxu0 %v2135
    %2738 = vmatpush.msra.mxu0 %v2133
    %2739 = vmatpush.msra.mxu0 %v2131
    %2740 = vmatmul.f32.gmra.mxu0 %v2702
    %v2741 = vpop.f32.mrf.mxu0
    %v2742 = vadd.f32 0.0, %v2741
    %2743 = vdwg.mxu0
    %v2744 = vadd.f32 %v2698, %v2722
    %v2745 = vxor.u32 %v2744, 2147483648
    %v2746 = vmul.f32 %v2745, 1.442695
    %v2747 = vpow.pop %v2746
    %v2748 = vadd.f32 %v2747, 1.0
    %v2749 = vrcp.pop %v2748
    %v2750 = vmul.f32 %v2748, %v2749
    %v2751 = vsub.f32 1.0, %v2750
    %v2752 = vmul.f32 %v2749, %v2751
    %v2753 = vadd.f32 %v2749, %v2752
    %vm2754 = vweird.f32 %v2748
    %vm2755 = vweird.f32 %v2749
    %vm2756 = vmor %vm2754, %vm2755
    %v2757 = vsel %vm2756, %v2749, %v2753
    %v2758 = vand.u32 2147483647, %v2748
    %vm2759 = vcmp.eq.f32.partialorder %v2758, 8.507059e+37
    %v2760 = vand.u32 %v2748, 2147483648
    %v2761 = vor.u32 1.1754944e-38, %v2760
    %v2762 = vsel %vm2759, %v2761, %v2757
    %v2763 = vmul.f32 1.0, %v2762
    %v2764 = vadd.f32 %v2742, %v2216
    %v2765 = vmul.f32 %v2763, %v2764
    %v2766 = vadd.f32 %v2699, %v2765
    %v2767 = vtanh.pop %v2766
    %v2768 = vsub.f32 %v2691, %v2767
    %2770 = vrot.lane.b32.xlu0 %v2768, 64
    %v2771 = vpop.permute.xlu0 %2770
    %v2773 = vmul.f32 %v2763, %v2771
    %2775 = vrot.lane.b32.xlu0 %v2773, 64
    %v2776 = vpop.permute.xlu0 %2775
    %v2778 = vadd.f32 %v2767, %v2776
    %v2779 = vmul.f32 %v2700, %v2778
    %v2780 = vsub.f32 1.0, %v2700
    %v2781 = vmul.f32 %v2780, %v2691
    %v2782 = vadd.f32 %v2779, %v2781
    %2783 = vst.msk [vmem:[%s511] sm:$0xff] %vm412, %v2779
    %2784 = vst.msk [vmem:[%s509] sm:$0xff] %vm415, %v2779
    %v2785 = vld [vmem:[%s317] sm:$0xff]
    %v2786 = vld [vmem:[%s317 + $0x8] sm:$0xff]
    %v2787 = vld [vmem:[#allocation2] sm:$0xff]
    %v2788 = vld [vmem:[#allocation2 + $0x8] sm:$0xff]
    %v2789 = vsel %vm322, %v2785, %v2787
    %v2790 = vsel %vm323, %v2786, %v2788
    %v2791 = vld [vmem:[%s987] sm:$0xff]
    %v2793 = vsel %vm110, %v2782, 0
    %2795 = vmatpush.msra.mxu0 0.0
    %2796 = vmatpush.msra.mxu0 0.0
    %2797 = vmatpush.msra.mxu0 0.0
    %2798 = vmatpush.msra.mxu0 0.0
    %2799 = vmatpush.msra.mxu0 0.0
    %2800 = vmatpush.msra.mxu0 0.0
    %2801 = vmatpush.msra.mxu0 0.0
    %2802 = vmatpush.msra.mxu0 0.0
    %2803 = vmatpush.msra.mxu0 %v2144
    %2804 = vmatpush.msra.mxu0 %v2142
    %2805 = vmatpush.msra.mxu0 %v2140
    %2806 = vmatpush.msra.mxu0 %v2138
    %2807 = vmatpush.msra.mxu0 %v2136
    %2808 = vmatpush.msra.mxu0 %v2134
    %2809 = vmatpush.msra.mxu0 %v2132
    %2810 = vmatpush.msra.mxu0 %v2130
    %2811 = vmatmul.f32.gmra.mxu0 %v2793
    %v2812 = vpop.f32.mrf.mxu0
    %v2813 = vadd.f32 0.0, %v2812
    %2814 = vdwg.mxu0
    %2815 = vmatpush.msra.mxu0 0.0
    %2816 = vmatpush.msra.mxu0 0.0
    %2817 = vmatpush.msra.mxu0 0.0
    %2818 = vmatpush.msra.mxu0 0.0
    %2819 = vmatpush.msra.mxu0 0.0
    %2820 = vmatpush.msra.mxu0 0.0
    %2821 = vmatpush.msra.mxu0 0.0
    %2822 = vmatpush.msra.mxu0 0.0
    %2823 = vmatpush.msra.mxu0 %v2145
    %2824 = vmatpush.msra.mxu0 %v2143
    %2825 = vmatpush.msra.mxu0 %v2141
    %2826 = vmatpush.msra.mxu0 %v2139
    %2827 = vmatpush.msra.mxu0 %v2137
    %2828 = vmatpush.msra.mxu0 %v2135
    %2829 = vmatpush.msra.mxu0 %v2133
    %2830 = vmatpush.msra.mxu0 %v2131
    %2831 = vmatmul.f32.gmra.mxu0 %v2793
    %v2832 = vpop.f32.mrf.mxu0
    %v2833 = vadd.f32 0.0, %v2832
    %2834 = vdwg.mxu0
    %v2835 = vadd.f32 %v2789, %v2813
    %v2836 = vxor.u32 %v2835, 2147483648
    %v2837 = vmul.f32 %v2836, 1.442695
    %v2838 = vpow.pop %v2837
    %v2839 = vadd.f32 %v2838, 1.0
    %v2840 = vrcp.pop %v2839
    %v2841 = vmul.f32 %v2839, %v2840
    %v2842 = vsub.f32 1.0, %v2841
    %v2843 = vmul.f32 %v2840, %v2842
    %v2844 = vadd.f32 %v2840, %v2843
    %vm2845 = vweird.f32 %v2839
    %vm2846 = vweird.f32 %v2840
    %vm2847 = vmor %vm2845, %vm2846
    %v2848 = vsel %vm2847, %v2840, %v2844
    %v2849 = vand.u32 2147483647, %v2839
    %vm2850 = vcmp.eq.f32.partialorder %v2849, 8.507059e+37
    %v2851 = vand.u32 %v2839, 2147483648
    %v2852 = vor.u32 1.1754944e-38, %v2851
    %v2853 = vsel %vm2850, %v2852, %v2848
    %v2854 = vmul.f32 1.0, %v2853
    %v2855 = vadd.f32 %v2833, %v2216
    %v2856 = vmul.f32 %v2854, %v2855
    %v2857 = vadd.f32 %v2790, %v2856
    %v2858 = vtanh.pop %v2857
    %v2859 = vsub.f32 %v2782, %v2858
    %2861 = vrot.lane.b32.xlu0 %v2859, 64
    %v2862 = vpop.permute.xlu0 %2861
    %v2864 = vmul.f32 %v2854, %v2862
    %2866 = vrot.lane.b32.xlu0 %v2864, 64
    %v2867 = vpop.permute.xlu0 %2866
    %v2869 = vadd.f32 %v2858, %v2867
    %v2870 = vmul.f32 %v2791, %v2869
    %2871 = vst.msk [vmem:[%s414] sm:$0xff] %vm412, %v2870
    %2872 = vst.msk [vmem:[#allocation4] sm:$0xff] %vm415, %v2870
    %v2873 = vld [vmem:[#allocation4] sm:$0xff]
    %v2874 = vld [vmem:[#allocation4 + $0x8] sm:$0xff]
    %v2875 = vld [vmem:[#allocation4 + $0x10] sm:$0xff]
    %v2876 = vld [vmem:[#allocation4 + $0x18] sm:$0xff]
    %v2877 = vld [vmem:[#allocation4 + $0x20] sm:$0xff]
    %v2878 = vld [vmem:[#allocation4 + $0x28] sm:$0xff]
    %v2879 = vld [vmem:[#allocation4 + $0x30] sm:$0xff]
    %v2880 = vld [vmem:[#allocation4 + $0x38] sm:$0xff]
    %v2881 = vld [vmem:[%s6] sm:$0xff]
    %v2882 = vld [vmem:[%s6 + $0x8] sm:$0xff]
    %v2883 = vld [vmem:[%s6 + $0x10] sm:$0xff]
    %v2884 = vld [vmem:[%s6 + $0x18] sm:$0xff]
    %v2885 = vld [vmem:[%s6 + $0x20] sm:$0xff]
    %v2886 = vld [vmem:[%s6 + $0x28] sm:$0xff]
    %v2887 = vld [vmem:[%s6 + $0x30] sm:$0xff]
    %v2888 = vld [vmem:[%s6 + $0x38] sm:$0xff]
    %v2889 = vld [vmem:[%s7] sm:$0x1]
    %v2891 = vperm.slane %v2889, 0
    %v2894 = vsel %vm110, %v2873, 0
    %v2897 = vsel %vm110, %v2874, 0
    %v2900 = vsel %vm110, %v2875, 0
    %v2903 = vsel %vm110, %v2876, 0
    %v2906 = vsel %vm110, %v2877, 0
    %v2909 = vsel %vm110, %v2878, 0
    %v2912 = vsel %vm110, %v2879, 0
    %v2915 = vsel %vm110, %v2880, 0
    %2917 = vmatpush.msra.mxu0 0.0
    %2918 = vmatpush.msra.mxu0 0.0
    %2919 = vmatpush.msra.mxu0 0.0
    %2920 = vmatpush.msra.mxu0 0.0
    %2921 = vmatpush.msra.mxu0 0.0
    %2922 = vmatpush.msra.mxu0 0.0
    %2923 = vmatpush.msra.mxu0 0.0
    %2924 = vmatpush.msra.mxu0 0.0
    %2925 = vmatpush.msra.mxu0 %v2888
    %2926 = vmatpush.msra.mxu0 %v2887
    %2927 = vmatpush.msra.mxu0 %v2886
    %2928 = vmatpush.msra.mxu0 %v2885
    %2929 = vmatpush.msra.mxu0 %v2884
    %2930 = vmatpush.msra.mxu0 %v2883
    %2931 = vmatpush.msra.mxu0 %v2882
    %2932 = vmatpush.msra.mxu0 %v2881
    %2933 = vmatmul.f32.gmra.mxu0 %v2894
    %v2934 = vpop.f32.mrf.mxu0
    %v2935 = vadd.f32 %v2891, %v2934
    %2936 = vmatmul.f32.gmra.mxu0 %v2897
    %v2937 = vpop.f32.mrf.mxu0
    %v2938 = vadd.f32 %v2891, %v2937
    %2939 = vmatmul.f32.gmra.mxu0 %v2900
    %v2940 = vpop.f32.mrf.mxu0
    %v2941 = vadd.f32 %v2891, %v2940
    %2942 = vmatmul.f32.gmra.mxu0 %v2903
    %v2943 = vpop.f32.mrf.mxu0
    %v2944 = vadd.f32 %v2891, %v2943
    %2945 = vmatmul.f32.gmra.mxu0 %v2906
    %v2946 = vpop.f32.mrf.mxu0
    %v2947 = vadd.f32 %v2891, %v2946
    %2948 = vmatmul.f32.gmra.mxu0 %v2909
    %v2949 = vpop.f32.mrf.mxu0
    %v2950 = vadd.f32 %v2891, %v2949
    %2951 = vmatmul.f32.gmra.mxu0 %v2912
    %v2952 = vpop.f32.mrf.mxu0
    %v2953 = vadd.f32 %v2891, %v2952
    %2954 = vmatmul.f32.gmra.mxu0 %v2915
    %v2955 = vpop.f32.mrf.mxu0
    %v2956 = vadd.f32 %v2891, %v2955
    %2957 = vdwg.mxu0
    %v2958 = vtanh.pop %v2935
    %v2959 = vtanh.pop %v2938
    %v2960 = vtanh.pop %v2941
    %v2961 = vtanh.pop %v2944
    %v2962 = vtanh.pop %v2947
    %v2963 = vtanh.pop %v2950
    %v2964 = vtanh.pop %v2953
    %v2965 = vtanh.pop %v2956
    %v2966 = vld [vmem:[%s8] sm:$0xff]
    %v2967 = vld [vmem:[%s8 + $0x8] sm:$0xff]
    %v2968 = vld [vmem:[%s8 + $0x10] sm:$0xff]
    %v2969 = vld [vmem:[%s8 + $0x18] sm:$0xff]
    %v2970 = vld [vmem:[%s8 + $0x20] sm:$0xff]
    %v2971 = vld [vmem:[%s8 + $0x28] sm:$0xff]
    %v2972 = vld [vmem:[%s8 + $0x30] sm:$0xff]
    %v2973 = vld [vmem:[%s8 + $0x38] sm:$0xff]
    %v2975 = vsel %vm110, %v2958, 0
    %v2978 = vsel %vm110, %v2959, 0
    %v2981 = vsel %vm110, %v2960, 0
    %v2984 = vsel %vm110, %v2961, 0
    %v2987 = vsel %vm110, %v2962, 0
    %v2990 = vsel %vm110, %v2963, 0
    %v2993 = vsel %vm110, %v2964, 0
    %v2996 = vsel %vm110, %v2965, 0
    %2998 = vmatpush.msra.mxu0 0.0
    %2999 = vmatpush.msra.mxu0 0.0
    %3000 = vmatpush.msra.mxu0 0.0
    %3001 = vmatpush.msra.mxu0 0.0
    %3002 = vmatpush.msra.mxu0 0.0
    %3003 = vmatpush.msra.mxu0 0.0
    %3004 = vmatpush.msra.mxu0 0.0
    %3005 = vmatpush.msra.mxu0 0.0
    %3006 = vmatpush.msra.mxu0 %v2973
    %3007 = vmatpush.msra.mxu0 %v2972
    %3008 = vmatpush.msra.mxu0 %v2971
    %3009 = vmatpush.msra.mxu0 %v2970
    %3010 = vmatpush.msra.mxu0 %v2969
    %3011 = vmatpush.msra.mxu0 %v2968
    %3012 = vmatpush.msra.mxu0 %v2967
    %3013 = vmatpush.msra.mxu0 %v2966
    %3014 = vmatmul.f32.gmra.mxu0 %v2975
    %v3015 = vpop.f32.mrf.mxu0
    %v3016 = vadd.f32 0.0, %v3015
    %3017 = vmatmul.f32.gmra.mxu0 %v2978
    %v3018 = vpop.f32.mrf.mxu0
    %v3019 = vadd.f32 0.0, %v3018
    %3020 = vmatmul.f32.gmra.mxu0 %v2981
    %v3021 = vpop.f32.mrf.mxu0
    %v3022 = vadd.f32 0.0, %v3021
    %3023 = vmatmul.f32.gmra.mxu0 %v2984
    %v3024 = vpop.f32.mrf.mxu0
    %v3025 = vadd.f32 0.0, %v3024
    %3026 = vmatmul.f32.gmra.mxu0 %v2987
    %v3027 = vpop.f32.mrf.mxu0
    %v3028 = vadd.f32 0.0, %v3027
    %3029 = vmatmul.f32.gmra.mxu0 %v2990
    %v3030 = vpop.f32.mrf.mxu0
    %v3031 = vadd.f32 0.0, %v3030
    %3032 = vmatmul.f32.gmra.mxu0 %v2993
    %v3033 = vpop.f32.mrf.mxu0
    %v3034 = vadd.f32 0.0, %v3033
    %3035 = vmatmul.f32.gmra.mxu0 %v2996
    %v3036 = vpop.f32.mrf.mxu0
    %v3037 = vadd.f32 0.0, %v3036
    %3038 = vdwg.mxu0
    %v3039 = vsel %vm110, %v2873, 0.0
    %3040 = vadd.xlane.f32.xlu0 %v3039
    %v3041 = vpop.xlane.xlu0 %3040
    %v3042 = vsel %vm110, %v2874, 0.0
    %3043 = vadd.xlane.f32.xlu0 %v3042
    %v3044 = vpop.xlane.xlu0 %3043
    %v3045 = vsel %vm110, %v2875, 0.0
    %3046 = vadd.xlane.f32.xlu0 %v3045
    %v3047 = vpop.xlane.xlu0 %3046
    %v3048 = vsel %vm110, %v2876, 0.0
    %3049 = vadd.xlane.f32.xlu0 %v3048
    %v3050 = vpop.xlane.xlu0 %3049
    %v3051 = vsel %vm110, %v2877, 0.0
    %3052 = vadd.xlane.f32.xlu0 %v3051
    %v3053 = vpop.xlane.xlu0 %3052
    %v3054 = vsel %vm110, %v2878, 0.0
    %3055 = vadd.xlane.f32.xlu0 %v3054
    %v3056 = vpop.xlane.xlu0 %3055
    %v3057 = vsel %vm110, %v2879, 0.0
    %3058 = vadd.xlane.f32.xlu0 %v3057
    %v3059 = vpop.xlane.xlu0 %3058
    %v3060 = vsel %vm110, %v2880, 0.0
    %3061 = vadd.xlane.f32.xlu0 %v3060
    %v3062 = vpop.xlane.xlu0 %3061
    %vm3063 = vcmp.eq.f32.partialorder %v3041, 0.0
    %vm3064 = vcmp.eq.f32.partialorder %v3044, 0.0
    %vm3065 = vcmp.eq.f32.partialorder %v3047, 0.0
    %vm3066 = vcmp.eq.f32.partialorder %v3050, 0.0
    %vm3067 = vcmp.eq.f32.partialorder %v3053, 0.0
    %vm3068 = vcmp.eq.f32.partialorder %v3056, 0.0
    %vm3069 = vcmp.eq.f32.partialorder %v3059, 0.0
    %vm3070 = vcmp.eq.f32.partialorder %v3062, 0.0
    %v3071 = vsel %vm3063, -1e+10, %v3016
    %v3072 = vsel %vm3064, -1e+10, %v3019
    %v3073 = vsel %vm3065, -1e+10, %v3022
    %v3074 = vsel %vm3066, -1e+10, %v3025
    %v3075 = vsel %vm3067, -1e+10, %v3028
    %v3076 = vsel %vm3068, -1e+10, %v3031
    %v3077 = vsel %vm3069, -1e+10, %v3034
    %v3078 = vsel %vm3070, -1e+10, %v3037
    %vm3079 = vcmask 7168
    %v3080 = vsel %vm3079, %v3071, -inf
    %v3081 = vsel %vm3079, %v3072, -inf
    %v3082 = vsel %vm3079, %v3073, -inf
    %v3083 = vsel %vm3079, %v3074, -inf
    %v3084 = vsel %vm3079, %v3075, -inf
    %v3085 = vmax.f32 %v3080, %v3084
    %v3086 = vsel %vm3079, %v3076, -inf
    %v3087 = vmax.f32 %v3081, %v3086
    %v3088 = vsel %vm3079, %v3077, -inf
    %v3089 = vmax.f32 %v3082, %v3088
    %v3090 = vsel %vm3079, %v3078, -inf
    %v3091 = vmax.f32 %v3083, %v3090
    %v3092 = vmax.f32 %v3085, %v3087
    %v3093 = vmax.f32 %v3089, %v3091
    %v3094 = vmax.f32 %v3092, %v3093
    %v3095 = vsub.f32 %v3071, %v3094
    %v3096 = vsub.f32 %v3072, %v3094
    %v3097 = vsub.f32 %v3073, %v3094
    %v3098 = vsub.f32 %v3074, %v3094
    %v3099 = vsub.f32 %v3075, %v3094
    %v3100 = vsub.f32 %v3076, %v3094
    %v3101 = vsub.f32 %v3077, %v3094
    %v3102 = vsub.f32 %v3078, %v3094
    %v3103 = vmul.f32 %v3095, 1.442695
    %v3104 = vpow.pop %v3103
    %v3105 = vmul.f32 %v3096, 1.442695
    %v3106 = vpow.pop %v3105
    %v3107 = vmul.f32 %v3097, 1.442695
    %v3108 = vpow.pop %v3107
    %v3109 = vmul.f32 %v3098, 1.442695
    %v3110 = vpow.pop %v3109
    %v3111 = vmul.f32 %v3099, 1.442695
    %v3112 = vpow.pop %v3111
    %v3113 = vmul.f32 %v3100, 1.442695
    %v3114 = vpow.pop %v3113
    %v3115 = vmul.f32 %v3101, 1.442695
    %v3116 = vpow.pop %v3115
    %v3117 = vmul.f32 %v3102, 1.442695
    %v3118 = vpow.pop %v3117
    %v3119 = vsel %vm3079, %v3104, 0.0
    %v3120 = vsel %vm3079, %v3106, 0.0
    %v3121 = vadd.f32 %v3119, %v3120
    %v3122 = vsel %vm3079, %v3108, 0.0
    %v3123 = vadd.f32 %v3121, %v3122
    %v3124 = vsel %vm3079, %v3110, 0.0
    %v3125 = vadd.f32 %v3123, %v3124
    %v3126 = vsel %vm3079, %v3112, 0.0
    %v3127 = vadd.f32 %v3125, %v3126
    %v3128 = vsel %vm3079, %v3114, 0.0
    %v3129 = vadd.f32 %v3127, %v3128
    %v3130 = vsel %vm3079, %v3116, 0.0
    %v3131 = vadd.f32 %v3129, %v3130
    %v3132 = vsel %vm3079, %v3118, 0.0
    %v3133 = vadd.f32 %v3131, %v3132
    %v3134 = vrcp.pop %v3133
    %v3135 = vmul.f32 %v3133, %v3134
    %v3136 = vsub.f32 1.0, %v3135
    %v3137 = vmul.f32 %v3134, %v3136
    %v3138 = vadd.f32 %v3134, %v3137
    %vm3139 = vweird.f32 %v3133
    %vm3140 = vweird.f32 %v3134
    %vm3141 = vmor %vm3139, %vm3140
    %v3142 = vsel %vm3141, %v3134, %v3138
    %v3143 = vand.u32 2147483647, %v3133
    %vm3144 = vcmp.eq.f32.partialorder %v3143, 8.507059e+37
    %v3145 = vand.u32 %v3133, 2147483648
    %v3146 = vor.u32 1.1754944e-38, %v3145
    %v3147 = vsel %vm3144, %v3146, %v3142
    %v3148 = vmul.f32 %v3104, %v3147
    %v3149 = vmul.f32 %v3106, %v3147
    %v3150 = vmul.f32 %v3108, %v3147
    %v3151 = vmul.f32 %v3110, %v3147
    %v3152 = vmul.f32 %v3112, %v3147
    %v3153 = vmul.f32 %v3114, %v3147
    %v3154 = vmul.f32 %v3116, %v3147
    %v3155 = vmul.f32 %v3118, %v3147
    %3157 = vset.pattern.permute.xlu0 0
    %3158 = vperm.xlu0 %3157, %v3148
    %v3159 = vpop.permute.xlu0 %3158
    %3162 = vset.pattern.permute.xlu0 0
    %3163 = vperm.xlu0 %3162, %v3149
    %v3164 = vpop.permute.xlu0 %3163
    %3167 = vset.pattern.permute.xlu0 0
    %3168 = vperm.xlu0 %3167, %v3150
    %v3169 = vpop.permute.xlu0 %3168
    %3172 = vset.pattern.permute.xlu0 0
    %3173 = vperm.xlu0 %3172, %v3151
    %v3174 = vpop.permute.xlu0 %3173
    %3177 = vset.pattern.permute.xlu0 0
    %3178 = vperm.xlu0 %3177, %v3152
    %v3179 = vpop.permute.xlu0 %3178
    %3182 = vset.pattern.permute.xlu0 0
    %3183 = vperm.xlu0 %3182, %v3153
    %v3184 = vpop.permute.xlu0 %3183
    %3187 = vset.pattern.permute.xlu0 0
    %3188 = vperm.xlu0 %3187, %v3154
    %v3189 = vpop.permute.xlu0 %3188
    %3192 = vset.pattern.permute.xlu0 0
    %3193 = vperm.xlu0 %3192, %v3155
    %v3194 = vpop.permute.xlu0 %3193
    %v3196 = vmul.f32 %v3159, %v2873
    %v3197 = vmul.f32 %v3164, %v2874
    %v3198 = vmul.f32 %v3169, %v2875
    %v3199 = vmul.f32 %v3174, %v2876
    %v3200 = vmul.f32 %v3179, %v2877
    %v3201 = vmul.f32 %v3184, %v2878
    %v3202 = vmul.f32 %v3189, %v2879
    %v3203 = vmul.f32 %v3194, %v2880
    %v3204 = vsel %vm110, %v3196, 0.0
    %v3205 = vsel %vm110, %v3197, 0.0
    %v3206 = vadd.f32 %v3204, %v3205
    %v3207 = vsel %vm110, %v3198, 0.0
    %v3208 = vadd.f32 %v3206, %v3207
    %v3209 = vsel %vm110, %v3199, 0.0
    %v3210 = vadd.f32 %v3208, %v3209
    %v3211 = vsel %vm110, %v3200, 0.0
    %v3212 = vadd.f32 %v3210, %v3211
    %v3213 = vsel %vm110, %v3201, 0.0
    %v3214 = vadd.f32 %v3212, %v3213
    %v3215 = vsel %vm110, %v3202, 0.0
    %v3216 = vadd.f32 %v3214, %v3215
    %v3217 = vsel %vm110, %v3203, 0.0
    %v3218 = vadd.f32 %v3216, %v3217
    %v3219 = vmax.f32 %v3218, 0.0
    %v3220 = vld [vmem:[%s9] sm:$0xff]
    %v3221 = vld [vmem:[%s9 + $0x8] sm:$0xff]
    %v3222 = vld [vmem:[%s9 + $0x10] sm:$0xff]
    %v3223 = vld [vmem:[%s9 + $0x18] sm:$0xff]
    %v3224 = vld [vmem:[%s9 + $0x20] sm:$0xff]
    %v3225 = vld [vmem:[%s9 + $0x28] sm:$0xff]
    %v3226 = vld [vmem:[%s9 + $0x30] sm:$0xff]
    %v3227 = vld [vmem:[%s9 + $0x38] sm:$0xff]
    %v3228 = vld [vmem:[%s10] sm:$0x1]
    %v3230 = vperm.slane %v3228, 0
    %v3233 = vsel %vm110, %v3219, 0
    %3235 = vmatpush.msra.mxu0 0.0
    %3236 = vmatpush.msra.mxu0 0.0
    %3237 = vmatpush.msra.mxu0 0.0
    %3238 = vmatpush.msra.mxu0 0.0
    %3239 = vmatpush.msra.mxu0 0.0
    %3240 = vmatpush.msra.mxu0 0.0
    %3241 = vmatpush.msra.mxu0 0.0
    %3242 = vmatpush.msra.mxu0 0.0
    %3243 = vmatpush.msra.mxu0 %v3227
    %3244 = vmatpush.msra.mxu0 %v3226
    %3245 = vmatpush.msra.mxu0 %v3225
    %3246 = vmatpush.msra.mxu0 %v3224
    %3247 = vmatpush.msra.mxu0 %v3223
    %3248 = vmatpush.msra.mxu0 %v3222
    %3249 = vmatpush.msra.mxu0 %v3221
    %3250 = vmatpush.msra.mxu0 %v3220
    %3251 = vmatmul.f32.gmra.mxu0 %v3233
    %v3252 = vpop.f32.mrf.mxu0
    %v3253 = vadd.f32 %v3230, %v3252
    %3254 = vdwg.mxu0
    %3255 = vst.msk [vmem:[#allocation11] sm:$0xff] %vm412, %v3253
    // Predicated region
    $region54: #{tpu_custom_call.1} parent=1 // pred_check
      _
    $region55: #{tpu_custom_call.1} parent=1 // pred_check_branch
      %3257 = sbr.rel (0) target = $region57
    $region56: #{tpu_custom_call.1} parent=1 // pred_region
      %3259 = vsyncadd [#allocation8], 0
      %s3261 = sshll.u32 [#allocation11], 4
      %s3262 = int_to_ptr.vmem [resolvable:$true] %s3261
      %s3263 = sshll.u32 %s11, 4
      %s3264 = int_to_ptr.hbm [resolvable:$true] %s3263
      %3266 = dma.vmem_to_hbm [thread:$0]  %s3262, 128, %s3264, [#allocation8]
    $region57: #{tpu_custom_call.1} parent=1 // pred_fallthru
      _
    // Predicated region
    $region58: #{tpu_custom_call.1} parent=1 // pred_check
      _
    $region59: #{tpu_custom_call.1} parent=1 // pred_check_branch
      %3268 = sbr.rel (0) target = $region61
    $region60: #{tpu_custom_call.1} parent=1 // pred_region
      %3270 = dma.done [#allocation8], 128
    $region61: #{tpu_custom_call.1} parent=1 // pred_fallthru
      _
    %3271 = vsyncpa [#allocation7], 1
    %3272 = vsyncpa [#allocation10], 1
    %3273 = vsyncpa [#allocation8], 1

</llo_original>
